<compile_context>
chip_gen: v7x
topology: tpu7x:2x2x1
jax: 0.10.0
libtpu: 0.0.40
codegen_flags: <defaults>
</compile_context>

<pallas_src>
from functools import partial

import jax
import jax.numpy as jnp
from jax.experimental import pallas as pl
from jax.experimental.pallas import tpu as pltpu


# ---------------------------------------------------------------------------
# Fused kernel: per-chunk input projection + sequential tanh recurrence
# + last-timestep linear readout.
#
#   x_ref    : (bb, tc, I)    bf16/f32  chunk of the input sequence
#   wih_ref  : (I, H)         bf16/f32  W_ih^T   (lane-padded H)
#   whh_ref  : (H, H)         bf16/f32  W_hh^T
#   b_ref    : (1, H)         f32       b_ih + b_hh
#   wout_ref : (H, O)         bf16/f32  W_out^T  (lane-padded O)
#   bout_ref : (1, O)         f32
#   out_ref  : (bb, O)        f32       LAST_OUT readout (resident across time)
#   h_scr    : (bb, H)        f32       hidden-state carry, persists over chunks
#   u_scr    : (tc, bb, H)    f32       per-chunk input projection
# ---------------------------------------------------------------------------
def _fused_rnn_kernel(x_ref, wih_ref, whh_ref, b_ref, wout_ref, bout_ref,
                      out_ref, h_scr, u_scr, *, seq_len, chunk, need_mask):
    ci = pl.program_id(1)                 # time-chunk index (sequential axis)
    n_c = pl.num_programs(1)

    # h_0 = 0 at the start of every batch block's time loop.
    @pl.when(ci == 0)
    def _():
        h_scr[...] = jnp.zeros_like(h_scr)

    # ---- Input projection for the whole chunk (off the serial chain) -----
    # One small independent matmul per timestep; they pipeline through the
    # MXU and do not sit on the h_{t-1} -> h_t dependency chain.
    wih = wih_ref[...]                    # (I, H) bf16, hoisted
    bias = b_ref[...]                     # (1, H) f32
    for t in range(chunk):                # static, fully unrolled, independent
        u_scr[t] = (
            jnp.dot(x_ref[:, t, :], wih, preferred_element_type=jnp.float32)
            + bias)

    # ---- Sequential recurrence over the chunk -----------------------------
    whh = whh_ref[...]                    # (H, H) bf16, hoisted out of the loop

    def step(t, h):                       # h: (bb, H) f32 carry
        pre = u_scr[t] + jnp.dot(h.astype(whh.dtype), whh,
                                 preferred_element_type=jnp.float32)
        h_new = jnp.tanh(pre)
        if need_mask:                     # only present for a partial tail chunk
            h_new = jnp.where(ci * chunk + t < seq_len, h_new, h)
        return h_new

    # unroll capped at 8 to keep live vreg ranges bounded for large (bb, H).
    h_final = jax.lax.fori_loop(0, chunk, step, h_scr[...],
                                unroll=min(chunk, 8))
    h_scr[...] = h_final

    # ---- Linear readout only for the final timestep (LAST_OUT) ------------
    @pl.when(ci == n_c - 1)
    def _():
        out_ref[...] = (
            jnp.dot(h_final.astype(wout_ref.dtype), wout_ref[...],
                    preferred_element_type=jnp.float32)
            + bout_ref[...]).astype(out_ref.dtype)


def vanilla_rnn_forward(x, w_ih, w_hh, b_ih, b_hh, w_out, b_out,
                        *, time_chunk=None, batch_block=None,
                        operand_dtype=jnp.bfloat16):
    """Forward of VanillaRNN for batch-first x of shape (B, T, input_size).

    Returns out[:, -1, :] (LAST_OUT) of shape (B, output_size), float32.
    `operand_dtype` controls only the matmul operand precision (bf16 default,
    f32 accumulation either way); the carry / tanh stay f32.
    """
    B, T, I = x.shape
    H = w_hh.shape[0]
    O = w_out.shape[0]

    LANE = 128
    H_pad = ((H + LANE - 1) // LANE) * LANE
    O_pad = ((O + LANE - 1) // LANE) * LANE

    f32 = jnp.float32
    # Lane-pad H / O with zeros: padded hidden units stay at tanh(0)=0, padded
    # output columns stay 0 and are sliced off -> math is exactly unchanged
    # while every matmul / store last dim is a full 128-lane multiple.
    wih_t = jnp.zeros((I, H_pad), f32).at[:, :H].set(jnp.asarray(w_ih, f32).T)
    whh_t = jnp.zeros((H_pad, H_pad), f32).at[:H, :H].set(jnp.asarray(w_hh, f32).T)
    wout_t = jnp.zeros((H_pad, O_pad), f32).at[:H, :O].set(jnp.asarray(w_out, f32).T)
    b_fused = jnp.zeros((1, H_pad), f32).at[0, :H].set(
        jnp.asarray(b_ih, f32) + jnp.asarray(b_hh, f32))
    b_out_p = jnp.zeros((1, O_pad), f32).at[0, :O].set(jnp.asarray(b_out, f32))

    # bf16 matmul operands (halves x HBM traffic too); biases stay f32.
    x_op = jnp.asarray(x, f32).astype(operand_dtype)
    wih_op = wih_t.astype(operand_dtype)
    whh_op = whh_t.astype(operand_dtype)
    wout_op = wout_t.astype(operand_dtype)

    # ---- tiling heuristics, sized against a ~48 MiB VMEM budget (v7x-safe) --
    if batch_block is None:
        # Split the batch in two blocks for large B so the 'parallel' axis has
        # >= 2 blocks (keeps v7x's second TensorCore busy); small B / single-TC
        # v5e/v6e keep one block.
        bb = (((B + 1) // 2 + 7) // 8) * 8 if B >= 512 else B
    else:
        bb = max(1, min(int(batch_block), B))
    if bb != B and bb % 8 != 0:                      # out-block sublane alignment
        bb = B if B < 16 else max(8, (bb // 8) * 8)

    itemsize = jnp.dtype(operand_dtype).itemsize
    if time_chunk is None:
        budget = 24 * 1024 * 1024                    # u scratch + x double buffer
        per_step = bb * H_pad * 4 + 2 * bb * I * itemsize
        tc = int(max(1, min(64, budget // per_step)))  # 64 caps unrolled code size
    else:
        tc = int(time_chunk)
    tc = max(1, min(tc, T))
    if tc < T:
        aligned = max(8, (tc // 8) * 8)              # block 2nd-minor alignment
        if aligned >= T:
            tc = T
        else:
            tc = aligned
            if T % tc != 0:                          # prefer tc | T -> mask-free
                for cand in range(tc, 7, -8):
                    if T % cand == 0:
                        tc = cand
                        break
    need_mask = (T % tc) != 0

    n_b = pl.cdiv(B, bb)
    n_c = pl.cdiv(T, tc)

    kernel = partial(_fused_rnn_kernel, seq_len=T, chunk=tc, need_mask=need_mask)
    const = lambda bi, ci: (0, 0)

    def build_call(single_buffer_weights):
        if single_buffer_weights:
            # Constant-index weights/biases: one VMEM copy instead of two.
            wspec = lambda shape: pl.BlockSpec(shape, const,
                                               pipeline_mode=pl.Buffered(1))
        else:
            wspec = lambda shape: pl.BlockSpec(shape, const)
        return pl.pallas_call(
            kernel,
            out_shape=jax.ShapeDtypeStruct((B, O_pad), jnp.float32),
            grid_spec=pltpu.PrefetchScalarGridSpec(
                num_scalar_prefetch=0,
                grid=(n_b, n_c),
                in_specs=[
                    # x read directly from its (B, T, I) layout (no wrapper
                    # transpose); blocks are (bb, tc, I).
                    pl.BlockSpec((bb, tc, I), lambda bi, ci: (bi, ci, 0)),
                    wspec((I, H_pad)),        # W_ih^T
                    wspec((H_pad, H_pad)),    # W_hh^T
                    wspec((1, H_pad)),        # b_ih + b_hh
                    wspec((H_pad, O_pad)),    # W_out^T
                    wspec((1, O_pad)),        # b_out
                ],
                out_specs=pl.BlockSpec((bb, O_pad), lambda bi, ci: (bi, 0)),
                scratch_shapes=[
                    pltpu.VMEM((bb, H_pad), jnp.float32),      # h carry
                    pltpu.VMEM((tc, bb, H_pad), jnp.float32),  # per-chunk u
                ],
            ),
            compiler_params=pltpu.CompilerParams(
                # batch blocks are independent (megacore-shardable); time
                # chunks are the sequential recurrence and must come last.
                dimension_semantics=("parallel", "arbitrary"),
                vmem_limit_bytes=48 * 1024 * 1024,
            ),
        )

    args = (x_op, wih_op, whh_op, b_fused, wout_op, b_out_p)
    try:
        out_pad = build_call(True)(*args)
    except Exception:
        # Fallback for Pallas versions that reject single-buffered specs:
        # identical kernel, default double-buffered weights.
        out_pad = build_call(False)(*args)

    return out_pad[:, :O]


def _reference_forward(x_btI, w_ih, w_hh, b_ih, b_hh, w_out, b_out):
    """Pure-JAX f32 reference of the same forward pass (for validation)."""
    B, _, _ = x_btI.shape
    H = w_hh.shape[0]

    def step(h, x_t):
        h_new = jnp.tanh(x_t @ w_ih.T + b_ih + h @ w_hh.T + b_hh)
        return h_new, h_new

    h0 = jnp.zeros((B, H), jnp.float32)
    _, hs = jax.lax.scan(step, h0, jnp.transpose(x_btI, (1, 0, 2)))
    last_h = hs[-1]                       # (B, H)
    return last_h @ w_out.T + b_out       # (B, O)


if __name__ == "__main__":
    # Small shapes consistent with the module's forward: x (B, T, input_size).
    B, T, input_size, hidden_size, output_size = 2, 8, 4, 32, 10

    key = jax.random.PRNGKey(0)
    k = jax.random.split(key, 7)

    # PyTorch nn.RNN / nn.Linear default init: U(-1/sqrt(fan), 1/sqrt(fan)).
    s_rnn = 1.0 / jnp.sqrt(hidden_size)
    s_out = 1.0 / jnp.sqrt(hidden_size)  # Linear fan_in = directions*hidden

    x = jax.random.normal(k[0], (B, T, input_size), jnp.float32)
    w_ih = jax.random.uniform(k[1], (hidden_size, input_size), jnp.float32, -s_rnn, s_rnn)
    w_hh = jax.random.uniform(k[2], (hidden_size, hidden_size), jnp.float32, -s_rnn, s_rnn)
    b_ih = jax.random.uniform(k[3], (hidden_size,), jnp.float32, -s_rnn, s_rnn)
    b_hh = jax.random.uniform(k[4], (hidden_size,), jnp.float32, -s_rnn, s_rnn)
    w_out = jax.random.uniform(k[5], (output_size, hidden_size), jnp.float32, -s_out, s_out)
    b_out = jax.random.uniform(k[6], (output_size,), jnp.float32, -s_out, s_out)

    ref = _reference_forward(x, w_ih, w_hh, b_ih, b_hh, w_out, b_out)

    # Main (performance) configuration: bf16 matmul operands, f32 accumulation.
    out = vanilla_rnn_forward(x, w_ih, w_hh, b_ih, b_hh, w_out, b_out)
    out = jax.block_until_ready(out)
    assert out.shape == (B, output_size)
    # bf16 operands -> looser tolerance (values are O(0.3), observed err ~1e-2).
    assert jnp.allclose(out, ref, atol=3e-2, rtol=3e-2), "bf16 kernel mismatch"

    # Exactness check: same kernel with f32 operands matches the f32 reference.
    out_f32 = vanilla_rnn_forward(x, w_ih, w_hh, b_ih, b_hh, w_out, b_out,
                                  operand_dtype=jnp.float32)
    out_f32 = jax.block_until_ready(out_f32)
    assert jnp.allclose(out_f32, ref, atol=1e-4, rtol=1e-4), "f32 kernel mismatch"

    print("KERNEL_OK")
</pallas_src>

<mosaic_0001>
module attributes {stable_mosaic.version = 11 : i64} {
  func.func @_fused_rnn_kernel(%arg0: i32, %arg1: i32, %arg2: memref<2x8x4xbf16, #tpu.memory_space<vmem>>, %arg3: memref<4x128xbf16, #tpu.memory_space<vmem>>, %arg4: memref<128x128xbf16, #tpu.memory_space<vmem>>, %arg5: memref<1x128xf32, #tpu.memory_space<vmem>>, %arg6: memref<128x128xbf16, #tpu.memory_space<vmem>>, %arg7: memref<1x128xf32, #tpu.memory_space<vmem>>, %arg8: memref<2x128xf32, #tpu.memory_space<vmem>>, %arg9: memref<2x128xf32, #tpu.memory_space<vmem>>, %arg10: memref<8x2x128xf32, #tpu.memory_space<vmem>>) attributes {dimension_semantics = [#tpu.dimension_semantics<parallel>, #tpu.dimension_semantics<arbitrary>], iteration_bounds = array<i64: 1, 1>, scalar_prefetch = 0 : i64, scratch_operands = 2 : i64, tpu.core_type = #tpu.core_type<tc>, window_params = [{transform_indices = @transform_0, window_bounds = array<i64: 2, 8, 4>}, {pipeline_mode = #tpu.pipeline_mode<synchronous>, transform_indices = @transform_1, window_bounds = array<i64: 4, 128>}, {pipeline_mode = #tpu.pipeline_mode<synchronous>, transform_indices = @transform_2, window_bounds = array<i64: 128, 128>}, {pipeline_mode = #tpu.pipeline_mode<synchronous>, transform_indices = @transform_3, window_bounds = array<i64: 1, 128>}, {pipeline_mode = #tpu.pipeline_mode<synchronous>, transform_indices = @transform_4, window_bounds = array<i64: 128, 128>}, {pipeline_mode = #tpu.pipeline_mode<synchronous>, transform_indices = @transform_5, window_bounds = array<i64: 1, 128>}, {transform_indices = @transform_6, window_bounds = array<i64: 2, 128>}]} {
    %c0_i32 = arith.constant 0 : i32
    %0 = arith.cmpi eq, %arg1, %c0_i32 : i32
    %1 = arith.extui %0 : i1 to i32
    %c0_i32_0 = arith.constant 0 : i32
    %2 = arith.cmpi ne, %1, %c0_i32_0 : i32
    scf.if %2 {
      %cst_85 = arith.constant 0.000000e+00 : f32
      %131 = vector.broadcast %cst_85 : f32 to vector<2x128xf32>
      %c0_86 = arith.constant 0 : index
      %c0_87 = arith.constant 0 : index
      %132 = vector.load %arg9[%c0_86, %c0_87] : memref<2x128xf32, #tpu.memory_space<vmem>>, vector<2x128xf32>
      tpu.vector_store %arg9[%c0_86, %c0_87], %131 {strides = array<i32>} : memref<2x128xf32, #tpu.memory_space<vmem>>, vector<2x128xf32>,
    } else {
    }
    %c0 = arith.constant 0 : index
    %c0_1 = arith.constant 0 : index
    %3 = vector.load %arg3[%c0, %c0_1] : memref<4x128xbf16, #tpu.memory_space<vmem>>, vector<4x128xbf16>
    %c0_2 = arith.constant 0 : index
    %c0_3 = arith.constant 0 : index
    %4 = vector.load %arg5[%c0_2, %c0_3] : memref<1x128xf32, #tpu.memory_space<vmem>>, vector<1x128xf32>
    %c0_4 = arith.constant 0 : index
    %c0_5 = arith.constant 0 : index
    %c0_6 = arith.constant 0 : index
    %5 = vector.load %arg2[%c0_4, %c0_5, %c0_6] : memref<2x8x4xbf16, #tpu.memory_space<vmem>>, vector<2x1x4xbf16>
    %6 = vector.shape_cast %5 : vector<2x1x4xbf16> to vector<2x4xbf16>
    %cst = arith.constant dense<0.000000e+00> : vector<2x128xf32>
    %7 = tpu.matmul %6, %3, %cst {dimension_numbers = #tpu.dot_dimension_numbers<[1], [0], [0], [1], [0, 0, 1, 1], [], []>} : vector<2x4xbf16>, vector<4x128xbf16>, vector<2x128xf32> -> vector<2x128xf32>
    %8 = vector.broadcast %4 : vector<1x128xf32> to vector<2x128xf32>
    %9 = arith.addf %7, %8 : vector<2x128xf32>
    %c0_7 = arith.constant 0 : index
    %c0_8 = arith.constant 0 : index
    %c0_9 = arith.constant 0 : index
    %10 = vector.load %arg10[%c0_7, %c0_8, %c0_9] : memref<8x2x128xf32, #tpu.memory_space<vmem>>, vector<1x2x128xf32>
    %11 = vector.shape_cast %10 : vector<1x2x128xf32> to vector<2x128xf32>
    %12 = vector.shape_cast %9 : vector<2x128xf32> to vector<1x2x128xf32>
    tpu.vector_store %arg10[%c0_7, %c0_8, %c0_9], %12 {strides = array<i32>} : memref<8x2x128xf32, #tpu.memory_space<vmem>>, vector<1x2x128xf32>,
    %c0_10 = arith.constant 0 : index
    %c1 = arith.constant 1 : index
    %c0_11 = arith.constant 0 : index
    %13 = vector.load %arg2[%c0_10, %c1, %c0_11] : memref<2x8x4xbf16, #tpu.memory_space<vmem>>, vector<2x1x4xbf16>
    %14 = vector.shape_cast %13 : vector<2x1x4xbf16> to vector<2x4xbf16>
    %cst_12 = arith.constant dense<0.000000e+00> : vector<2x128xf32>
    %15 = tpu.matmul %14, %3, %cst_12 {dimension_numbers = #tpu.dot_dimension_numbers<[1], [0], [0], [1], [0, 0, 1, 1], [], []>} : vector<2x4xbf16>, vector<4x128xbf16>, vector<2x128xf32> -> vector<2x128xf32>
    %16 = vector.broadcast %4 : vector<1x128xf32> to vector<2x128xf32>
    %17 = arith.addf %15, %16 : vector<2x128xf32>
    %c1_13 = arith.constant 1 : index
    %c0_14 = arith.constant 0 : index
    %c0_15 = arith.constant 0 : index
    %18 = vector.load %arg10[%c1_13, %c0_14, %c0_15] : memref<8x2x128xf32, #tpu.memory_space<vmem>>, vector<1x2x128xf32>
    %19 = vector.shape_cast %18 : vector<1x2x128xf32> to vector<2x128xf32>
    %20 = vector.shape_cast %17 : vector<2x128xf32> to vector<1x2x128xf32>
    tpu.vector_store %arg10[%c1_13, %c0_14, %c0_15], %20 {strides = array<i32>} : memref<8x2x128xf32, #tpu.memory_space<vmem>>, vector<1x2x128xf32>,
    %c0_16 = arith.constant 0 : index
    %c2 = arith.constant 2 : index
    %c0_17 = arith.constant 0 : index
    %21 = vector.load %arg2[%c0_16, %c2, %c0_17] : memref<2x8x4xbf16, #tpu.memory_space<vmem>>, vector<2x1x4xbf16>
    %22 = vector.shape_cast %21 : vector<2x1x4xbf16> to vector<2x4xbf16>
    %cst_18 = arith.constant dense<0.000000e+00> : vector<2x128xf32>
    %23 = tpu.matmul %22, %3, %cst_18 {dimension_numbers = #tpu.dot_dimension_numbers<[1], [0], [0], [1], [0, 0, 1, 1], [], []>} : vector<2x4xbf16>, vector<4x128xbf16>, vector<2x128xf32> -> vector<2x128xf32>
    %24 = vector.broadcast %4 : vector<1x128xf32> to vector<2x128xf32>
    %25 = arith.addf %23, %24 : vector<2x128xf32>
    %c2_19 = arith.constant 2 : index
    %c0_20 = arith.constant 0 : index
    %c0_21 = arith.constant 0 : index
    %26 = vector.load %arg10[%c2_19, %c0_20, %c0_21] : memref<8x2x128xf32, #tpu.memory_space<vmem>>, vector<1x2x128xf32>
    %27 = vector.shape_cast %26 : vector<1x2x128xf32> to vector<2x128xf32>
    %28 = vector.shape_cast %25 : vector<2x128xf32> to vector<1x2x128xf32>
    tpu.vector_store %arg10[%c2_19, %c0_20, %c0_21], %28 {strides = array<i32>} : memref<8x2x128xf32, #tpu.memory_space<vmem>>, vector<1x2x128xf32>,
    %c0_22 = arith.constant 0 : index
    %c3 = arith.constant 3 : index
    %c0_23 = arith.constant 0 : index
    %29 = vector.load %arg2[%c0_22, %c3, %c0_23] : memref<2x8x4xbf16, #tpu.memory_space<vmem>>, vector<2x1x4xbf16>
    %30 = vector.shape_cast %29 : vector<2x1x4xbf16> to vector<2x4xbf16>
    %cst_24 = arith.constant dense<0.000000e+00> : vector<2x128xf32>
    %31 = tpu.matmul %30, %3, %cst_24 {dimension_numbers = #tpu.dot_dimension_numbers<[1], [0], [0], [1], [0, 0, 1, 1], [], []>} : vector<2x4xbf16>, vector<4x128xbf16>, vector<2x128xf32> -> vector<2x128xf32>
    %32 = vector.broadcast %4 : vector<1x128xf32> to vector<2x128xf32>
    %33 = arith.addf %31, %32 : vector<2x128xf32>
    %c3_25 = arith.constant 3 : index
    %c0_26 = arith.constant 0 : index
    %c0_27 = arith.constant 0 : index
    %34 = vector.load %arg10[%c3_25, %c0_26, %c0_27] : memref<8x2x128xf32, #tpu.memory_space<vmem>>, vector<1x2x128xf32>
    %35 = vector.shape_cast %34 : vector<1x2x128xf32> to vector<2x128xf32>
    %36 = vector.shape_cast %33 : vector<2x128xf32> to vector<1x2x128xf32>
    tpu.vector_store %arg10[%c3_25, %c0_26, %c0_27], %36 {strides = array<i32>} : memref<8x2x128xf32, #tpu.memory_space<vmem>>, vector<1x2x128xf32>,
    %c0_28 = arith.constant 0 : index
    %c4 = arith.constant 4 : index
    %c0_29 = arith.constant 0 : index
    %37 = vector.load %arg2[%c0_28, %c4, %c0_29] : memref<2x8x4xbf16, #tpu.memory_space<vmem>>, vector<2x1x4xbf16>
    %38 = vector.shape_cast %37 : vector<2x1x4xbf16> to vector<2x4xbf16>
    %cst_30 = arith.constant dense<0.000000e+00> : vector<2x128xf32>
    %39 = tpu.matmul %38, %3, %cst_30 {dimension_numbers = #tpu.dot_dimension_numbers<[1], [0], [0], [1], [0, 0, 1, 1], [], []>} : vector<2x4xbf16>, vector<4x128xbf16>, vector<2x128xf32> -> vector<2x128xf32>
    %40 = vector.broadcast %4 : vector<1x128xf32> to vector<2x128xf32>
    %41 = arith.addf %39, %40 : vector<2x128xf32>
    %c4_31 = arith.constant 4 : index
    %c0_32 = arith.constant 0 : index
    %c0_33 = arith.constant 0 : index
    %42 = vector.load %arg10[%c4_31, %c0_32, %c0_33] : memref<8x2x128xf32, #tpu.memory_space<vmem>>, vector<1x2x128xf32>
    %43 = vector.shape_cast %42 : vector<1x2x128xf32> to vector<2x128xf32>
    %44 = vector.shape_cast %41 : vector<2x128xf32> to vector<1x2x128xf32>
    tpu.vector_store %arg10[%c4_31, %c0_32, %c0_33], %44 {strides = array<i32>} : memref<8x2x128xf32, #tpu.memory_space<vmem>>, vector<1x2x128xf32>,
    %c0_34 = arith.constant 0 : index
    %c5 = arith.constant 5 : index
    %c0_35 = arith.constant 0 : index
    %45 = vector.load %arg2[%c0_34, %c5, %c0_35] : memref<2x8x4xbf16, #tpu.memory_space<vmem>>, vector<2x1x4xbf16>
    %46 = vector.shape_cast %45 : vector<2x1x4xbf16> to vector<2x4xbf16>
    %cst_36 = arith.constant dense<0.000000e+00> : vector<2x128xf32>
    %47 = tpu.matmul %46, %3, %cst_36 {dimension_numbers = #tpu.dot_dimension_numbers<[1], [0], [0], [1], [0, 0, 1, 1], [], []>} : vector<2x4xbf16>, vector<4x128xbf16>, vector<2x128xf32> -> vector<2x128xf32>
    %48 = vector.broadcast %4 : vector<1x128xf32> to vector<2x128xf32>
    %49 = arith.addf %47, %48 : vector<2x128xf32>
    %c5_37 = arith.constant 5 : index
    %c0_38 = arith.constant 0 : index
    %c0_39 = arith.constant 0 : index
    %50 = vector.load %arg10[%c5_37, %c0_38, %c0_39] : memref<8x2x128xf32, #tpu.memory_space<vmem>>, vector<1x2x128xf32>
    %51 = vector.shape_cast %50 : vector<1x2x128xf32> to vector<2x128xf32>
    %52 = vector.shape_cast %49 : vector<2x128xf32> to vector<1x2x128xf32>
    tpu.vector_store %arg10[%c5_37, %c0_38, %c0_39], %52 {strides = array<i32>} : memref<8x2x128xf32, #tpu.memory_space<vmem>>, vector<1x2x128xf32>,
    %c0_40 = arith.constant 0 : index
    %c6 = arith.constant 6 : index
    %c0_41 = arith.constant 0 : index
    %53 = vector.load %arg2[%c0_40, %c6, %c0_41] : memref<2x8x4xbf16, #tpu.memory_space<vmem>>, vector<2x1x4xbf16>
    %54 = vector.shape_cast %53 : vector<2x1x4xbf16> to vector<2x4xbf16>
    %cst_42 = arith.constant dense<0.000000e+00> : vector<2x128xf32>
    %55 = tpu.matmul %54, %3, %cst_42 {dimension_numbers = #tpu.dot_dimension_numbers<[1], [0], [0], [1], [0, 0, 1, 1], [], []>} : vector<2x4xbf16>, vector<4x128xbf16>, vector<2x128xf32> -> vector<2x128xf32>
    %56 = vector.broadcast %4 : vector<1x128xf32> to vector<2x128xf32>
    %57 = arith.addf %55, %56 : vector<2x128xf32>
    %c6_43 = arith.constant 6 : index
    %c0_44 = arith.constant 0 : index
    %c0_45 = arith.constant 0 : index
    %58 = vector.load %arg10[%c6_43, %c0_44, %c0_45] : memref<8x2x128xf32, #tpu.memory_space<vmem>>, vector<1x2x128xf32>
    %59 = vector.shape_cast %58 : vector<1x2x128xf32> to vector<2x128xf32>
    %60 = vector.shape_cast %57 : vector<2x128xf32> to vector<1x2x128xf32>
    tpu.vector_store %arg10[%c6_43, %c0_44, %c0_45], %60 {strides = array<i32>} : memref<8x2x128xf32, #tpu.memory_space<vmem>>, vector<1x2x128xf32>,
    %c0_46 = arith.constant 0 : index
    %c7 = arith.constant 7 : index
    %c0_47 = arith.constant 0 : index
    %61 = vector.load %arg2[%c0_46, %c7, %c0_47] : memref<2x8x4xbf16, #tpu.memory_space<vmem>>, vector<2x1x4xbf16>
    %62 = vector.shape_cast %61 : vector<2x1x4xbf16> to vector<2x4xbf16>
    %cst_48 = arith.constant dense<0.000000e+00> : vector<2x128xf32>
    %63 = tpu.matmul %62, %3, %cst_48 {dimension_numbers = #tpu.dot_dimension_numbers<[1], [0], [0], [1], [0, 0, 1, 1], [], []>} : vector<2x4xbf16>, vector<4x128xbf16>, vector<2x128xf32> -> vector<2x128xf32>
    %64 = vector.broadcast %4 : vector<1x128xf32> to vector<2x128xf32>
    %65 = arith.addf %63, %64 : vector<2x128xf32>
    %c7_49 = arith.constant 7 : index
    %c0_50 = arith.constant 0 : index
    %c0_51 = arith.constant 0 : index
    %66 = vector.load %arg10[%c7_49, %c0_50, %c0_51] : memref<8x2x128xf32, #tpu.memory_space<vmem>>, vector<1x2x128xf32>
    %67 = vector.shape_cast %66 : vector<1x2x128xf32> to vector<2x128xf32>
    %68 = vector.shape_cast %65 : vector<2x128xf32> to vector<1x2x128xf32>
    tpu.vector_store %arg10[%c7_49, %c0_50, %c0_51], %68 {strides = array<i32>} : memref<8x2x128xf32, #tpu.memory_space<vmem>>, vector<1x2x128xf32>,
    %c0_52 = arith.constant 0 : index
    %c0_53 = arith.constant 0 : index
    %69 = vector.load %arg4[%c0_52, %c0_53] : memref<128x128xbf16, #tpu.memory_space<vmem>>, vector<128x128xbf16>
    %c0_54 = arith.constant 0 : index
    %c0_55 = arith.constant 0 : index
    %70 = vector.load %arg9[%c0_54, %c0_55] : memref<2x128xf32, #tpu.memory_space<vmem>>, vector<2x128xf32>
    %c0_i32_56 = arith.constant 0 : i32
    %71 = arith.index_cast %c0_i32_56 : i32 to index
    %c0_57 = arith.constant 0 : index
    %c0_58 = arith.constant 0 : index
    %72 = vector.load %arg10[%71, %c0_57, %c0_58] : memref<8x2x128xf32, #tpu.memory_space<vmem>>, vector<1x2x128xf32>
    %73 = vector.shape_cast %72 : vector<1x2x128xf32> to vector<2x128xf32>
    %74 = arith.truncf %70 : vector<2x128xf32> to vector<2x128xbf16>
    %cst_59 = arith.constant dense<0.000000e+00> : vector<2x128xf32>
    %75 = tpu.matmul %74, %69, %cst_59 {dimension_numbers = #tpu.dot_dimension_numbers<[1], [0], [0], [1], [0, 0, 1, 1], [], []>} : vector<2x128xbf16>, vector<128x128xbf16>, vector<2x128xf32> -> vector<2x128xf32>
    %76 = arith.addf %73, %75 : vector<2x128xf32>
    %77 = math.tanh %76 : vector<2x128xf32>
    %c1_i32 = arith.constant 1 : i32
    %78 = arith.index_cast %c1_i32 : i32 to index
    %c0_60 = arith.constant 0 : index
    %c0_61 = arith.constant 0 : index
    %79 = vector.load %arg10[%78, %c0_60, %c0_61] : memref<8x2x128xf32, #tpu.memory_space<vmem>>, vector<1x2x128xf32>
    %80 = vector.shape_cast %79 : vector<1x2x128xf32> to vector<2x128xf32>
    %81 = arith.truncf %77 : vector<2x128xf32> to vector<2x128xbf16>
    %cst_62 = arith.constant dense<0.000000e+00> : vector<2x128xf32>
    %82 = tpu.matmul %81, %69, %cst_62 {dimension_numbers = #tpu.dot_dimension_numbers<[1], [0], [0], [1], [0, 0, 1, 1], [], []>} : vector<2x128xbf16>, vector<128x128xbf16>, vector<2x128xf32> -> vector<2x128xf32>
    %83 = arith.addf %80, %82 : vector<2x128xf32>
    %84 = math.tanh %83 : vector<2x128xf32>
    %c2_i32 = arith.constant 2 : i32
    %85 = arith.index_cast %c2_i32 : i32 to index
    %c0_63 = arith.constant 0 : index
    %c0_64 = arith.constant 0 : index
    %86 = vector.load %arg10[%85, %c0_63, %c0_64] : memref<8x2x128xf32, #tpu.memory_space<vmem>>, vector<1x2x128xf32>
    %87 = vector.shape_cast %86 : vector<1x2x128xf32> to vector<2x128xf32>
    %88 = arith.truncf %84 : vector<2x128xf32> to vector<2x128xbf16>
    %cst_65 = arith.constant dense<0.000000e+00> : vector<2x128xf32>
    %89 = tpu.matmul %88, %69, %cst_65 {dimension_numbers = #tpu.dot_dimension_numbers<[1], [0], [0], [1], [0, 0, 1, 1], [], []>} : vector<2x128xbf16>, vector<128x128xbf16>, vector<2x128xf32> -> vector<2x128xf32>
    %90 = arith.addf %87, %89 : vector<2x128xf32>
    %91 = math.tanh %90 : vector<2x128xf32>
    %c3_i32 = arith.constant 3 : i32
    %92 = arith.index_cast %c3_i32 : i32 to index
    %c0_66 = arith.constant 0 : index
    %c0_67 = arith.constant 0 : index
    %93 = vector.load %arg10[%92, %c0_66, %c0_67] : memref<8x2x128xf32, #tpu.memory_space<vmem>>, vector<1x2x128xf32>
    %94 = vector.shape_cast %93 : vector<1x2x128xf32> to vector<2x128xf32>
    %95 = arith.truncf %91 : vector<2x128xf32> to vector<2x128xbf16>
    %cst_68 = arith.constant dense<0.000000e+00> : vector<2x128xf32>
    %96 = tpu.matmul %95, %69, %cst_68 {dimension_numbers = #tpu.dot_dimension_numbers<[1], [0], [0], [1], [0, 0, 1, 1], [], []>} : vector<2x128xbf16>, vector<128x128xbf16>, vector<2x128xf32> -> vector<2x128xf32>
    %97 = arith.addf %94, %96 : vector<2x128xf32>
    %98 = math.tanh %97 : vector<2x128xf32>
    %c4_i32 = arith.constant 4 : i32
    %99 = arith.index_cast %c4_i32 : i32 to index
    %c0_69 = arith.constant 0 : index
    %c0_70 = arith.constant 0 : index
    %100 = vector.load %arg10[%99, %c0_69, %c0_70] : memref<8x2x128xf32, #tpu.memory_space<vmem>>, vector<1x2x128xf32>
    %101 = vector.shape_cast %100 : vector<1x2x128xf32> to vector<2x128xf32>
    %102 = arith.truncf %98 : vector<2x128xf32> to vector<2x128xbf16>
    %cst_71 = arith.constant dense<0.000000e+00> : vector<2x128xf32>
    %103 = tpu.matmul %102, %69, %cst_71 {dimension_numbers = #tpu.dot_dimension_numbers<[1], [0], [0], [1], [0, 0, 1, 1], [], []>} : vector<2x128xbf16>, vector<128x128xbf16>, vector<2x128xf32> -> vector<2x128xf32>
    %104 = arith.addf %101, %103 : vector<2x128xf32>
    %105 = math.tanh %104 : vector<2x128xf32>
    %c5_i32 = arith.constant 5 : i32
    %106 = arith.index_cast %c5_i32 : i32 to index
    %c0_72 = arith.constant 0 : index
    %c0_73 = arith.constant 0 : index
    %107 = vector.load %arg10[%106, %c0_72, %c0_73] : memref<8x2x128xf32, #tpu.memory_space<vmem>>, vector<1x2x128xf32>
    %108 = vector.shape_cast %107 : vector<1x2x128xf32> to vector<2x128xf32>
    %109 = arith.truncf %105 : vector<2x128xf32> to vector<2x128xbf16>
    %cst_74 = arith.constant dense<0.000000e+00> : vector<2x128xf32>
    %110 = tpu.matmul %109, %69, %cst_74 {dimension_numbers = #tpu.dot_dimension_numbers<[1], [0], [0], [1], [0, 0, 1, 1], [], []>} : vector<2x128xbf16>, vector<128x128xbf16>, vector<2x128xf32> -> vector<2x128xf32>
    %111 = arith.addf %108, %110 : vector<2x128xf32>
    %112 = math.tanh %111 : vector<2x128xf32>
    %c6_i32 = arith.constant 6 : i32
    %113 = arith.index_cast %c6_i32 : i32 to index
    %c0_75 = arith.constant 0 : index
    %c0_76 = arith.constant 0 : index
    %114 = vector.load %arg10[%113, %c0_75, %c0_76] : memref<8x2x128xf32, #tpu.memory_space<vmem>>, vector<1x2x128xf32>
    %115 = vector.shape_cast %114 : vector<1x2x128xf32> to vector<2x128xf32>
    %116 = arith.truncf %112 : vector<2x128xf32> to vector<2x128xbf16>
    %cst_77 = arith.constant dense<0.000000e+00> : vector<2x128xf32>
    %117 = tpu.matmul %116, %69, %cst_77 {dimension_numbers = #tpu.dot_dimension_numbers<[1], [0], [0], [1], [0, 0, 1, 1], [], []>} : vector<2x128xbf16>, vector<128x128xbf16>, vector<2x128xf32> -> vector<2x128xf32>
    %118 = arith.addf %115, %117 : vector<2x128xf32>
    %119 = math.tanh %118 : vector<2x128xf32>
    %c7_i32 = arith.constant 7 : i32
    %120 = arith.index_cast %c7_i32 : i32 to index
    %c0_78 = arith.constant 0 : index
    %c0_79 = arith.constant 0 : index
    %121 = vector.load %arg10[%120, %c0_78, %c0_79] : memref<8x2x128xf32, #tpu.memory_space<vmem>>, vector<1x2x128xf32>
    %122 = vector.shape_cast %121 : vector<1x2x128xf32> to vector<2x128xf32>
    %123 = arith.truncf %119 : vector<2x128xf32> to vector<2x128xbf16>
    %cst_80 = arith.constant dense<0.000000e+00> : vector<2x128xf32>
    %124 = tpu.matmul %123, %69, %cst_80 {dimension_numbers = #tpu.dot_dimension_numbers<[1], [0], [0], [1], [0, 0, 1, 1], [], []>} : vector<2x128xbf16>, vector<128x128xbf16>, vector<2x128xf32> -> vector<2x128xf32>
    %125 = arith.addf %122, %124 : vector<2x128xf32>
    %126 = math.tanh %125 : vector<2x128xf32>
    %c8_i32 = arith.constant 8 : i32
    %c0_81 = arith.constant 0 : index
    %c0_82 = arith.constant 0 : index
    %127 = vector.load %arg9[%c0_81, %c0_82] : memref<2x128xf32, #tpu.memory_space<vmem>>, vector<2x128xf32>
    tpu.vector_store %arg9[%c0_81, %c0_82], %126 {strides = array<i32>} : memref<2x128xf32, #tpu.memory_space<vmem>>, vector<2x128xf32>,
    %c0_i32_83 = arith.constant 0 : i32
    %128 = arith.cmpi eq, %arg1, %c0_i32_83 : i32
    %129 = arith.extui %128 : i1 to i32
    %c0_i32_84 = arith.constant 0 : i32
    %130 = arith.cmpi ne, %129, %c0_i32_84 : i32
    scf.if %130 {
      %131 = arith.truncf %126 : vector<2x128xf32> to vector<2x128xbf16>
      %c0_85 = arith.constant 0 : index
      %c0_86 = arith.constant 0 : index
      %132 = vector.load %arg6[%c0_85, %c0_86] : memref<128x128xbf16, #tpu.memory_space<vmem>>, vector<128x128xbf16>
      %cst_87 = arith.constant dense<0.000000e+00> : vector<2x128xf32>
      %133 = tpu.matmul %131, %132, %cst_87 {dimension_numbers = #tpu.dot_dimension_numbers<[1], [0], [0], [1], [0, 0, 1, 1], [], []>} : vector<2x128xbf16>, vector<128x128xbf16>, vector<2x128xf32> -> vector<2x128xf32>
      %c0_88 = arith.constant 0 : index
      %c0_89 = arith.constant 0 : index
      %134 = vector.load %arg7[%c0_88, %c0_89] : memref<1x128xf32, #tpu.memory_space<vmem>>, vector<1x128xf32>
      %135 = vector.broadcast %134 : vector<1x128xf32> to vector<2x128xf32>
      %136 = arith.addf %133, %135 : vector<2x128xf32>
      %c0_90 = arith.constant 0 : index
      %c0_91 = arith.constant 0 : index
      %137 = vector.load %arg8[%c0_90, %c0_91] : memref<2x128xf32, #tpu.memory_space<vmem>>, vector<2x128xf32>
      tpu.vector_store %arg8[%c0_90, %c0_91], %136 {strides = array<i32>} : memref<2x128xf32, #tpu.memory_space<vmem>>, vector<2x128xf32>,
    } else {
    }
    return
  }
  func.func @transform_0(%arg0: i32, %arg1: i32) -> (i32, i32, i32) {
    %c0_i32 = arith.constant 0 : i32
    %c0_i32_0 = arith.constant 0 : i32
    return %arg0, %arg1, %c0_i32 : i32, i32, i32
  }
  func.func @transform_1(%arg0: i32, %arg1: i32) -> (i32, i32) {
    %c0_i32 = arith.constant 0 : i32
    %c0_i32_0 = arith.constant 0 : i32
    %c0_i32_1 = arith.constant 0 : i32
    return %c0_i32, %c0_i32_0 : i32, i32
  }
  func.func @transform_2(%arg0: i32, %arg1: i32) -> (i32, i32) {
    %c0_i32 = arith.constant 0 : i32
    %c0_i32_0 = arith.constant 0 : i32
    %c0_i32_1 = arith.constant 0 : i32
    return %c0_i32, %c0_i32_0 : i32, i32
  }
  func.func @transform_3(%arg0: i32, %arg1: i32) -> (i32, i32) {
    %c0_i32 = arith.constant 0 : i32
    %c0_i32_0 = arith.constant 0 : i32
    %c0_i32_1 = arith.constant 0 : i32
    return %c0_i32, %c0_i32_0 : i32, i32
  }
  func.func @transform_4(%arg0: i32, %arg1: i32) -> (i32, i32) {
    %c0_i32 = arith.constant 0 : i32
    %c0_i32_0 = arith.constant 0 : i32
    %c0_i32_1 = arith.constant 0 : i32
    return %c0_i32, %c0_i32_0 : i32, i32
  }
  func.func @transform_5(%arg0: i32, %arg1: i32) -> (i32, i32) {
    %c0_i32 = arith.constant 0 : i32
    %c0_i32_0 = arith.constant 0 : i32
    %c0_i32_1 = arith.constant 0 : i32
    return %c0_i32, %c0_i32_0 : i32, i32
  }
  func.func @transform_6(%arg0: i32, %arg1: i32) -> (i32, i32) {
    %c0_i32 = arith.constant 0 : i32
    %c0_i32_0 = arith.constant 0 : i32
    return %arg0, %c0_i32 : i32, i32
  }
}

module attributes {stable_mosaic.version = 11 : i64} {
  func.func @_fused_rnn_kernel(%arg0: i32, %arg1: i32, %arg2: memref<2x8x4xbf16, #tpu.memory_space<vmem>>, %arg3: memref<4x128xbf16, #tpu.memory_space<vmem>>, %arg4: memref<128x128xbf16, #tpu.memory_space<vmem>>, %arg5: memref<1x128xf32, #tpu.memory_space<vmem>>, %arg6: memref<128x128xbf16, #tpu.memory_space<vmem>>, %arg7: memref<1x128xf32, #tpu.memory_space<vmem>>, %arg8: memref<2x128xf32, #tpu.memory_space<vmem>>, %arg9: memref<2x128xf32, #tpu.memory_space<vmem>>, %arg10: memref<8x2x128xf32, #tpu.memory_space<vmem>>) attributes {dimension_semantics = [#tpu.dimension_semantics<parallel>, #tpu.dimension_semantics<arbitrary>], iteration_bounds = array<i64: 1, 1>, scalar_prefetch = 0 : i64, scratch_operands = 2 : i64, tpu.core_type = #tpu.core_type<tc>, window_params = [{transform_indices = @transform_0, window_bounds = array<i64: 2, 8, 4>}, {pipeline_mode = #tpu.pipeline_mode<synchronous>, transform_indices = @transform_1, window_bounds = array<i64: 4, 128>}, {pipeline_mode = #tpu.pipeline_mode<synchronous>, transform_indices = @transform_2, window_bounds = array<i64: 128, 128>}, {pipeline_mode = #tpu.pipeline_mode<synchronous>, transform_indices = @transform_3, window_bounds = array<i64: 1, 128>}, {pipeline_mode = #tpu.pipeline_mode<synchronous>, transform_indices = @transform_4, window_bounds = array<i64: 128, 128>}, {pipeline_mode = #tpu.pipeline_mode<synchronous>, transform_indices = @transform_5, window_bounds = array<i64: 1, 128>}, {transform_indices = @transform_6, window_bounds = array<i64: 2, 128>}]} {
    %c0_i32 = arith.constant 0 : i32
    %0 = arith.cmpi eq, %arg1, %c0_i32 : i32
    %1 = arith.extui %0 : i1 to i32
    %c0_i32_0 = arith.constant 0 : i32
    %2 = arith.cmpi ne, %1, %c0_i32_0 : i32
    scf.if %2 {
      %cst_85 = arith.constant 0.000000e+00 : f32
      %131 = vector.broadcast %cst_85 : f32 to vector<2x128xf32>
      %c0_86 = arith.constant 0 : index
      %c0_87 = arith.constant 0 : index
      %132 = vector.load %arg9[%c0_86, %c0_87] : memref<2x128xf32, #tpu.memory_space<vmem>>, vector<2x128xf32>
      tpu.vector_store %arg9[%c0_86, %c0_87], %131 {strides = array<i32>} : memref<2x128xf32, #tpu.memory_space<vmem>>, vector<2x128xf32>,
    } else {
    }
    %c0 = arith.constant 0 : index
    %c0_1 = arith.constant 0 : index
    %3 = vector.load %arg3[%c0, %c0_1] : memref<4x128xbf16, #tpu.memory_space<vmem>>, vector<4x128xbf16>
    %c0_2 = arith.constant 0 : index
    %c0_3 = arith.constant 0 : index
    %4 = vector.load %arg5[%c0_2, %c0_3] : memref<1x128xf32, #tpu.memory_space<vmem>>, vector<1x128xf32>
    %c0_4 = arith.constant 0 : index
    %c0_5 = arith.constant 0 : index
    %c0_6 = arith.constant 0 : index
    %5 = vector.load %arg2[%c0_4, %c0_5, %c0_6] : memref<2x8x4xbf16, #tpu.memory_space<vmem>>, vector<2x1x4xbf16>
    %6 = vector.shape_cast %5 : vector<2x1x4xbf16> to vector<2x4xbf16>
    %cst = arith.constant dense<0.000000e+00> : vector<2x128xf32>
    %7 = tpu.matmul %6, %3, %cst {dimension_numbers = #tpu.dot_dimension_numbers<[1], [0], [0], [1], [0, 0, 1, 1], [], []>} : vector<2x4xbf16>, vector<4x128xbf16>, vector<2x128xf32> -> vector<2x128xf32>
    %8 = vector.broadcast %4 : vector<1x128xf32> to vector<2x128xf32>
    %9 = arith.addf %7, %8 : vector<2x128xf32>
    %c0_7 = arith.constant 0 : index
    %c0_8 = arith.constant 0 : index
    %c0_9 = arith.constant 0 : index
    %10 = vector.load %arg10[%c0_7, %c0_8, %c0_9] : memref<8x2x128xf32, #tpu.memory_space<vmem>>, vector<1x2x128xf32>
    %11 = vector.shape_cast %10 : vector<1x2x128xf32> to vector<2x128xf32>
    %12 = vector.shape_cast %9 : vector<2x128xf32> to vector<1x2x128xf32>
    tpu.vector_store %arg10[%c0_7, %c0_8, %c0_9], %12 {strides = array<i32>} : memref<8x2x128xf32, #tpu.memory_space<vmem>>, vector<1x2x128xf32>,
    %c0_10 = arith.constant 0 : index
    %c1 = arith.constant 1 : index
    %c0_11 = arith.constant 0 : index
    %13 = vector.load %arg2[%c0_10, %c1, %c0_11] : memref<2x8x4xbf16, #tpu.memory_space<vmem>>, vector<2x1x4xbf16>
    %14 = vector.shape_cast %13 : vector<2x1x4xbf16> to vector<2x4xbf16>
    %cst_12 = arith.constant dense<0.000000e+00> : vector<2x128xf32>
    %15 = tpu.matmul %14, %3, %cst_12 {dimension_numbers = #tpu.dot_dimension_numbers<[1], [0], [0], [1], [0, 0, 1, 1], [], []>} : vector<2x4xbf16>, vector<4x128xbf16>, vector<2x128xf32> -> vector<2x128xf32>
    %16 = vector.broadcast %4 : vector<1x128xf32> to vector<2x128xf32>
    %17 = arith.addf %15, %16 : vector<2x128xf32>
    %c1_13 = arith.constant 1 : index
    %c0_14 = arith.constant 0 : index
    %c0_15 = arith.constant 0 : index
    %18 = vector.load %arg10[%c1_13, %c0_14, %c0_15] : memref<8x2x128xf32, #tpu.memory_space<vmem>>, vector<1x2x128xf32>
    %19 = vector.shape_cast %18 : vector<1x2x128xf32> to vector<2x128xf32>
    %20 = vector.shape_cast %17 : vector<2x128xf32> to vector<1x2x128xf32>
    tpu.vector_store %arg10[%c1_13, %c0_14, %c0_15], %20 {strides = array<i32>} : memref<8x2x128xf32, #tpu.memory_space<vmem>>, vector<1x2x128xf32>,
    %c0_16 = arith.constant 0 : index
    %c2 = arith.constant 2 : index
    %c0_17 = arith.constant 0 : index
    %21 = vector.load %arg2[%c0_16, %c2, %c0_17] : memref<2x8x4xbf16, #tpu.memory_space<vmem>>, vector<2x1x4xbf16>
    %22 = vector.shape_cast %21 : vector<2x1x4xbf16> to vector<2x4xbf16>
    %cst_18 = arith.constant dense<0.000000e+00> : vector<2x128xf32>
    %23 = tpu.matmul %22, %3, %cst_18 {dimension_numbers = #tpu.dot_dimension_numbers<[1], [0], [0], [1], [0, 0, 1, 1], [], []>} : vector<2x4xbf16>, vector<4x128xbf16>, vector<2x128xf32> -> vector<2x128xf32>
    %24 = vector.broadcast %4 : vector<1x128xf32> to vector<2x128xf32>
    %25 = arith.addf %23, %24 : vector<2x128xf32>
    %c2_19 = arith.constant 2 : index
    %c0_20 = arith.constant 0 : index
    %c0_21 = arith.constant 0 : index
    %26 = vector.load %arg10[%c2_19, %c0_20, %c0_21] : memref<8x2x128xf32, #tpu.memory_space<vmem>>, vector<1x2x128xf32>
    %27 = vector.shape_cast %26 : vector<1x2x128xf32> to vector<2x128xf32>
    %28 = vector.shape_cast %25 : vector<2x128xf32> to vector<1x2x128xf32>
    tpu.vector_store %arg10[%c2_19, %c0_20, %c0_21], %28 {strides = array<i32>} : memref<8x2x128xf32, #tpu.memory_space<vmem>>, vector<1x2x128xf32>,
    %c0_22 = arith.constant 0 : index
    %c3 = arith.constant 3 : index
    %c0_23 = arith.constant 0 : index
    %29 = vector.load %arg2[%c0_22, %c3, %c0_23] : memref<2x8x4xbf16, #tpu.memory_space<vmem>>, vector<2x1x4xbf16>
    %30 = vector.shape_cast %29 : vector<2x1x4xbf16> to vector<2x4xbf16>
    %cst_24 = arith.constant dense<0.000000e+00> : vector<2x128xf32>
    %31 = tpu.matmul %30, %3, %cst_24 {dimension_numbers = #tpu.dot_dimension_numbers<[1], [0], [0], [1], [0, 0, 1, 1], [], []>} : vector<2x4xbf16>, vector<4x128xbf16>, vector<2x128xf32> -> vector<2x128xf32>
    %32 = vector.broadcast %4 : vector<1x128xf32> to vector<2x128xf32>
    %33 = arith.addf %31, %32 : vector<2x128xf32>
    %c3_25 = arith.constant 3 : index
    %c0_26 = arith.constant 0 : index
    %c0_27 = arith.constant 0 : index
    %34 = vector.load %arg10[%c3_25, %c0_26, %c0_27] : memref<8x2x128xf32, #tpu.memory_space<vmem>>, vector<1x2x128xf32>
    %35 = vector.shape_cast %34 : vector<1x2x128xf32> to vector<2x128xf32>
    %36 = vector.shape_cast %33 : vector<2x128xf32> to vector<1x2x128xf32>
    tpu.vector_store %arg10[%c3_25, %c0_26, %c0_27], %36 {strides = array<i32>} : memref<8x2x128xf32, #tpu.memory_space<vmem>>, vector<1x2x128xf32>,
    %c0_28 = arith.constant 0 : index
    %c4 = arith.constant 4 : index
    %c0_29 = arith.constant 0 : index
    %37 = vector.load %arg2[%c0_28, %c4, %c0_29] : memref<2x8x4xbf16, #tpu.memory_space<vmem>>, vector<2x1x4xbf16>
    %38 = vector.shape_cast %37 : vector<2x1x4xbf16> to vector<2x4xbf16>
    %cst_30 = arith.constant dense<0.000000e+00> : vector<2x128xf32>
    %39 = tpu.matmul %38, %3, %cst_30 {dimension_numbers = #tpu.dot_dimension_numbers<[1], [0], [0], [1], [0, 0, 1, 1], [], []>} : vector<2x4xbf16>, vector<4x128xbf16>, vector<2x128xf32> -> vector<2x128xf32>
    %40 = vector.broadcast %4 : vector<1x128xf32> to vector<2x128xf32>
    %41 = arith.addf %39, %40 : vector<2x128xf32>
    %c4_31 = arith.constant 4 : index
    %c0_32 = arith.constant 0 : index
    %c0_33 = arith.constant 0 : index
    %42 = vector.load %arg10[%c4_31, %c0_32, %c0_33] : memref<8x2x128xf32, #tpu.memory_space<vmem>>, vector<1x2x128xf32>
    %43 = vector.shape_cast %42 : vector<1x2x128xf32> to vector<2x128xf32>
    %44 = vector.shape_cast %41 : vector<2x128xf32> to vector<1x2x128xf32>
    tpu.vector_store %arg10[%c4_31, %c0_32, %c0_33], %44 {strides = array<i32>} : memref<8x2x128xf32, #tpu.memory_space<vmem>>, vector<1x2x128xf32>,
    %c0_34 = arith.constant 0 : index
    %c5 = arith.constant 5 : index
    %c0_35 = arith.constant 0 : index
    %45 = vector.load %arg2[%c0_34, %c5, %c0_35] : memref<2x8x4xbf16, #tpu.memory_space<vmem>>, vector<2x1x4xbf16>
    %46 = vector.shape_cast %45 : vector<2x1x4xbf16> to vector<2x4xbf16>
    %cst_36 = arith.constant dense<0.000000e+00> : vector<2x128xf32>
    %47 = tpu.matmul %46, %3, %cst_36 {dimension_numbers = #tpu.dot_dimension_numbers<[1], [0], [0], [1], [0, 0, 1, 1], [], []>} : vector<2x4xbf16>, vector<4x128xbf16>, vector<2x128xf32> -> vector<2x128xf32>
    %48 = vector.broadcast %4 : vector<1x128xf32> to vector<2x128xf32>
    %49 = arith.addf %47, %48 : vector<2x128xf32>
    %c5_37 = arith.constant 5 : index
    %c0_38 = arith.constant 0 : index
    %c0_39 = arith.constant 0 : index
    %50 = vector.load %arg10[%c5_37, %c0_38, %c0_39] : memref<8x2x128xf32, #tpu.memory_space<vmem>>, vector<1x2x128xf32>
    %51 = vector.shape_cast %50 : vector<1x2x128xf32> to vector<2x128xf32>
    %52 = vector.shape_cast %49 : vector<2x128xf32> to vector<1x2x128xf32>
    tpu.vector_store %arg10[%c5_37, %c0_38, %c0_39], %52 {strides = array<i32>} : memref<8x2x128xf32, #tpu.memory_space<vmem>>, vector<1x2x128xf32>,
    %c0_40 = arith.constant 0 : index
    %c6 = arith.constant 6 : index
    %c0_41 = arith.constant 0 : index
    %53 = vector.load %arg2[%c0_40, %c6, %c0_41] : memref<2x8x4xbf16, #tpu.memory_space<vmem>>, vector<2x1x4xbf16>
    %54 = vector.shape_cast %53 : vector<2x1x4xbf16> to vector<2x4xbf16>
    %cst_42 = arith.constant dense<0.000000e+00> : vector<2x128xf32>
    %55 = tpu.matmul %54, %3, %cst_42 {dimension_numbers = #tpu.dot_dimension_numbers<[1], [0], [0], [1], [0, 0, 1, 1], [], []>} : vector<2x4xbf16>, vector<4x128xbf16>, vector<2x128xf32> -> vector<2x128xf32>
    %56 = vector.broadcast %4 : vector<1x128xf32> to vector<2x128xf32>
    %57 = arith.addf %55, %56 : vector<2x128xf32>
    %c6_43 = arith.constant 6 : index
    %c0_44 = arith.constant 0 : index
    %c0_45 = arith.constant 0 : index
    %58 = vector.load %arg10[%c6_43, %c0_44, %c0_45] : memref<8x2x128xf32, #tpu.memory_space<vmem>>, vector<1x2x128xf32>
    %59 = vector.shape_cast %58 : vector<1x2x128xf32> to vector<2x128xf32>
    %60 = vector.shape_cast %57 : vector<2x128xf32> to vector<1x2x128xf32>
    tpu.vector_store %arg10[%c6_43, %c0_44, %c0_45], %60 {strides = array<i32>} : memref<8x2x128xf32, #tpu.memory_space<vmem>>, vector<1x2x128xf32>,
    %c0_46 = arith.constant 0 : index
    %c7 = arith.constant 7 : index
    %c0_47 = arith.constant 0 : index
    %61 = vector.load %arg2[%c0_46, %c7, %c0_47] : memref<2x8x4xbf16, #tpu.memory_space<vmem>>, vector<2x1x4xbf16>
    %62 = vector.shape_cast %61 : vector<2x1x4xbf16> to vector<2x4xbf16>
    %cst_48 = arith.constant dense<0.000000e+00> : vector<2x128xf32>
    %63 = tpu.matmul %62, %3, %cst_48 {dimension_numbers = #tpu.dot_dimension_numbers<[1], [0], [0], [1], [0, 0, 1, 1], [], []>} : vector<2x4xbf16>, vector<4x128xbf16>, vector<2x128xf32> -> vector<2x128xf32>
    %64 = vector.broadcast %4 : vector<1x128xf32> to vector<2x128xf32>
    %65 = arith.addf %63, %64 : vector<2x128xf32>
    %c7_49 = arith.constant 7 : index
    %c0_50 = arith.constant 0 : index
    %c0_51 = arith.constant 0 : index
    %66 = vector.load %arg10[%c7_49, %c0_50, %c0_51] : memref<8x2x128xf32, #tpu.memory_space<vmem>>, vector<1x2x128xf32>
    %67 = vector.shape_cast %66 : vector<1x2x128xf32> to vector<2x128xf32>
    %68 = vector.shape_cast %65 : vector<2x128xf32> to vector<1x2x128xf32>
    tpu.vector_store %arg10[%c7_49, %c0_50, %c0_51], %68 {strides = array<i32>} : memref<8x2x128xf32, #tpu.memory_space<vmem>>, vector<1x2x128xf32>,
    %c0_52 = arith.constant 0 : index
    %c0_53 = arith.constant 0 : index
    %69 = vector.load %arg4[%c0_52, %c0_53] : memref<128x128xbf16, #tpu.memory_space<vmem>>, vector<128x128xbf16>
    %c0_54 = arith.constant 0 : index
    %c0_55 = arith.constant 0 : index
    %70 = vector.load %arg9[%c0_54, %c0_55] : memref<2x128xf32, #tpu.memory_space<vmem>>, vector<2x128xf32>
    %c0_i32_56 = arith.constant 0 : i32
    %71 = arith.index_cast %c0_i32_56 : i32 to index
    %c0_57 = arith.constant 0 : index
    %c0_58 = arith.constant 0 : index
    %72 = vector.load %arg10[%71, %c0_57, %c0_58] : memref<8x2x128xf32, #tpu.memory_space<vmem>>, vector<1x2x128xf32>
    %73 = vector.shape_cast %72 : vector<1x2x128xf32> to vector<2x128xf32>
    %74 = arith.truncf %70 : vector<2x128xf32> to vector<2x128xbf16>
    %cst_59 = arith.constant dense<0.000000e+00> : vector<2x128xf32>
    %75 = tpu.matmul %74, %69, %cst_59 {dimension_numbers = #tpu.dot_dimension_numbers<[1], [0], [0], [1], [0, 0, 1, 1], [], []>} : vector<2x128xbf16>, vector<128x128xbf16>, vector<2x128xf32> -> vector<2x128xf32>
    %76 = arith.addf %73, %75 : vector<2x128xf32>
    %77 = math.tanh %76 : vector<2x128xf32>
    %c1_i32 = arith.constant 1 : i32
    %78 = arith.index_cast %c1_i32 : i32 to index
    %c0_60 = arith.constant 0 : index
    %c0_61 = arith.constant 0 : index
    %79 = vector.load %arg10[%78, %c0_60, %c0_61] : memref<8x2x128xf32, #tpu.memory_space<vmem>>, vector<1x2x128xf32>
    %80 = vector.shape_cast %79 : vector<1x2x128xf32> to vector<2x128xf32>
    %81 = arith.truncf %77 : vector<2x128xf32> to vector<2x128xbf16>
    %cst_62 = arith.constant dense<0.000000e+00> : vector<2x128xf32>
    %82 = tpu.matmul %81, %69, %cst_62 {dimension_numbers = #tpu.dot_dimension_numbers<[1], [0], [0], [1], [0, 0, 1, 1], [], []>} : vector<2x128xbf16>, vector<128x128xbf16>, vector<2x128xf32> -> vector<2x128xf32>
    %83 = arith.addf %80, %82 : vector<2x128xf32>
    %84 = math.tanh %83 : vector<2x128xf32>
    %c2_i32 = arith.constant 2 : i32
    %85 = arith.index_cast %c2_i32 : i32 to index
    %c0_63 = arith.constant 0 : index
    %c0_64 = arith.constant 0 : index
    %86 = vector.load %arg10[%85, %c0_63, %c0_64] : memref<8x2x128xf32, #tpu.memory_space<vmem>>, vector<1x2x128xf32>
    %87 = vector.shape_cast %86 : vector<1x2x128xf32> to vector<2x128xf32>
    %88 = arith.truncf %84 : vector<2x128xf32> to vector<2x128xbf16>
    %cst_65 = arith.constant dense<0.000000e+00> : vector<2x128xf32>
    %89 = tpu.matmul %88, %69, %cst_65 {dimension_numbers = #tpu.dot_dimension_numbers<[1], [0], [0], [1], [0, 0, 1, 1], [], []>} : vector<2x128xbf16>, vector<128x128xbf16>, vector<2x128xf32> -> vector<2x128xf32>
    %90 = arith.addf %87, %89 : vector<2x128xf32>
    %91 = math.tanh %90 : vector<2x128xf32>
    %c3_i32 = arith.constant 3 : i32
    %92 = arith.index_cast %c3_i32 : i32 to index
    %c0_66 = arith.constant 0 : index
    %c0_67 = arith.constant 0 : index
    %93 = vector.load %arg10[%92, %c0_66, %c0_67] : memref<8x2x128xf32, #tpu.memory_space<vmem>>, vector<1x2x128xf32>
    %94 = vector.shape_cast %93 : vector<1x2x128xf32> to vector<2x128xf32>
    %95 = arith.truncf %91 : vector<2x128xf32> to vector<2x128xbf16>
    %cst_68 = arith.constant dense<0.000000e+00> : vector<2x128xf32>
    %96 = tpu.matmul %95, %69, %cst_68 {dimension_numbers = #tpu.dot_dimension_numbers<[1], [0], [0], [1], [0, 0, 1, 1], [], []>} : vector<2x128xbf16>, vector<128x128xbf16>, vector<2x128xf32> -> vector<2x128xf32>
    %97 = arith.addf %94, %96 : vector<2x128xf32>
    %98 = math.tanh %97 : vector<2x128xf32>
    %c4_i32 = arith.constant 4 : i32
    %99 = arith.index_cast %c4_i32 : i32 to index
    %c0_69 = arith.constant 0 : index
    %c0_70 = arith.constant 0 : index
    %100 = vector.load %arg10[%99, %c0_69, %c0_70] : memref<8x2x128xf32, #tpu.memory_space<vmem>>, vector<1x2x128xf32>
    %101 = vector.shape_cast %100 : vector<1x2x128xf32> to vector<2x128xf32>
    %102 = arith.truncf %98 : vector<2x128xf32> to vector<2x128xbf16>
    %cst_71 = arith.constant dense<0.000000e+00> : vector<2x128xf32>
    %103 = tpu.matmul %102, %69, %cst_71 {dimension_numbers = #tpu.dot_dimension_numbers<[1], [0], [0], [1], [0, 0, 1, 1], [], []>} : vector<2x128xbf16>, vector<128x128xbf16>, vector<2x128xf32> -> vector<2x128xf32>
    %104 = arith.addf %101, %103 : vector<2x128xf32>
    %105 = math.tanh %104 : vector<2x128xf32>
    %c5_i32 = arith.constant 5 : i32
    %106 = arith.index_cast %c5_i32 : i32 to index
    %c0_72 = arith.constant 0 : index
    %c0_73 = arith.constant 0 : index
    %107 = vector.load %arg10[%106, %c0_72, %c0_73] : memref<8x2x128xf32, #tpu.memory_space<vmem>>, vector<1x2x128xf32>
    %108 = vector.shape_cast %107 : vector<1x2x128xf32> to vector<2x128xf32>
    %109 = arith.truncf %105 : vector<2x128xf32> to vector<2x128xbf16>
    %cst_74 = arith.constant dense<0.000000e+00> : vector<2x128xf32>
    %110 = tpu.matmul %109, %69, %cst_74 {dimension_numbers = #tpu.dot_dimension_numbers<[1], [0], [0], [1], [0, 0, 1, 1], [], []>} : vector<2x128xbf16>, vector<128x128xbf16>, vector<2x128xf32> -> vector<2x128xf32>
    %111 = arith.addf %108, %110 : vector<2x128xf32>
    %112 = math.tanh %111 : vector<2x128xf32>
    %c6_i32 = arith.constant 6 : i32
    %113 = arith.index_cast %c6_i32 : i32 to index
    %c0_75 = arith.constant 0 : index
    %c0_76 = arith.constant 0 : index
    %114 = vector.load %arg10[%113, %c0_75, %c0_76] : memref<8x2x128xf32, #tpu.memory_space<vmem>>, vector<1x2x128xf32>
    %115 = vector.shape_cast %114 : vector<1x2x128xf32> to vector<2x128xf32>
    %116 = arith.truncf %112 : vector<2x128xf32> to vector<2x128xbf16>
    %cst_77 = arith.constant dense<0.000000e+00> : vector<2x128xf32>
    %117 = tpu.matmul %116, %69, %cst_77 {dimension_numbers = #tpu.dot_dimension_numbers<[1], [0], [0], [1], [0, 0, 1, 1], [], []>} : vector<2x128xbf16>, vector<128x128xbf16>, vector<2x128xf32> -> vector<2x128xf32>
    %118 = arith.addf %115, %117 : vector<2x128xf32>
    %119 = math.tanh %118 : vector<2x128xf32>
    %c7_i32 = arith.constant 7 : i32
    %120 = arith.index_cast %c7_i32 : i32 to index
    %c0_78 = arith.constant 0 : index
    %c0_79 = arith.constant 0 : index
    %121 = vector.load %arg10[%120, %c0_78, %c0_79] : memref<8x2x128xf32, #tpu.memory_space<vmem>>, vector<1x2x128xf32>
    %122 = vector.shape_cast %121 : vector<1x2x128xf32> to vector<2x128xf32>
    %123 = arith.truncf %119 : vector<2x128xf32> to vector<2x128xbf16>
    %cst_80 = arith.constant dense<0.000000e+00> : vector<2x128xf32>
    %124 = tpu.matmul %123, %69, %cst_80 {dimension_numbers = #tpu.dot_dimension_numbers<[1], [0], [0], [1], [0, 0, 1, 1], [], []>} : vector<2x128xbf16>, vector<128x128xbf16>, vector<2x128xf32> -> vector<2x128xf32>
    %125 = arith.addf %122, %124 : vector<2x128xf32>
    %126 = math.tanh %125 : vector<2x128xf32>
    %c8_i32 = arith.constant 8 : i32
    %c0_81 = arith.constant 0 : index
    %c0_82 = arith.constant 0 : index
    %127 = vector.load %arg9[%c0_81, %c0_82] : memref<2x128xf32, #tpu.memory_space<vmem>>, vector<2x128xf32>
    tpu.vector_store %arg9[%c0_81, %c0_82], %126 {strides = array<i32>} : memref<2x128xf32, #tpu.memory_space<vmem>>, vector<2x128xf32>,
    %c0_i32_83 = arith.constant 0 : i32
    %128 = arith.cmpi eq, %arg1, %c0_i32_83 : i32
    %129 = arith.extui %128 : i1 to i32
    %c0_i32_84 = arith.constant 0 : i32
    %130 = arith.cmpi ne, %129, %c0_i32_84 : i32
    scf.if %130 {
      %131 = arith.truncf %126 : vector<2x128xf32> to vector<2x128xbf16>
      %c0_85 = arith.constant 0 : index
      %c0_86 = arith.constant 0 : index
      %132 = vector.load %arg6[%c0_85, %c0_86] : memref<128x128xbf16, #tpu.memory_space<vmem>>, vector<128x128xbf16>
      %cst_87 = arith.constant dense<0.000000e+00> : vector<2x128xf32>
      %133 = tpu.matmul %131, %132, %cst_87 {dimension_numbers = #tpu.dot_dimension_numbers<[1], [0], [0], [1], [0, 0, 1, 1], [], []>} : vector<2x128xbf16>, vector<128x128xbf16>, vector<2x128xf32> -> vector<2x128xf32>
      %c0_88 = arith.constant 0 : index
      %c0_89 = arith.constant 0 : index
      %134 = vector.load %arg7[%c0_88, %c0_89] : memref<1x128xf32, #tpu.memory_space<vmem>>, vector<1x128xf32>
      %135 = vector.broadcast %134 : vector<1x128xf32> to vector<2x128xf32>
      %136 = arith.addf %133, %135 : vector<2x128xf32>
      %c0_90 = arith.constant 0 : index
      %c0_91 = arith.constant 0 : index
      %137 = vector.load %arg8[%c0_90, %c0_91] : memref<2x128xf32, #tpu.memory_space<vmem>>, vector<2x128xf32>
      tpu.vector_store %arg8[%c0_90, %c0_91], %136 {strides = array<i32>} : memref<2x128xf32, #tpu.memory_space<vmem>>, vector<2x128xf32>,
    } else {
    }
    return
  }
  func.func @transform_0(%arg0: i32, %arg1: i32) -> (i32, i32, i32) {
    %c0_i32 = arith.constant 0 : i32
    %c0_i32_0 = arith.constant 0 : i32
    return %arg0, %arg1, %c0_i32 : i32, i32, i32
  }
  func.func @transform_1(%arg0: i32, %arg1: i32) -> (i32, i32) {
    %c0_i32 = arith.constant 0 : i32
    %c0_i32_0 = arith.constant 0 : i32
    %c0_i32_1 = arith.constant 0 : i32
    return %c0_i32, %c0_i32_0 : i32, i32
  }
  func.func @transform_2(%arg0: i32, %arg1: i32) -> (i32, i32) {
    %c0_i32 = arith.constant 0 : i32
    %c0_i32_0 = arith.constant 0 : i32
    %c0_i32_1 = arith.constant 0 : i32
    return %c0_i32, %c0_i32_0 : i32, i32
  }
  func.func @transform_3(%arg0: i32, %arg1: i32) -> (i32, i32) {
    %c0_i32 = arith.constant 0 : i32
    %c0_i32_0 = arith.constant 0 : i32
    %c0_i32_1 = arith.constant 0 : i32
    return %c0_i32, %c0_i32_0 : i32, i32
  }
  func.func @transform_4(%arg0: i32, %arg1: i32) -> (i32, i32) {
    %c0_i32 = arith.constant 0 : i32
    %c0_i32_0 = arith.constant 0 : i32
    %c0_i32_1 = arith.constant 0 : i32
    return %c0_i32, %c0_i32_0 : i32, i32
  }
  func.func @transform_5(%arg0: i32, %arg1: i32) -> (i32, i32) {
    %c0_i32 = arith.constant 0 : i32
    %c0_i32_0 = arith.constant 0 : i32
    %c0_i32_1 = arith.constant 0 : i32
    return %c0_i32, %c0_i32_0 : i32, i32
  }
  func.func @transform_6(%arg0: i32, %arg1: i32) -> (i32, i32) {
    %c0_i32 = arith.constant 0 : i32
    %c0_i32_0 = arith.constant 0 : i32
    return %arg0, %c0_i32 : i32, i32
  }
}

</mosaic_0001>

<llo_original>
// kernel: tpu_custom_call.1
$region0: #{tpu_custom_call.1}
  #allocation0 [shape = 'u32[]', space=smem, size = 0x4, offset = 0x4, fixed_abs, tag = 'smem constant byte address 0x4 - core index']
  #allocation1 [shape = 'u32[144,128]{1,0:T(1,128)}', space=vmem, size = 0x12000, scoped, tag = 'internal scratch']
  #allocation2 [shape = 'f32[2,128]{1,0:T(2,128)}', space=vmem, size = 0x400, scoped, tag = 'scratch operand']
  #allocation3 [shape = 'f32[8,2,128]{2,1,0:T(2,128)}', space=vmem, size = 0x2000, scoped, tag = 'scratch operand']
  %s0 = inlined_call_operand.vmem [shape: bf16[2,8,4], index: 0, kind: input, shape index: {}]
  %s1 = inlined_call_operand.vmem [shape: bf16[4,128], index: 1, kind: input, shape index: {}]
  %s2 = inlined_call_operand.hbm [shape: bf16[128,128], index: 2, kind: input, shape index: {}]
  %s3 = inlined_call_operand.vmem [shape: f32[1,128], index: 3, kind: input, shape index: {}]
  %s4 = inlined_call_operand.hbm [shape: bf16[128,128], index: 4, kind: input, shape index: {}]
  %s5 = inlined_call_operand.vmem [shape: f32[1,128], index: 5, kind: input, shape index: {}]
  %s6 = inlined_call_operand.hbm [shape: f32[2,128], index: 6, kind: output, shape index: {}]
  %s7 = sld [smem:[#allocation0]]
  $region50: #{tpu_custom_call.1} parent=0
    _
  %s9 = ssub.s32 1, %s7
  %s10 = scalar_select 0, %s9, %s7
  $region1: #{tpu_custom_call.1} parent=0
    #allocation4 [shape = 'u8[32768]{0}', space=vmem, size = 0x8000, scoped, tag = 'input window, operand 2, single buffered']
    #allocation5 [shape = 's32[1]{0}', space=sflag, size = 0x4, scoped, tag = 'scoped memory for tpu_custom_call.1']
    #allocation6 [shape = 's32[1]{0}', space=sflag, size = 0x4, scoped, tag = 'scoped memory for tpu_custom_call.1']
    #allocation7 [shape = 'u8[32768]{0}', space=vmem, size = 0x8000, scoped, tag = 'input window, operand 4, single buffered']
    #allocation8 [shape = 's32[1]{0}', space=sflag, size = 0x4, scoped, tag = 'scoped memory for tpu_custom_call.1']
    #allocation9 [shape = 'u8[1024]{0}', space=vmem, size = 0x400, scoped, tag = 'output window, operand 0, single buffered']
    %11 = vsyncpa [#allocation5], 0
    %12 = vsyncpa [#allocation8], 0
    %13 = vsyncpa [#allocation6], 0
    // Predicated region
    $region2: #{tpu_custom_call.1} parent=1 // pred_check
      _
    $region3: #{tpu_custom_call.1} parent=1 // pred_check_branch
      %15 = sbr.rel (0) target = $region5
    $region4: #{tpu_custom_call.1} parent=1 // pred_region
      _
    $region5: #{tpu_custom_call.1} parent=1 // pred_fallthru
      _
    // Predicated region
    $region6: #{tpu_custom_call.1} parent=1 // pred_check
      _
    $region7: #{tpu_custom_call.1} parent=1 // pred_check_branch
      %17 = sbr.rel (0) target = $region9
    $region8: #{tpu_custom_call.1} parent=1 // pred_region
      _
    $region9: #{tpu_custom_call.1} parent=1 // pred_fallthru
      _
    // Predicated region
    $region10: #{tpu_custom_call.1} parent=1 // pred_check
      _
    $region11: #{tpu_custom_call.1} parent=1 // pred_check_branch
      %19 = sbr.rel (0) target = $region13
    $region12: #{tpu_custom_call.1} parent=1 // pred_region
      %s21 = ssub.s32 1024, 1024
      %22 = vsyncadd [#allocation5], %s21
      %s23 = sshll.u32 [#allocation4], 4
      %s24 = int_to_ptr.vmem [resolvable:$true] %s23
      %29 = dma.hbm_to_vmem [thread:$0]  %s2, 1024, %s24, [#allocation5], 64, 64, 4
    $region13: #{tpu_custom_call.1} parent=1 // pred_fallthru
      _
    // Predicated region
    $region14: #{tpu_custom_call.1} parent=1 // pred_check
      _
    $region15: #{tpu_custom_call.1} parent=1 // pred_check_branch
      %31 = sbr.rel (0) target = $region17
    $region16: #{tpu_custom_call.1} parent=1 // pred_region
      _
    $region17: #{tpu_custom_call.1} parent=1 // pred_fallthru
      _
    // Predicated region
    $region18: #{tpu_custom_call.1} parent=1 // pred_check
      _
    $region19: #{tpu_custom_call.1} parent=1 // pred_check_branch
      %33 = sbr.rel (0) target = $region21
    $region20: #{tpu_custom_call.1} parent=1 // pred_region
      %s35 = ssub.s32 1024, 1024
      %36 = vsyncadd [#allocation8], %s35
      %s37 = sshll.u32 [#allocation7], 4
      %s38 = int_to_ptr.vmem [resolvable:$true] %s37
      %43 = dma.hbm_to_vmem [thread:$0]  %s4, 1024, %s38, [#allocation8], 64, 64, 4
    $region21: #{tpu_custom_call.1} parent=1 // pred_fallthru
      _
    // Predicated region
    $region22: #{tpu_custom_call.1} parent=1 // pred_check
      _
    $region23: #{tpu_custom_call.1} parent=1 // pred_check_branch
      %45 = sbr.rel (0) target = $region25
    $region24: #{tpu_custom_call.1} parent=1 // pred_region
      _
    $region25: #{tpu_custom_call.1} parent=1 // pred_fallthru
      _
    // Predicated region
    $region26: #{tpu_custom_call.1} parent=1 // pred_check
      _
    $region27: #{tpu_custom_call.1} parent=1 // pred_check_branch
      %47 = sbr.rel (0) target = $region29
    $region28: #{tpu_custom_call.1} parent=1 // pred_region
      %48 = dma.done [#allocation5], 1024
    $region29: #{tpu_custom_call.1} parent=1 // pred_fallthru
      _
    // Predicated region
    $region30: #{tpu_custom_call.1} parent=1 // pred_check
      _
    $region31: #{tpu_custom_call.1} parent=1 // pred_check_branch
      %50 = sbr.rel (0) target = $region33
    $region32: #{tpu_custom_call.1} parent=1 // pred_region
      %51 = dma.done [#allocation8], 1024
    $region33: #{tpu_custom_call.1} parent=1 // pred_fallthru
      _
    %p53 = scmp.eq.s32.totalorder 0, 0
    // Predicated region
    $region34: #{tpu_custom_call.1} parent=1 // pred_check
      %p54 = pneg %p53
    $region35: #{tpu_custom_call.1} parent=1 // pred_check_branch
      %56 = sbr.rel (%p54) target = $region37
    $region36: #{tpu_custom_call.1} parent=1 // pred_region
      %57 = vst [vmem:[#allocation2] sm:$0x3] 0.0
    $region37: #{tpu_custom_call.1} parent=1 // pred_fallthru
      _
    %v58 = vld [vmem:[%s1] sm:$0x3]
    %v59 = vld [vmem:[%s3] sm:$0x1]
    %v60 = vld [vmem:[%s0] sm:$0x1]
    %v61 = vld [vmem:[%s0 + $0x4] sm:$0x1]
    %v63 = vlaneseq
    %v64 = vshrl.u32 %v63, 7
    %v65 = vsub.s32 0, %v64
    %v66 = vrot.slane %v59, %v65
    %v70 = vunpack.c.l.b16 %v60
    %v71 = vunpack.c.l.b16 %v61
    %v72 = vpack.c.b16 %v70, %v70
    %v73 = vpack.c.b16 %v71, %v71
    %v74 = vunpack.c.l.b16 %v72
    %v75 = vunpack.c.l.b16 %v73
    %v76 = vrot.slane %v75, 7
    %vm77 = vcmask 1041409
    %v78 = vsel %vm77, %v76, %v74
    %v79 = vpack.c.b16 %v78, %v78
    %vm80 = vcmask 31744
    %v82 = vsel %vm80, %v79, 0
    %vm84 = vcmask 1041408
    %v86 = vsel %vm84, %v58, 0
    %88 = vmatprep.subr.bf16.mxu0 0
    %89 = vmatpush1.bf16.msra.mxu0 %v86
    %90 = vmatprep.subr.bf16.mxu0 0
    %91 = vmatpush1.bf16.msra.mxu0 0
    %92 = vmatprep.subr.bf16.mxu0 0
    %93 = vmatpush1.bf16.msra.mxu0 0
    %94 = vmatprep.subr.bf16.mxu0 0
    %95 = vmatpush1.bf16.msra.mxu0 0
    %96 = vmatprep.subr.bf16.mxu0 0
    %97 = vmatpush1.bf16.msra.mxu0 0
    %98 = vmatprep.subr.bf16.mxu0 0
    %99 = vmatpush1.bf16.msra.mxu0 0
    %100 = vmatprep.subr.bf16.mxu0 0
    %101 = vmatpush1.bf16.msra.mxu0 0
    %102 = vmatprep.subr.bf16.mxu0 0
    %103 = vmatpush1.bf16.msra.mxu0 0
    %104 = vmatprep.subr.bf16.mxu0 0
    %105 = vmatpush1.bf16.msra.mxu0 0
    %106 = vmatprep.subr.bf16.mxu0 0
    %107 = vmatpush1.bf16.msra.mxu0 0
    %108 = vmatprep.subr.bf16.mxu0 0
    %109 = vmatpush1.bf16.msra.mxu0 0
    %110 = vmatprep.subr.bf16.mxu0 0
    %111 = vmatpush1.bf16.msra.mxu0 0
    %112 = vmatprep.subr.bf16.mxu0 0
    %113 = vmatpush1.bf16.msra.mxu0 0
    %114 = vmatprep.subr.bf16.mxu0 0
    %115 = vmatpush1.bf16.msra.mxu0 0
    %116 = vmatprep.subr.bf16.mxu0 0
    %117 = vmatpush1.bf16.msra.mxu0 0
    %118 = vmatprep.subr.bf16.mxu0 0
    %119 = vmatpush1.bf16.msra.mxu0 0
    %120 = vmatprep.mubr.bf16.mxu0 0
    %121 = vmatmul.mubr.bf16.gmra.mrb[0].mxu0 %v82
    %v122 = vpop.f32.mrb[0].mxu0
    %v123 = vadd.f32 %v66, %v122
    %v124 = vpop.f32.mrb[0].mxu0
    %v125 = vpop.f32.mrb[0].mxu0
    %v126 = vpop.f32.mrb[0].mxu0
    %127 = vdwg.mxu0
    %128 = vst [vmem:[#allocation3] sm:$0x3] %v123
    %v129 = vld [vmem:[%s0] sm:$0x1]
    %v130 = vld [vmem:[%s0 + $0x4] sm:$0x1]
    %v133 = vunpack.c.l.b16 %v129
    %v134 = vunpack.c.l.b16 %v130
    %v135 = vpack.c.b16 %v133, %v133
    %v136 = vpack.c.b16 %v134, %v134
    %v137 = vunpack.c.l.b16 %v135
    %v138 = vunpack.c.l.b16 %v136
    %v139 = vrot.slane %v137, 1
    %v140 = vsel %vm77, %v138, %v139
    %v141 = vpack.c.b16 %v140, %v140
    %v143 = vsel %vm80, %v141, 0
    %145 = vmatprep.subr.bf16.mxu0 0
    %146 = vmatpush1.bf16.msra.mxu0 %v86
    %147 = vmatprep.subr.bf16.mxu0 0
    %148 = vmatpush1.bf16.msra.mxu0 0
    %149 = vmatprep.subr.bf16.mxu0 0
    %150 = vmatpush1.bf16.msra.mxu0 0
    %151 = vmatprep.subr.bf16.mxu0 0
    %152 = vmatpush1.bf16.msra.mxu0 0
    %153 = vmatprep.subr.bf16.mxu0 0
    %154 = vmatpush1.bf16.msra.mxu0 0
    %155 = vmatprep.subr.bf16.mxu0 0
    %156 = vmatpush1.bf16.msra.mxu0 0
    %157 = vmatprep.subr.bf16.mxu0 0
    %158 = vmatpush1.bf16.msra.mxu0 0
    %159 = vmatprep.subr.bf16.mxu0 0
    %160 = vmatpush1.bf16.msra.mxu0 0
    %161 = vmatprep.subr.bf16.mxu0 0
    %162 = vmatpush1.bf16.msra.mxu0 0
    %163 = vmatprep.subr.bf16.mxu0 0
    %164 = vmatpush1.bf16.msra.mxu0 0
    %165 = vmatprep.subr.bf16.mxu0 0
    %166 = vmatpush1.bf16.msra.mxu0 0
    %167 = vmatprep.subr.bf16.mxu0 0
    %168 = vmatpush1.bf16.msra.mxu0 0
    %169 = vmatprep.subr.bf16.mxu0 0
    %170 = vmatpush1.bf16.msra.mxu0 0
    %171 = vmatprep.subr.bf16.mxu0 0
    %172 = vmatpush1.bf16.msra.mxu0 0
    %173 = vmatprep.subr.bf16.mxu0 0
    %174 = vmatpush1.bf16.msra.mxu0 0
    %175 = vmatprep.subr.bf16.mxu0 0
    %176 = vmatpush1.bf16.msra.mxu0 0
    %177 = vmatprep.mubr.bf16.mxu0 0
    %178 = vmatmul.mubr.bf16.gmra.mrb[0].mxu0 %v143
    %v179 = vpop.f32.mrb[0].mxu0
    %v180 = vadd.f32 %v66, %v179
    %v181 = vpop.f32.mrb[0].mxu0
    %v182 = vpop.f32.mrb[0].mxu0
    %v183 = vpop.f32.mrb[0].mxu0
    %184 = vdwg.mxu0
    %s185 = scalar_lea.vmem [#allocation3], 2
    %186 = vst [vmem:[%s185] sm:$0x3] %v180
    %v187 = vld [vmem:[%s0] sm:$0x2]
    %v188 = vld [vmem:[%s0 + $0x4] sm:$0x2]
    %v191 = vunpack.c.l.b16 %v187
    %v192 = vunpack.c.l.b16 %v188
    %v193 = vpack.c.b16 %v191, %v191
    %v194 = vpack.c.b16 %v192, %v192
    %v195 = vunpack.c.l.b16 %v193
    %v196 = vunpack.c.l.b16 %v194
    %v197 = vrot.slane %v195, 2
    %v198 = vrot.slane %v196, 1
    %v199 = vsel %vm77, %v198, %v197
    %v200 = vpack.c.b16 %v199, %v199
    %v202 = vsel %vm80, %v200, 0
    %204 = vmatprep.subr.bf16.mxu0 0
    %205 = vmatpush1.bf16.msra.mxu0 %v86
    %206 = vmatprep.subr.bf16.mxu0 0
    %207 = vmatpush1.bf16.msra.mxu0 0
    %208 = vmatprep.subr.bf16.mxu0 0
    %209 = vmatpush1.bf16.msra.mxu0 0
    %210 = vmatprep.subr.bf16.mxu0 0
    %211 = vmatpush1.bf16.msra.mxu0 0
    %212 = vmatprep.subr.bf16.mxu0 0
    %213 = vmatpush1.bf16.msra.mxu0 0
    %214 = vmatprep.subr.bf16.mxu0 0
    %215 = vmatpush1.bf16.msra.mxu0 0
    %216 = vmatprep.subr.bf16.mxu0 0
    %217 = vmatpush1.bf16.msra.mxu0 0
    %218 = vmatprep.subr.bf16.mxu0 0
    %219 = vmatpush1.bf16.msra.mxu0 0
    %220 = vmatprep.subr.bf16.mxu0 0
    %221 = vmatpush1.bf16.msra.mxu0 0
    %222 = vmatprep.subr.bf16.mxu0 0
    %223 = vmatpush1.bf16.msra.mxu0 0
    %224 = vmatprep.subr.bf16.mxu0 0
    %225 = vmatpush1.bf16.msra.mxu0 0
    %226 = vmatprep.subr.bf16.mxu0 0
    %227 = vmatpush1.bf16.msra.mxu0 0
    %228 = vmatprep.subr.bf16.mxu0 0
    %229 = vmatpush1.bf16.msra.mxu0 0
    %230 = vmatprep.subr.bf16.mxu0 0
    %231 = vmatpush1.bf16.msra.mxu0 0
    %232 = vmatprep.subr.bf16.mxu0 0
    %233 = vmatpush1.bf16.msra.mxu0 0
    %234 = vmatprep.subr.bf16.mxu0 0
    %235 = vmatpush1.bf16.msra.mxu0 0
    %236 = vmatprep.mubr.bf16.mxu0 0
    %237 = vmatmul.mubr.bf16.gmra.mrb[0].mxu0 %v202
    %v238 = vpop.f32.mrb[0].mxu0
    %v239 = vadd.f32 %v66, %v238
    %v240 = vpop.f32.mrb[0].mxu0
    %v241 = vpop.f32.mrb[0].mxu0
    %v242 = vpop.f32.mrb[0].mxu0
    %243 = vdwg.mxu0
    %s244 = scalar_lea.vmem [#allocation3], 4
    %245 = vst [vmem:[%s244] sm:$0x3] %v239
    %v246 = vld [vmem:[%s0] sm:$0x2]
    %v247 = vld [vmem:[%s0 + $0x4] sm:$0x2]
    %v250 = vunpack.c.l.b16 %v246
    %v251 = vunpack.c.l.b16 %v247
    %v252 = vpack.c.b16 %v250, %v250
    %v253 = vpack.c.b16 %v251, %v251
    %v254 = vunpack.c.l.b16 %v252
    %v255 = vunpack.c.l.b16 %v253
    %v256 = vrot.slane %v254, 3
    %v257 = vrot.slane %v255, 2
    %v258 = vsel %vm77, %v257, %v256
    %v259 = vpack.c.b16 %v258, %v258
    %v261 = vsel %vm80, %v259, 0
    %263 = vmatprep.subr.bf16.mxu0 0
    %264 = vmatpush1.bf16.msra.mxu0 %v86
    %265 = vmatprep.subr.bf16.mxu0 0
    %266 = vmatpush1.bf16.msra.mxu0 0
    %267 = vmatprep.subr.bf16.mxu0 0
    %268 = vmatpush1.bf16.msra.mxu0 0
    %269 = vmatprep.subr.bf16.mxu0 0
    %270 = vmatpush1.bf16.msra.mxu0 0
    %271 = vmatprep.subr.bf16.mxu0 0
    %272 = vmatpush1.bf16.msra.mxu0 0
    %273 = vmatprep.subr.bf16.mxu0 0
    %274 = vmatpush1.bf16.msra.mxu0 0
    %275 = vmatprep.subr.bf16.mxu0 0
    %276 = vmatpush1.bf16.msra.mxu0 0
    %277 = vmatprep.subr.bf16.mxu0 0
    %278 = vmatpush1.bf16.msra.mxu0 0
    %279 = vmatprep.subr.bf16.mxu0 0
    %280 = vmatpush1.bf16.msra.mxu0 0
    %281 = vmatprep.subr.bf16.mxu0 0
    %282 = vmatpush1.bf16.msra.mxu0 0
    %283 = vmatprep.subr.bf16.mxu0 0
    %284 = vmatpush1.bf16.msra.mxu0 0
    %285 = vmatprep.subr.bf16.mxu0 0
    %286 = vmatpush1.bf16.msra.mxu0 0
    %287 = vmatprep.subr.bf16.mxu0 0
    %288 = vmatpush1.bf16.msra.mxu0 0
    %289 = vmatprep.subr.bf16.mxu0 0
    %290 = vmatpush1.bf16.msra.mxu0 0
    %291 = vmatprep.subr.bf16.mxu0 0
    %292 = vmatpush1.bf16.msra.mxu0 0
    %293 = vmatprep.subr.bf16.mxu0 0
    %294 = vmatpush1.bf16.msra.mxu0 0
    %295 = vmatprep.mubr.bf16.mxu0 0
    %296 = vmatmul.mubr.bf16.gmra.mrb[0].mxu0 %v261
    %v297 = vpop.f32.mrb[0].mxu0
    %v298 = vadd.f32 %v66, %v297
    %v299 = vpop.f32.mrb[0].mxu0
    %v300 = vpop.f32.mrb[0].mxu0
    %v301 = vpop.f32.mrb[0].mxu0
    %302 = vdwg.mxu0
    %s303 = scalar_lea.vmem [#allocation3], 6
    %304 = vst [vmem:[%s303] sm:$0x3] %v298
    %v305 = vld [vmem:[%s0] sm:$0x4]
    %v306 = vld [vmem:[%s0 + $0x4] sm:$0x4]
    %v309 = vunpack.c.l.b16 %v305
    %v310 = vunpack.c.l.b16 %v306
    %v311 = vpack.c.b16 %v309, %v309
    %v312 = vpack.c.b16 %v310, %v310
    %v313 = vunpack.c.l.b16 %v311
    %v314 = vunpack.c.l.b16 %v312
    %v315 = vrot.slane %v313, 4
    %v316 = vrot.slane %v314, 3
    %v317 = vsel %vm77, %v316, %v315
    %v318 = vpack.c.b16 %v317, %v317
    %v320 = vsel %vm80, %v318, 0
    %322 = vmatprep.subr.bf16.mxu0 0
    %323 = vmatpush1.bf16.msra.mxu0 %v86
    %324 = vmatprep.subr.bf16.mxu0 0
    %325 = vmatpush1.bf16.msra.mxu0 0
    %326 = vmatprep.subr.bf16.mxu0 0
    %327 = vmatpush1.bf16.msra.mxu0 0
    %328 = vmatprep.subr.bf16.mxu0 0
    %329 = vmatpush1.bf16.msra.mxu0 0
    %330 = vmatprep.subr.bf16.mxu0 0
    %331 = vmatpush1.bf16.msra.mxu0 0
    %332 = vmatprep.subr.bf16.mxu0 0
    %333 = vmatpush1.bf16.msra.mxu0 0
    %334 = vmatprep.subr.bf16.mxu0 0
    %335 = vmatpush1.bf16.msra.mxu0 0
    %336 = vmatprep.subr.bf16.mxu0 0
    %337 = vmatpush1.bf16.msra.mxu0 0
    %338 = vmatprep.subr.bf16.mxu0 0
    %339 = vmatpush1.bf16.msra.mxu0 0
    %340 = vmatprep.subr.bf16.mxu0 0
    %341 = vmatpush1.bf16.msra.mxu0 0
    %342 = vmatprep.subr.bf16.mxu0 0
    %343 = vmatpush1.bf16.msra.mxu0 0
    %344 = vmatprep.subr.bf16.mxu0 0
    %345 = vmatpush1.bf16.msra.mxu0 0
    %346 = vmatprep.subr.bf16.mxu0 0
    %347 = vmatpush1.bf16.msra.mxu0 0
    %348 = vmatprep.subr.bf16.mxu0 0
    %349 = vmatpush1.bf16.msra.mxu0 0
    %350 = vmatprep.subr.bf16.mxu0 0
    %351 = vmatpush1.bf16.msra.mxu0 0
    %352 = vmatprep.subr.bf16.mxu0 0
    %353 = vmatpush1.bf16.msra.mxu0 0
    %354 = vmatprep.mubr.bf16.mxu0 0
    %355 = vmatmul.mubr.bf16.gmra.mrb[0].mxu0 %v320
    %v356 = vpop.f32.mrb[0].mxu0
    %v357 = vadd.f32 %v66, %v356
    %v358 = vpop.f32.mrb[0].mxu0
    %v359 = vpop.f32.mrb[0].mxu0
    %v360 = vpop.f32.mrb[0].mxu0
    %361 = vdwg.mxu0
    %s362 = scalar_lea.vmem [#allocation3], 8
    %363 = vst [vmem:[%s362] sm:$0x3] %v357
    %v364 = vld [vmem:[%s0] sm:$0x4]
    %v365 = vld [vmem:[%s0 + $0x4] sm:$0x4]
    %v368 = vunpack.c.l.b16 %v364
    %v369 = vunpack.c.l.b16 %v365
    %v370 = vpack.c.b16 %v368, %v368
    %v371 = vpack.c.b16 %v369, %v369
    %v372 = vunpack.c.l.b16 %v370
    %v373 = vunpack.c.l.b16 %v371
    %v374 = vrot.slane %v372, 5
    %v375 = vrot.slane %v373, 4
    %v376 = vsel %vm77, %v375, %v374
    %v377 = vpack.c.b16 %v376, %v376
    %v379 = vsel %vm80, %v377, 0
    %381 = vmatprep.subr.bf16.mxu0 0
    %382 = vmatpush1.bf16.msra.mxu0 %v86
    %383 = vmatprep.subr.bf16.mxu0 0
    %384 = vmatpush1.bf16.msra.mxu0 0
    %385 = vmatprep.subr.bf16.mxu0 0
    %386 = vmatpush1.bf16.msra.mxu0 0
    %387 = vmatprep.subr.bf16.mxu0 0
    %388 = vmatpush1.bf16.msra.mxu0 0
    %389 = vmatprep.subr.bf16.mxu0 0
    %390 = vmatpush1.bf16.msra.mxu0 0
    %391 = vmatprep.subr.bf16.mxu0 0
    %392 = vmatpush1.bf16.msra.mxu0 0
    %393 = vmatprep.subr.bf16.mxu0 0
    %394 = vmatpush1.bf16.msra.mxu0 0
    %395 = vmatprep.subr.bf16.mxu0 0
    %396 = vmatpush1.bf16.msra.mxu0 0
    %397 = vmatprep.subr.bf16.mxu0 0
    %398 = vmatpush1.bf16.msra.mxu0 0
    %399 = vmatprep.subr.bf16.mxu0 0
    %400 = vmatpush1.bf16.msra.mxu0 0
    %401 = vmatprep.subr.bf16.mxu0 0
    %402 = vmatpush1.bf16.msra.mxu0 0
    %403 = vmatprep.subr.bf16.mxu0 0
    %404 = vmatpush1.bf16.msra.mxu0 0
    %405 = vmatprep.subr.bf16.mxu0 0
    %406 = vmatpush1.bf16.msra.mxu0 0
    %407 = vmatprep.subr.bf16.mxu0 0
    %408 = vmatpush1.bf16.msra.mxu0 0
    %409 = vmatprep.subr.bf16.mxu0 0
    %410 = vmatpush1.bf16.msra.mxu0 0
    %411 = vmatprep.subr.bf16.mxu0 0
    %412 = vmatpush1.bf16.msra.mxu0 0
    %413 = vmatprep.mubr.bf16.mxu0 0
    %414 = vmatmul.mubr.bf16.gmra.mrb[0].mxu0 %v379
    %v415 = vpop.f32.mrb[0].mxu0
    %v416 = vadd.f32 %v66, %v415
    %v417 = vpop.f32.mrb[0].mxu0
    %v418 = vpop.f32.mrb[0].mxu0
    %v419 = vpop.f32.mrb[0].mxu0
    %420 = vdwg.mxu0
    %s421 = scalar_lea.vmem [#allocation3], 10
    %422 = vst [vmem:[%s421] sm:$0x3] %v416
    %v423 = vld [vmem:[%s0] sm:$0x8]
    %v424 = vld [vmem:[%s0 + $0x4] sm:$0x8]
    %v427 = vunpack.c.l.b16 %v423
    %v428 = vunpack.c.l.b16 %v424
    %v429 = vpack.c.b16 %v427, %v427
    %v430 = vpack.c.b16 %v428, %v428
    %v431 = vunpack.c.l.b16 %v429
    %v432 = vunpack.c.l.b16 %v430
    %v433 = vrot.slane %v431, 6
    %v434 = vrot.slane %v432, 5
    %v435 = vsel %vm77, %v434, %v433
    %v436 = vpack.c.b16 %v435, %v435
    %v438 = vsel %vm80, %v436, 0
    %440 = vmatprep.subr.bf16.mxu0 0
    %441 = vmatpush1.bf16.msra.mxu0 %v86
    %442 = vmatprep.subr.bf16.mxu0 0
    %443 = vmatpush1.bf16.msra.mxu0 0
    %444 = vmatprep.subr.bf16.mxu0 0
    %445 = vmatpush1.bf16.msra.mxu0 0
    %446 = vmatprep.subr.bf16.mxu0 0
    %447 = vmatpush1.bf16.msra.mxu0 0
    %448 = vmatprep.subr.bf16.mxu0 0
    %449 = vmatpush1.bf16.msra.mxu0 0
    %450 = vmatprep.subr.bf16.mxu0 0
    %451 = vmatpush1.bf16.msra.mxu0 0
    %452 = vmatprep.subr.bf16.mxu0 0
    %453 = vmatpush1.bf16.msra.mxu0 0
    %454 = vmatprep.subr.bf16.mxu0 0
    %455 = vmatpush1.bf16.msra.mxu0 0
    %456 = vmatprep.subr.bf16.mxu0 0
    %457 = vmatpush1.bf16.msra.mxu0 0
    %458 = vmatprep.subr.bf16.mxu0 0
    %459 = vmatpush1.bf16.msra.mxu0 0
    %460 = vmatprep.subr.bf16.mxu0 0
    %461 = vmatpush1.bf16.msra.mxu0 0
    %462 = vmatprep.subr.bf16.mxu0 0
    %463 = vmatpush1.bf16.msra.mxu0 0
    %464 = vmatprep.subr.bf16.mxu0 0
    %465 = vmatpush1.bf16.msra.mxu0 0
    %466 = vmatprep.subr.bf16.mxu0 0
    %467 = vmatpush1.bf16.msra.mxu0 0
    %468 = vmatprep.subr.bf16.mxu0 0
    %469 = vmatpush1.bf16.msra.mxu0 0
    %470 = vmatprep.subr.bf16.mxu0 0
    %471 = vmatpush1.bf16.msra.mxu0 0
    %472 = vmatprep.mubr.bf16.mxu0 0
    %473 = vmatmul.mubr.bf16.gmra.mrb[0].mxu0 %v438
    %v474 = vpop.f32.mrb[0].mxu0
    %v475 = vadd.f32 %v66, %v474
    %v476 = vpop.f32.mrb[0].mxu0
    %v477 = vpop.f32.mrb[0].mxu0
    %v478 = vpop.f32.mrb[0].mxu0
    %479 = vdwg.mxu0
    %s480 = scalar_lea.vmem [#allocation3], 12
    %481 = vst [vmem:[%s480] sm:$0x3] %v475
    %v482 = vld [vmem:[%s0] sm:$0x8]
    %v483 = vld [vmem:[%s0 + $0x4] sm:$0x8]
    %v486 = vunpack.c.l.b16 %v482
    %v487 = vunpack.c.l.b16 %v483
    %v488 = vpack.c.b16 %v486, %v486
    %v489 = vpack.c.b16 %v487, %v487
    %v490 = vunpack.c.l.b16 %v488
    %v491 = vunpack.c.l.b16 %v489
    %v492 = vrot.slane %v490, 7
    %v493 = vrot.slane %v491, 6
    %v494 = vsel %vm77, %v493, %v492
    %v495 = vpack.c.b16 %v494, %v494
    %v497 = vsel %vm80, %v495, 0
    %499 = vmatprep.subr.bf16.mxu0 0
    %500 = vmatpush1.bf16.msra.mxu0 %v86
    %501 = vmatprep.subr.bf16.mxu0 0
    %502 = vmatpush1.bf16.msra.mxu0 0
    %503 = vmatprep.subr.bf16.mxu0 0
    %504 = vmatpush1.bf16.msra.mxu0 0
    %505 = vmatprep.subr.bf16.mxu0 0
    %506 = vmatpush1.bf16.msra.mxu0 0
    %507 = vmatprep.subr.bf16.mxu0 0
    %508 = vmatpush1.bf16.msra.mxu0 0
    %509 = vmatprep.subr.bf16.mxu0 0
    %510 = vmatpush1.bf16.msra.mxu0 0
    %511 = vmatprep.subr.bf16.mxu0 0
    %512 = vmatpush1.bf16.msra.mxu0 0
    %513 = vmatprep.subr.bf16.mxu0 0
    %514 = vmatpush1.bf16.msra.mxu0 0
    %515 = vmatprep.subr.bf16.mxu0 0
    %516 = vmatpush1.bf16.msra.mxu0 0
    %517 = vmatprep.subr.bf16.mxu0 0
    %518 = vmatpush1.bf16.msra.mxu0 0
    %519 = vmatprep.subr.bf16.mxu0 0
    %520 = vmatpush1.bf16.msra.mxu0 0
    %521 = vmatprep.subr.bf16.mxu0 0
    %522 = vmatpush1.bf16.msra.mxu0 0
    %523 = vmatprep.subr.bf16.mxu0 0
    %524 = vmatpush1.bf16.msra.mxu0 0
    %525 = vmatprep.subr.bf16.mxu0 0
    %526 = vmatpush1.bf16.msra.mxu0 0
    %527 = vmatprep.subr.bf16.mxu0 0
    %528 = vmatpush1.bf16.msra.mxu0 0
    %529 = vmatprep.subr.bf16.mxu0 0
    %530 = vmatpush1.bf16.msra.mxu0 0
    %531 = vmatprep.mubr.bf16.mxu0 0
    %532 = vmatmul.mubr.bf16.gmra.mrb[0].mxu0 %v497
    %v533 = vpop.f32.mrb[0].mxu0
    %v534 = vadd.f32 %v66, %v533
    %v535 = vpop.f32.mrb[0].mxu0
    %v536 = vpop.f32.mrb[0].mxu0
    %v537 = vpop.f32.mrb[0].mxu0
    %538 = vdwg.mxu0
    %s539 = scalar_lea.vmem [#allocation3], 14
    %540 = vst [vmem:[%s539] sm:$0x3] %v534
    %v541 = vld [vmem:[#allocation4] sm:$0xf]
    %v542 = vld [vmem:[#allocation4 + $0x4] sm:$0xf]
    %v543 = vld [vmem:[#allocation4 + $0x8] sm:$0xf]
    %v544 = vld [vmem:[#allocation4 + $0xc] sm:$0xf]
    %v545 = vld [vmem:[#allocation4 + $0x10] sm:$0xf]
    %v546 = vld [vmem:[#allocation4 + $0x14] sm:$0xf]
    %v547 = vld [vmem:[#allocation4 + $0x18] sm:$0xf]
    %v548 = vld [vmem:[#allocation4 + $0x1c] sm:$0xf]
    %v549 = vld [vmem:[#allocation4 + $0x20] sm:$0xf]
    %v550 = vld [vmem:[#allocation4 + $0x24] sm:$0xf]
    %v551 = vld [vmem:[#allocation4 + $0x28] sm:$0xf]
    %v552 = vld [vmem:[#allocation4 + $0x2c] sm:$0xf]
    %v553 = vld [vmem:[#allocation4 + $0x30] sm:$0xf]
    %v554 = vld [vmem:[#allocation4 + $0x34] sm:$0xf]
    %v555 = vld [vmem:[#allocation4 + $0x38] sm:$0xf]
    %v556 = vld [vmem:[#allocation4 + $0x3c] sm:$0xf]
    %v557 = vld [vmem:[#allocation2] sm:$0x3]
    %v558 = vld [vmem:[#allocation3] sm:$0x3]
    %v559 = vpack.c.bf16 %v557, %v557
    %v576 = vunpack.c.l.b16 %v541
    %v577 = vunpack.c.l.b16 %v542
    %v578 = vunpack.c.l.b16 %v543
    %v579 = vunpack.c.l.b16 %v544
    %v580 = vunpack.c.l.b16 %v545
    %v581 = vunpack.c.l.b16 %v546
    %v582 = vunpack.c.l.b16 %v547
    %v583 = vunpack.c.l.b16 %v548
    %v584 = vunpack.c.l.b16 %v549
    %v585 = vunpack.c.l.b16 %v550
    %v586 = vunpack.c.l.b16 %v551
    %v587 = vunpack.c.l.b16 %v552
    %v588 = vunpack.c.l.b16 %v553
    %v589 = vunpack.c.l.b16 %v554
    %v590 = vunpack.c.l.b16 %v555
    %v591 = vunpack.c.l.b16 %v556
    %v592 = vpack.c.b16 %v577, %v576
    %v593 = vpack.c.b16 %v579, %v578
    %v594 = vpack.c.b16 %v581, %v580
    %v595 = vpack.c.b16 %v583, %v582
    %v596 = vpack.c.b16 %v585, %v584
    %v597 = vpack.c.b16 %v587, %v586
    %v598 = vpack.c.b16 %v589, %v588
    %v599 = vpack.c.b16 %v591, %v590
    %608 = vmatprep.subr.bf16.mxu0 0
    %609 = vmatpush1.bf16.msra.mxu0 %v592
    %610 = vmatprep.subr.bf16.mxu0 0
    %611 = vmatpush1.bf16.msra.mxu0 %v593
    %612 = vmatprep.subr.bf16.mxu0 0
    %613 = vmatpush1.bf16.msra.mxu0 %v594
    %614 = vmatprep.subr.bf16.mxu0 0
    %615 = vmatpush1.bf16.msra.mxu0 %v595
    %616 = vmatprep.subr.bf16.mxu0 0
    %617 = vmatpush1.bf16.msra.mxu0 %v596
    %618 = vmatprep.subr.bf16.mxu0 0
    %619 = vmatpush1.bf16.msra.mxu0 %v597
    %620 = vmatprep.subr.bf16.mxu0 0
    %621 = vmatpush1.bf16.msra.mxu0 %v598
    %622 = vmatprep.subr.bf16.mxu0 0
    %623 = vmatpush1.bf16.msra.mxu0 %v599
    %624 = vmatprep.subr.bf16.mxu0 0
    %625 = vmatpush1.bf16.msra.mxu0 0
    %626 = vmatprep.subr.bf16.mxu0 0
    %627 = vmatpush1.bf16.msra.mxu0 0
    %628 = vmatprep.subr.bf16.mxu0 0
    %629 = vmatpush1.bf16.msra.mxu0 0
    %630 = vmatprep.subr.bf16.mxu0 0
    %631 = vmatpush1.bf16.msra.mxu0 0
    %632 = vmatprep.subr.bf16.mxu0 0
    %633 = vmatpush1.bf16.msra.mxu0 0
    %634 = vmatprep.subr.bf16.mxu0 0
    %635 = vmatpush1.bf16.msra.mxu0 0
    %636 = vmatprep.subr.bf16.mxu0 0
    %637 = vmatpush1.bf16.msra.mxu0 0
    %638 = vmatprep.subr.bf16.mxu0 0
    %639 = vmatpush1.bf16.msra.mxu0 0
    %640 = vmatprep.mubr.bf16.mxu0 0
    %641 = vmatmul.mubr.bf16.gmra.mrb[0].mxu0 %v559
    %v642 = vpop.f32.mrb[0].mxu0
    %v643 = vadd.f32 0.0, %v642
    %v644 = vpop.f32.mrb[0].mxu0
    %v645 = vpop.f32.mrb[0].mxu0
    %v646 = vpop.f32.mrb[0].mxu0
    %647 = vdwg.mxu0
    %v648 = vadd.f32 %v558, %v643
    %v649 = vtanh.pop %v648
    %v650 = vld [vmem:[%s185] sm:$0x3]
    %v651 = vpack.c.bf16 %v649, %v649
    %652 = vmatprep.subr.bf16.mxu0 0
    %653 = vmatpush1.bf16.msra.mxu0 %v592
    %654 = vmatprep.subr.bf16.mxu0 0
    %655 = vmatpush1.bf16.msra.mxu0 %v593
    %656 = vmatprep.subr.bf16.mxu0 0
    %657 = vmatpush1.bf16.msra.mxu0 %v594
    %658 = vmatprep.subr.bf16.mxu0 0
    %659 = vmatpush1.bf16.msra.mxu0 %v595
    %660 = vmatprep.subr.bf16.mxu0 0
    %661 = vmatpush1.bf16.msra.mxu0 %v596
    %662 = vmatprep.subr.bf16.mxu0 0
    %663 = vmatpush1.bf16.msra.mxu0 %v597
    %664 = vmatprep.subr.bf16.mxu0 0
    %665 = vmatpush1.bf16.msra.mxu0 %v598
    %666 = vmatprep.subr.bf16.mxu0 0
    %667 = vmatpush1.bf16.msra.mxu0 %v599
    %668 = vmatprep.subr.bf16.mxu0 0
    %669 = vmatpush1.bf16.msra.mxu0 0
    %670 = vmatprep.subr.bf16.mxu0 0
    %671 = vmatpush1.bf16.msra.mxu0 0
    %672 = vmatprep.subr.bf16.mxu0 0
    %673 = vmatpush1.bf16.msra.mxu0 0
    %674 = vmatprep.subr.bf16.mxu0 0
    %675 = vmatpush1.bf16.msra.mxu0 0
    %676 = vmatprep.subr.bf16.mxu0 0
    %677 = vmatpush1.bf16.msra.mxu0 0
    %678 = vmatprep.subr.bf16.mxu0 0
    %679 = vmatpush1.bf16.msra.mxu0 0
    %680 = vmatprep.subr.bf16.mxu0 0
    %681 = vmatpush1.bf16.msra.mxu0 0
    %682 = vmatprep.subr.bf16.mxu0 0
    %683 = vmatpush1.bf16.msra.mxu0 0
    %684 = vmatprep.mubr.bf16.mxu0 0
    %685 = vmatmul.mubr.bf16.gmra.mrb[0].mxu0 %v651
    %v686 = vpop.f32.mrb[0].mxu0
    %v687 = vadd.f32 0.0, %v686
    %v688 = vpop.f32.mrb[0].mxu0
    %v689 = vpop.f32.mrb[0].mxu0
    %v690 = vpop.f32.mrb[0].mxu0
    %691 = vdwg.mxu0
    %v692 = vadd.f32 %v650, %v687
    %v693 = vtanh.pop %v692
    %v694 = vld [vmem:[%s244] sm:$0x3]
    %v695 = vpack.c.bf16 %v693, %v693
    %696 = vmatprep.subr.bf16.mxu0 0
    %697 = vmatpush1.bf16.msra.mxu0 %v592
    %698 = vmatprep.subr.bf16.mxu0 0
    %699 = vmatpush1.bf16.msra.mxu0 %v593
    %700 = vmatprep.subr.bf16.mxu0 0
    %701 = vmatpush1.bf16.msra.mxu0 %v594
    %702 = vmatprep.subr.bf16.mxu0 0
    %703 = vmatpush1.bf16.msra.mxu0 %v595
    %704 = vmatprep.subr.bf16.mxu0 0
    %705 = vmatpush1.bf16.msra.mxu0 %v596
    %706 = vmatprep.subr.bf16.mxu0 0
    %707 = vmatpush1.bf16.msra.mxu0 %v597
    %708 = vmatprep.subr.bf16.mxu0 0
    %709 = vmatpush1.bf16.msra.mxu0 %v598
    %710 = vmatprep.subr.bf16.mxu0 0
    %711 = vmatpush1.bf16.msra.mxu0 %v599
    %712 = vmatprep.subr.bf16.mxu0 0
    %713 = vmatpush1.bf16.msra.mxu0 0
    %714 = vmatprep.subr.bf16.mxu0 0
    %715 = vmatpush1.bf16.msra.mxu0 0
    %716 = vmatprep.subr.bf16.mxu0 0
    %717 = vmatpush1.bf16.msra.mxu0 0
    %718 = vmatprep.subr.bf16.mxu0 0
    %719 = vmatpush1.bf16.msra.mxu0 0
    %720 = vmatprep.subr.bf16.mxu0 0
    %721 = vmatpush1.bf16.msra.mxu0 0
    %722 = vmatprep.subr.bf16.mxu0 0
    %723 = vmatpush1.bf16.msra.mxu0 0
    %724 = vmatprep.subr.bf16.mxu0 0
    %725 = vmatpush1.bf16.msra.mxu0 0
    %726 = vmatprep.subr.bf16.mxu0 0
    %727 = vmatpush1.bf16.msra.mxu0 0
    %728 = vmatprep.mubr.bf16.mxu0 0
    %729 = vmatmul.mubr.bf16.gmra.mrb[0].mxu0 %v695
    %v730 = vpop.f32.mrb[0].mxu0
    %v731 = vadd.f32 0.0, %v730
    %v732 = vpop.f32.mrb[0].mxu0
    %v733 = vpop.f32.mrb[0].mxu0
    %v734 = vpop.f32.mrb[0].mxu0
    %735 = vdwg.mxu0
    %v736 = vadd.f32 %v694, %v731
    %v737 = vtanh.pop %v736
    %v738 = vld [vmem:[%s303] sm:$0x3]
    %v739 = vpack.c.bf16 %v737, %v737
    %740 = vmatprep.subr.bf16.mxu0 0
    %741 = vmatpush1.bf16.msra.mxu0 %v592
    %742 = vmatprep.subr.bf16.mxu0 0
    %743 = vmatpush1.bf16.msra.mxu0 %v593
    %744 = vmatprep.subr.bf16.mxu0 0
    %745 = vmatpush1.bf16.msra.mxu0 %v594
    %746 = vmatprep.subr.bf16.mxu0 0
    %747 = vmatpush1.bf16.msra.mxu0 %v595
    %748 = vmatprep.subr.bf16.mxu0 0
    %749 = vmatpush1.bf16.msra.mxu0 %v596
    %750 = vmatprep.subr.bf16.mxu0 0
    %751 = vmatpush1.bf16.msra.mxu0 %v597
    %752 = vmatprep.subr.bf16.mxu0 0
    %753 = vmatpush1.bf16.msra.mxu0 %v598
    %754 = vmatprep.subr.bf16.mxu0 0
    %755 = vmatpush1.bf16.msra.mxu0 %v599
    %756 = vmatprep.subr.bf16.mxu0 0
    %757 = vmatpush1.bf16.msra.mxu0 0
    %758 = vmatprep.subr.bf16.mxu0 0
    %759 = vmatpush1.bf16.msra.mxu0 0
    %760 = vmatprep.subr.bf16.mxu0 0
    %761 = vmatpush1.bf16.msra.mxu0 0
    %762 = vmatprep.subr.bf16.mxu0 0
    %763 = vmatpush1.bf16.msra.mxu0 0
    %764 = vmatprep.subr.bf16.mxu0 0
    %765 = vmatpush1.bf16.msra.mxu0 0
    %766 = vmatprep.subr.bf16.mxu0 0
    %767 = vmatpush1.bf16.msra.mxu0 0
    %768 = vmatprep.subr.bf16.mxu0 0
    %769 = vmatpush1.bf16.msra.mxu0 0
    %770 = vmatprep.subr.bf16.mxu0 0
    %771 = vmatpush1.bf16.msra.mxu0 0
    %772 = vmatprep.mubr.bf16.mxu0 0
    %773 = vmatmul.mubr.bf16.gmra.mrb[0].mxu0 %v739
    %v774 = vpop.f32.mrb[0].mxu0
    %v775 = vadd.f32 0.0, %v774
    %v776 = vpop.f32.mrb[0].mxu0
    %v777 = vpop.f32.mrb[0].mxu0
    %v778 = vpop.f32.mrb[0].mxu0
    %779 = vdwg.mxu0
    %v780 = vadd.f32 %v738, %v775
    %v781 = vtanh.pop %v780
    %v782 = vld [vmem:[%s362] sm:$0x3]
    %v783 = vpack.c.bf16 %v781, %v781
    %784 = vmatprep.subr.bf16.mxu0 0
    %785 = vmatpush1.bf16.msra.mxu0 %v592
    %786 = vmatprep.subr.bf16.mxu0 0
    %787 = vmatpush1.bf16.msra.mxu0 %v593
    %788 = vmatprep.subr.bf16.mxu0 0
    %789 = vmatpush1.bf16.msra.mxu0 %v594
    %790 = vmatprep.subr.bf16.mxu0 0
    %791 = vmatpush1.bf16.msra.mxu0 %v595
    %792 = vmatprep.subr.bf16.mxu0 0
    %793 = vmatpush1.bf16.msra.mxu0 %v596
    %794 = vmatprep.subr.bf16.mxu0 0
    %795 = vmatpush1.bf16.msra.mxu0 %v597
    %796 = vmatprep.subr.bf16.mxu0 0
    %797 = vmatpush1.bf16.msra.mxu0 %v598
    %798 = vmatprep.subr.bf16.mxu0 0
    %799 = vmatpush1.bf16.msra.mxu0 %v599
    %800 = vmatprep.subr.bf16.mxu0 0
    %801 = vmatpush1.bf16.msra.mxu0 0
    %802 = vmatprep.subr.bf16.mxu0 0
    %803 = vmatpush1.bf16.msra.mxu0 0
    %804 = vmatprep.subr.bf16.mxu0 0
    %805 = vmatpush1.bf16.msra.mxu0 0
    %806 = vmatprep.subr.bf16.mxu0 0
    %807 = vmatpush1.bf16.msra.mxu0 0
    %808 = vmatprep.subr.bf16.mxu0 0
    %809 = vmatpush1.bf16.msra.mxu0 0
    %810 = vmatprep.subr.bf16.mxu0 0
    %811 = vmatpush1.bf16.msra.mxu0 0
    %812 = vmatprep.subr.bf16.mxu0 0
    %813 = vmatpush1.bf16.msra.mxu0 0
    %814 = vmatprep.subr.bf16.mxu0 0
    %815 = vmatpush1.bf16.msra.mxu0 0
    %816 = vmatprep.mubr.bf16.mxu0 0
    %817 = vmatmul.mubr.bf16.gmra.mrb[0].mxu0 %v783
    %v818 = vpop.f32.mrb[0].mxu0
    %v819 = vadd.f32 0.0, %v818
    %v820 = vpop.f32.mrb[0].mxu0
    %v821 = vpop.f32.mrb[0].mxu0
    %v822 = vpop.f32.mrb[0].mxu0
    %823 = vdwg.mxu0
    %v824 = vadd.f32 %v782, %v819
    %v825 = vtanh.pop %v824
    %v826 = vld [vmem:[%s421] sm:$0x3]
    %v827 = vpack.c.bf16 %v825, %v825
    %828 = vmatprep.subr.bf16.mxu0 0
    %829 = vmatpush1.bf16.msra.mxu0 %v592
    %830 = vmatprep.subr.bf16.mxu0 0
    %831 = vmatpush1.bf16.msra.mxu0 %v593
    %832 = vmatprep.subr.bf16.mxu0 0
    %833 = vmatpush1.bf16.msra.mxu0 %v594
    %834 = vmatprep.subr.bf16.mxu0 0
    %835 = vmatpush1.bf16.msra.mxu0 %v595
    %836 = vmatprep.subr.bf16.mxu0 0
    %837 = vmatpush1.bf16.msra.mxu0 %v596
    %838 = vmatprep.subr.bf16.mxu0 0
    %839 = vmatpush1.bf16.msra.mxu0 %v597
    %840 = vmatprep.subr.bf16.mxu0 0
    %841 = vmatpush1.bf16.msra.mxu0 %v598
    %842 = vmatprep.subr.bf16.mxu0 0
    %843 = vmatpush1.bf16.msra.mxu0 %v599
    %844 = vmatprep.subr.bf16.mxu0 0
    %845 = vmatpush1.bf16.msra.mxu0 0
    %846 = vmatprep.subr.bf16.mxu0 0
    %847 = vmatpush1.bf16.msra.mxu0 0
    %848 = vmatprep.subr.bf16.mxu0 0
    %849 = vmatpush1.bf16.msra.mxu0 0
    %850 = vmatprep.subr.bf16.mxu0 0
    %851 = vmatpush1.bf16.msra.mxu0 0
    %852 = vmatprep.subr.bf16.mxu0 0
    %853 = vmatpush1.bf16.msra.mxu0 0
    %854 = vmatprep.subr.bf16.mxu0 0
    %855 = vmatpush1.bf16.msra.mxu0 0
    %856 = vmatprep.subr.bf16.mxu0 0
    %857 = vmatpush1.bf16.msra.mxu0 0
    %858 = vmatprep.subr.bf16.mxu0 0
    %859 = vmatpush1.bf16.msra.mxu0 0
    %860 = vmatprep.mubr.bf16.mxu0 0
    %861 = vmatmul.mubr.bf16.gmra.mrb[0].mxu0 %v827
    %v862 = vpop.f32.mrb[0].mxu0
    %v863 = vadd.f32 0.0, %v862
    %v864 = vpop.f32.mrb[0].mxu0
    %v865 = vpop.f32.mrb[0].mxu0
    %v866 = vpop.f32.mrb[0].mxu0
    %867 = vdwg.mxu0
    %v868 = vadd.f32 %v826, %v863
    %v869 = vtanh.pop %v868
    %v870 = vld [vmem:[%s480] sm:$0x3]
    %v871 = vpack.c.bf16 %v869, %v869
    %872 = vmatprep.subr.bf16.mxu0 0
    %873 = vmatpush1.bf16.msra.mxu0 %v592
    %874 = vmatprep.subr.bf16.mxu0 0
    %875 = vmatpush1.bf16.msra.mxu0 %v593
    %876 = vmatprep.subr.bf16.mxu0 0
    %877 = vmatpush1.bf16.msra.mxu0 %v594
    %878 = vmatprep.subr.bf16.mxu0 0
    %879 = vmatpush1.bf16.msra.mxu0 %v595
    %880 = vmatprep.subr.bf16.mxu0 0
    %881 = vmatpush1.bf16.msra.mxu0 %v596
    %882 = vmatprep.subr.bf16.mxu0 0
    %883 = vmatpush1.bf16.msra.mxu0 %v597
    %884 = vmatprep.subr.bf16.mxu0 0
    %885 = vmatpush1.bf16.msra.mxu0 %v598
    %886 = vmatprep.subr.bf16.mxu0 0
    %887 = vmatpush1.bf16.msra.mxu0 %v599
    %888 = vmatprep.subr.bf16.mxu0 0
    %889 = vmatpush1.bf16.msra.mxu0 0
    %890 = vmatprep.subr.bf16.mxu0 0
    %891 = vmatpush1.bf16.msra.mxu0 0
    %892 = vmatprep.subr.bf16.mxu0 0
    %893 = vmatpush1.bf16.msra.mxu0 0
    %894 = vmatprep.subr.bf16.mxu0 0
    %895 = vmatpush1.bf16.msra.mxu0 0
    %896 = vmatprep.subr.bf16.mxu0 0
    %897 = vmatpush1.bf16.msra.mxu0 0
    %898 = vmatprep.subr.bf16.mxu0 0
    %899 = vmatpush1.bf16.msra.mxu0 0
    %900 = vmatprep.subr.bf16.mxu0 0
    %901 = vmatpush1.bf16.msra.mxu0 0
    %902 = vmatprep.subr.bf16.mxu0 0
    %903 = vmatpush1.bf16.msra.mxu0 0
    %904 = vmatprep.mubr.bf16.mxu0 0
    %905 = vmatmul.mubr.bf16.gmra.mrb[0].mxu0 %v871
    %v906 = vpop.f32.mrb[0].mxu0
    %v907 = vadd.f32 0.0, %v906
    %v908 = vpop.f32.mrb[0].mxu0
    %v909 = vpop.f32.mrb[0].mxu0
    %v910 = vpop.f32.mrb[0].mxu0
    %911 = vdwg.mxu0
    %v912 = vadd.f32 %v870, %v907
    %v913 = vtanh.pop %v912
    %v914 = vld [vmem:[%s539] sm:$0x3]
    %v915 = vpack.c.bf16 %v913, %v913
    %916 = vmatprep.subr.bf16.mxu0 0
    %917 = vmatpush1.bf16.msra.mxu0 %v592
    %918 = vmatprep.subr.bf16.mxu0 0
    %919 = vmatpush1.bf16.msra.mxu0 %v593
    %920 = vmatprep.subr.bf16.mxu0 0
    %921 = vmatpush1.bf16.msra.mxu0 %v594
    %922 = vmatprep.subr.bf16.mxu0 0
    %923 = vmatpush1.bf16.msra.mxu0 %v595
    %924 = vmatprep.subr.bf16.mxu0 0
    %925 = vmatpush1.bf16.msra.mxu0 %v596
    %926 = vmatprep.subr.bf16.mxu0 0
    %927 = vmatpush1.bf16.msra.mxu0 %v597
    %928 = vmatprep.subr.bf16.mxu0 0
    %929 = vmatpush1.bf16.msra.mxu0 %v598
    %930 = vmatprep.subr.bf16.mxu0 0
    %931 = vmatpush1.bf16.msra.mxu0 %v599
    %932 = vmatprep.subr.bf16.mxu0 0
    %933 = vmatpush1.bf16.msra.mxu0 0
    %934 = vmatprep.subr.bf16.mxu0 0
    %935 = vmatpush1.bf16.msra.mxu0 0
    %936 = vmatprep.subr.bf16.mxu0 0
    %937 = vmatpush1.bf16.msra.mxu0 0
    %938 = vmatprep.subr.bf16.mxu0 0
    %939 = vmatpush1.bf16.msra.mxu0 0
    %940 = vmatprep.subr.bf16.mxu0 0
    %941 = vmatpush1.bf16.msra.mxu0 0
    %942 = vmatprep.subr.bf16.mxu0 0
    %943 = vmatpush1.bf16.msra.mxu0 0
    %944 = vmatprep.subr.bf16.mxu0 0
    %945 = vmatpush1.bf16.msra.mxu0 0
    %946 = vmatprep.subr.bf16.mxu0 0
    %947 = vmatpush1.bf16.msra.mxu0 0
    %948 = vmatprep.mubr.bf16.mxu0 0
    %949 = vmatmul.mubr.bf16.gmra.mrb[0].mxu0 %v915
    %v950 = vpop.f32.mrb[0].mxu0
    %v951 = vadd.f32 0.0, %v950
    %v952 = vpop.f32.mrb[0].mxu0
    %v953 = vpop.f32.mrb[0].mxu0
    %v954 = vpop.f32.mrb[0].mxu0
    %955 = vdwg.mxu0
    %v956 = vadd.f32 %v914, %v951
    %v957 = vtanh.pop %v956
    %958 = vst [vmem:[#allocation2] sm:$0x3] %v957
    // Predicated region
    $region38: #{tpu_custom_call.1} parent=1 // pred_check
      %p959 = pneg %p53
    $region39: #{tpu_custom_call.1} parent=1 // pred_check_branch
      %961 = sbr.rel (%p959) target = $region41
    $region40: #{tpu_custom_call.1} parent=1 // pred_region
      %v962 = vpack.c.bf16 %v957, %v957
      %v963 = vld [vmem:[#allocation7] sm:$0xf]
      %v964 = vld [vmem:[#allocation7 + $0x4] sm:$0xf]
      %v965 = vld [vmem:[#allocation7 + $0x8] sm:$0xf]
      %v966 = vld [vmem:[#allocation7 + $0xc] sm:$0xf]
      %v967 = vld [vmem:[#allocation7 + $0x10] sm:$0xf]
      %v968 = vld [vmem:[#allocation7 + $0x14] sm:$0xf]
      %v969 = vld [vmem:[#allocation7 + $0x18] sm:$0xf]
      %v970 = vld [vmem:[#allocation7 + $0x1c] sm:$0xf]
      %v971 = vld [vmem:[#allocation7 + $0x20] sm:$0xf]
      %v972 = vld [vmem:[#allocation7 + $0x24] sm:$0xf]
      %v973 = vld [vmem:[#allocation7 + $0x28] sm:$0xf]
      %v974 = vld [vmem:[#allocation7 + $0x2c] sm:$0xf]
      %v975 = vld [vmem:[#allocation7 + $0x30] sm:$0xf]
      %v976 = vld [vmem:[#allocation7 + $0x34] sm:$0xf]
      %v977 = vld [vmem:[#allocation7 + $0x38] sm:$0xf]
      %v978 = vld [vmem:[#allocation7 + $0x3c] sm:$0xf]
      %v979 = vld [vmem:[%s5] sm:$0x1]
      %v981 = vlaneseq
      %v982 = vshrl.u32 %v981, 7
      %v983 = vsub.s32 0, %v982
      %v984 = vrot.slane %v979, %v983
      %v1002 = vunpack.c.l.b16 %v963
      %v1003 = vunpack.c.l.b16 %v964
      %v1004 = vunpack.c.l.b16 %v965
      %v1005 = vunpack.c.l.b16 %v966
      %v1006 = vunpack.c.l.b16 %v967
      %v1007 = vunpack.c.l.b16 %v968
      %v1008 = vunpack.c.l.b16 %v969
      %v1009 = vunpack.c.l.b16 %v970
      %v1010 = vunpack.c.l.b16 %v971
      %v1011 = vunpack.c.l.b16 %v972
      %v1012 = vunpack.c.l.b16 %v973
      %v1013 = vunpack.c.l.b16 %v974
      %v1014 = vunpack.c.l.b16 %v975
      %v1015 = vunpack.c.l.b16 %v976
      %v1016 = vunpack.c.l.b16 %v977
      %v1017 = vunpack.c.l.b16 %v978
      %v1018 = vpack.c.b16 %v1003, %v1002
      %v1019 = vpack.c.b16 %v1005, %v1004
      %v1020 = vpack.c.b16 %v1007, %v1006
      %v1021 = vpack.c.b16 %v1009, %v1008
      %v1022 = vpack.c.b16 %v1011, %v1010
      %v1023 = vpack.c.b16 %v1013, %v1012
      %v1024 = vpack.c.b16 %v1015, %v1014
      %v1025 = vpack.c.b16 %v1017, %v1016
      %1034 = vmatprep.subr.bf16.mxu0 0
      %1035 = vmatpush1.bf16.msra.mxu0 %v1018
      %1036 = vmatprep.subr.bf16.mxu0 0
      %1037 = vmatpush1.bf16.msra.mxu0 %v1019
      %1038 = vmatprep.subr.bf16.mxu0 0
      %1039 = vmatpush1.bf16.msra.mxu0 %v1020
      %1040 = vmatprep.subr.bf16.mxu0 0
      %1041 = vmatpush1.bf16.msra.mxu0 %v1021
      %1042 = vmatprep.subr.bf16.mxu0 0
      %1043 = vmatpush1.bf16.msra.mxu0 %v1022
      %1044 = vmatprep.subr.bf16.mxu0 0
      %1045 = vmatpush1.bf16.msra.mxu0 %v1023
      %1046 = vmatprep.subr.bf16.mxu0 0
      %1047 = vmatpush1.bf16.msra.mxu0 %v1024
      %1048 = vmatprep.subr.bf16.mxu0 0
      %1049 = vmatpush1.bf16.msra.mxu0 %v1025
      %1050 = vmatprep.subr.bf16.mxu0 0
      %1051 = vmatpush1.bf16.msra.mxu0 0
      %1052 = vmatprep.subr.bf16.mxu0 0
      %1053 = vmatpush1.bf16.msra.mxu0 0
      %1054 = vmatprep.subr.bf16.mxu0 0
      %1055 = vmatpush1.bf16.msra.mxu0 0
      %1056 = vmatprep.subr.bf16.mxu0 0
      %1057 = vmatpush1.bf16.msra.mxu0 0
      %1058 = vmatprep.subr.bf16.mxu0 0
      %1059 = vmatpush1.bf16.msra.mxu0 0
      %1060 = vmatprep.subr.bf16.mxu0 0
      %1061 = vmatpush1.bf16.msra.mxu0 0
      %1062 = vmatprep.subr.bf16.mxu0 0
      %1063 = vmatpush1.bf16.msra.mxu0 0
      %1064 = vmatprep.subr.bf16.mxu0 0
      %1065 = vmatpush1.bf16.msra.mxu0 0
      %1066 = vmatprep.mubr.bf16.mxu0 0
      %1067 = vmatmul.mubr.bf16.gmra.mrb[0].mxu0 %v962
      %v1068 = vpop.f32.mrb[0].mxu0
      %v1069 = vadd.f32 %v984, %v1068
      %v1070 = vpop.f32.mrb[0].mxu0
      %v1071 = vpop.f32.mrb[0].mxu0
      %v1072 = vpop.f32.mrb[0].mxu0
      %1073 = vdwg.mxu0
      %1074 = vst [vmem:[#allocation9] sm:$0x3] %v1069
    $region41: #{tpu_custom_call.1} parent=1 // pred_fallthru
      _
    // Predicated region
    $region42: #{tpu_custom_call.1} parent=1 // pred_check
      _
    $region43: #{tpu_custom_call.1} parent=1 // pred_check_branch
      %1076 = sbr.rel (0) target = $region45
    $region44: #{tpu_custom_call.1} parent=1 // pred_region
      %s1078 = ssub.s32 32, 32
      %1079 = vsyncadd [#allocation6], %s1078
      %s1081 = sshll.u32 [#allocation9], 4
      %s1082 = int_to_ptr.vmem [resolvable:$true] %s1081
      %1084 = dma.vmem_to_hbm [thread:$0]  %s1082, 32, %s6, [#allocation6]
    $region45: #{tpu_custom_call.1} parent=1 // pred_fallthru
      _
    // Predicated region
    $region46: #{tpu_custom_call.1} parent=1 // pred_check
      _
    $region47: #{tpu_custom_call.1} parent=1 // pred_check_branch
      %1086 = sbr.rel (0) target = $region49
    $region48: #{tpu_custom_call.1} parent=1 // pred_region
      %1087 = dma.done [#allocation6], 32
    $region49: #{tpu_custom_call.1} parent=1 // pred_fallthru
      _
    %1088 = vsyncpa [#allocation5], 1
    %1089 = vsyncpa [#allocation8], 1
    %1090 = vsyncpa [#allocation6], 1

// kernel: tpu_custom_call.1
$region0: #{tpu_custom_call.1}
  #allocation0 [shape = 'u32[]', space=smem, size = 0x4, offset = 0x4, fixed_abs, tag = 'smem constant byte address 0x4 - core index']
  #allocation1 [shape = 'u32[144,128]{1,0:T(1,128)}', space=vmem, size = 0x12000, scoped, tag = 'internal scratch']
  #allocation2 [shape = 'f32[2,128]{1,0:T(2,128)}', space=vmem, size = 0x400, scoped, tag = 'scratch operand']
  #allocation3 [shape = 'f32[8,2,128]{2,1,0:T(2,128)}', space=vmem, size = 0x2000, scoped, tag = 'scratch operand']
  %s0 = inlined_call_operand.vmem [shape: bf16[2,8,4], index: 0, kind: input, shape index: {}]
  %s1 = inlined_call_operand.vmem [shape: bf16[4,128], index: 1, kind: input, shape index: {}]
  %s2 = inlined_call_operand.hbm [shape: bf16[128,128], index: 2, kind: input, shape index: {}]
  %s3 = inlined_call_operand.vmem [shape: f32[1,128], index: 3, kind: input, shape index: {}]
  %s4 = inlined_call_operand.hbm [shape: bf16[128,128], index: 4, kind: input, shape index: {}]
  %s5 = inlined_call_operand.vmem [shape: f32[1,128], index: 5, kind: input, shape index: {}]
  %s6 = inlined_call_operand.hbm [shape: f32[2,128], index: 6, kind: output, shape index: {}]
  %s7 = sld [smem:[#allocation0]]
  $region50: #{tpu_custom_call.1} parent=0
    _
  %s9 = ssub.s32 1, %s7
  %s10 = scalar_select 0, %s9, %s7
  $region1: #{tpu_custom_call.1} parent=0
    #allocation4 [shape = 'u8[32768]{0}', space=vmem, size = 0x8000, scoped, tag = 'input window, operand 2, single buffered']
    #allocation5 [shape = 's32[1]{0}', space=sflag, size = 0x4, scoped, tag = 'scoped memory for tpu_custom_call.1']
    #allocation6 [shape = 's32[1]{0}', space=sflag, size = 0x4, scoped, tag = 'scoped memory for tpu_custom_call.1']
    #allocation7 [shape = 'u8[32768]{0}', space=vmem, size = 0x8000, scoped, tag = 'input window, operand 4, single buffered']
    #allocation8 [shape = 's32[1]{0}', space=sflag, size = 0x4, scoped, tag = 'scoped memory for tpu_custom_call.1']
    #allocation9 [shape = 'u8[1024]{0}', space=vmem, size = 0x400, scoped, tag = 'output window, operand 0, single buffered']
    %11 = vsyncpa [#allocation5], 0
    %12 = vsyncpa [#allocation8], 0
    %13 = vsyncpa [#allocation6], 0
    // Predicated region
    $region2: #{tpu_custom_call.1} parent=1 // pred_check
      _
    $region3: #{tpu_custom_call.1} parent=1 // pred_check_branch
      %15 = sbr.rel (0) target = $region5
    $region4: #{tpu_custom_call.1} parent=1 // pred_region
      _
    $region5: #{tpu_custom_call.1} parent=1 // pred_fallthru
      _
    // Predicated region
    $region6: #{tpu_custom_call.1} parent=1 // pred_check
      _
    $region7: #{tpu_custom_call.1} parent=1 // pred_check_branch
      %17 = sbr.rel (0) target = $region9
    $region8: #{tpu_custom_call.1} parent=1 // pred_region
      _
    $region9: #{tpu_custom_call.1} parent=1 // pred_fallthru
      _
    // Predicated region
    $region10: #{tpu_custom_call.1} parent=1 // pred_check
      _
    $region11: #{tpu_custom_call.1} parent=1 // pred_check_branch
      %19 = sbr.rel (0) target = $region13
    $region12: #{tpu_custom_call.1} parent=1 // pred_region
      %s21 = ssub.s32 1024, 1024
      %22 = vsyncadd [#allocation5], %s21
      %s23 = sshll.u32 [#allocation4], 4
      %s24 = int_to_ptr.vmem [resolvable:$true] %s23
      %29 = dma.hbm_to_vmem [thread:$0]  %s2, 1024, %s24, [#allocation5], 64, 64, 4
    $region13: #{tpu_custom_call.1} parent=1 // pred_fallthru
      _
    // Predicated region
    $region14: #{tpu_custom_call.1} parent=1 // pred_check
      _
    $region15: #{tpu_custom_call.1} parent=1 // pred_check_branch
      %31 = sbr.rel (0) target = $region17
    $region16: #{tpu_custom_call.1} parent=1 // pred_region
      _
    $region17: #{tpu_custom_call.1} parent=1 // pred_fallthru
      _
    // Predicated region
    $region18: #{tpu_custom_call.1} parent=1 // pred_check
      _
    $region19: #{tpu_custom_call.1} parent=1 // pred_check_branch
      %33 = sbr.rel (0) target = $region21
    $region20: #{tpu_custom_call.1} parent=1 // pred_region
      %s35 = ssub.s32 1024, 1024
      %36 = vsyncadd [#allocation8], %s35
      %s37 = sshll.u32 [#allocation7], 4
      %s38 = int_to_ptr.vmem [resolvable:$true] %s37
      %43 = dma.hbm_to_vmem [thread:$0]  %s4, 1024, %s38, [#allocation8], 64, 64, 4
    $region21: #{tpu_custom_call.1} parent=1 // pred_fallthru
      _
    // Predicated region
    $region22: #{tpu_custom_call.1} parent=1 // pred_check
      _
    $region23: #{tpu_custom_call.1} parent=1 // pred_check_branch
      %45 = sbr.rel (0) target = $region25
    $region24: #{tpu_custom_call.1} parent=1 // pred_region
      _
    $region25: #{tpu_custom_call.1} parent=1 // pred_fallthru
      _
    // Predicated region
    $region26: #{tpu_custom_call.1} parent=1 // pred_check
      _
    $region27: #{tpu_custom_call.1} parent=1 // pred_check_branch
      %47 = sbr.rel (0) target = $region29
    $region28: #{tpu_custom_call.1} parent=1 // pred_region
      %48 = dma.done [#allocation5], 1024
    $region29: #{tpu_custom_call.1} parent=1 // pred_fallthru
      _
    // Predicated region
    $region30: #{tpu_custom_call.1} parent=1 // pred_check
      _
    $region31: #{tpu_custom_call.1} parent=1 // pred_check_branch
      %50 = sbr.rel (0) target = $region33
    $region32: #{tpu_custom_call.1} parent=1 // pred_region
      %51 = dma.done [#allocation8], 1024
    $region33: #{tpu_custom_call.1} parent=1 // pred_fallthru
      _
    %p53 = scmp.eq.s32.totalorder 0, 0
    // Predicated region
    $region34: #{tpu_custom_call.1} parent=1 // pred_check
      %p54 = pneg %p53
    $region35: #{tpu_custom_call.1} parent=1 // pred_check_branch
      %56 = sbr.rel (%p54) target = $region37
    $region36: #{tpu_custom_call.1} parent=1 // pred_region
      %57 = vst [vmem:[#allocation2] sm:$0x3] 0.0
    $region37: #{tpu_custom_call.1} parent=1 // pred_fallthru
      _
    %v58 = vld [vmem:[%s1] sm:$0x3]
    %v59 = vld [vmem:[%s3] sm:$0x1]
    %v60 = vld [vmem:[%s0] sm:$0x1]
    %v61 = vld [vmem:[%s0 + $0x4] sm:$0x1]
    %v63 = vlaneseq
    %v64 = vshrl.u32 %v63, 7
    %v65 = vsub.s32 0, %v64
    %v66 = vrot.slane %v59, %v65
    %v70 = vunpack.c.l.b16 %v60
    %v71 = vunpack.c.l.b16 %v61
    %v72 = vpack.c.b16 %v70, %v70
    %v73 = vpack.c.b16 %v71, %v71
    %v74 = vunpack.c.l.b16 %v72
    %v75 = vunpack.c.l.b16 %v73
    %v76 = vrot.slane %v75, 7
    %vm77 = vcmask 1041409
    %v78 = vsel %vm77, %v76, %v74
    %v79 = vpack.c.b16 %v78, %v78
    %vm80 = vcmask 31744
    %v82 = vsel %vm80, %v79, 0
    %vm84 = vcmask 1041408
    %v86 = vsel %vm84, %v58, 0
    %88 = vmatprep.subr.bf16.mxu0 0
    %89 = vmatpush1.bf16.msra.mxu0 %v86
    %90 = vmatprep.subr.bf16.mxu0 0
    %91 = vmatpush1.bf16.msra.mxu0 0
    %92 = vmatprep.subr.bf16.mxu0 0
    %93 = vmatpush1.bf16.msra.mxu0 0
    %94 = vmatprep.subr.bf16.mxu0 0
    %95 = vmatpush1.bf16.msra.mxu0 0
    %96 = vmatprep.subr.bf16.mxu0 0
    %97 = vmatpush1.bf16.msra.mxu0 0
    %98 = vmatprep.subr.bf16.mxu0 0
    %99 = vmatpush1.bf16.msra.mxu0 0
    %100 = vmatprep.subr.bf16.mxu0 0
    %101 = vmatpush1.bf16.msra.mxu0 0
    %102 = vmatprep.subr.bf16.mxu0 0
    %103 = vmatpush1.bf16.msra.mxu0 0
    %104 = vmatprep.subr.bf16.mxu0 0
    %105 = vmatpush1.bf16.msra.mxu0 0
    %106 = vmatprep.subr.bf16.mxu0 0
    %107 = vmatpush1.bf16.msra.mxu0 0
    %108 = vmatprep.subr.bf16.mxu0 0
    %109 = vmatpush1.bf16.msra.mxu0 0
    %110 = vmatprep.subr.bf16.mxu0 0
    %111 = vmatpush1.bf16.msra.mxu0 0
    %112 = vmatprep.subr.bf16.mxu0 0
    %113 = vmatpush1.bf16.msra.mxu0 0
    %114 = vmatprep.subr.bf16.mxu0 0
    %115 = vmatpush1.bf16.msra.mxu0 0
    %116 = vmatprep.subr.bf16.mxu0 0
    %117 = vmatpush1.bf16.msra.mxu0 0
    %118 = vmatprep.subr.bf16.mxu0 0
    %119 = vmatpush1.bf16.msra.mxu0 0
    %120 = vmatprep.mubr.bf16.mxu0 0
    %121 = vmatmul.mubr.bf16.gmra.mrb[0].mxu0 %v82
    %v122 = vpop.f32.mrb[0].mxu0
    %v123 = vadd.f32 %v66, %v122
    %v124 = vpop.f32.mrb[0].mxu0
    %v125 = vpop.f32.mrb[0].mxu0
    %v126 = vpop.f32.mrb[0].mxu0
    %127 = vdwg.mxu0
    %128 = vst [vmem:[#allocation3] sm:$0x3] %v123
    %v129 = vld [vmem:[%s0] sm:$0x1]
    %v130 = vld [vmem:[%s0 + $0x4] sm:$0x1]
    %v133 = vunpack.c.l.b16 %v129
    %v134 = vunpack.c.l.b16 %v130
    %v135 = vpack.c.b16 %v133, %v133
    %v136 = vpack.c.b16 %v134, %v134
    %v137 = vunpack.c.l.b16 %v135
    %v138 = vunpack.c.l.b16 %v136
    %v139 = vrot.slane %v137, 1
    %v140 = vsel %vm77, %v138, %v139
    %v141 = vpack.c.b16 %v140, %v140
    %v143 = vsel %vm80, %v141, 0
    %145 = vmatprep.subr.bf16.mxu0 0
    %146 = vmatpush1.bf16.msra.mxu0 %v86
    %147 = vmatprep.subr.bf16.mxu0 0
    %148 = vmatpush1.bf16.msra.mxu0 0
    %149 = vmatprep.subr.bf16.mxu0 0
    %150 = vmatpush1.bf16.msra.mxu0 0
    %151 = vmatprep.subr.bf16.mxu0 0
    %152 = vmatpush1.bf16.msra.mxu0 0
    %153 = vmatprep.subr.bf16.mxu0 0
    %154 = vmatpush1.bf16.msra.mxu0 0
    %155 = vmatprep.subr.bf16.mxu0 0
    %156 = vmatpush1.bf16.msra.mxu0 0
    %157 = vmatprep.subr.bf16.mxu0 0
    %158 = vmatpush1.bf16.msra.mxu0 0
    %159 = vmatprep.subr.bf16.mxu0 0
    %160 = vmatpush1.bf16.msra.mxu0 0
    %161 = vmatprep.subr.bf16.mxu0 0
    %162 = vmatpush1.bf16.msra.mxu0 0
    %163 = vmatprep.subr.bf16.mxu0 0
    %164 = vmatpush1.bf16.msra.mxu0 0
    %165 = vmatprep.subr.bf16.mxu0 0
    %166 = vmatpush1.bf16.msra.mxu0 0
    %167 = vmatprep.subr.bf16.mxu0 0
    %168 = vmatpush1.bf16.msra.mxu0 0
    %169 = vmatprep.subr.bf16.mxu0 0
    %170 = vmatpush1.bf16.msra.mxu0 0
    %171 = vmatprep.subr.bf16.mxu0 0
    %172 = vmatpush1.bf16.msra.mxu0 0
    %173 = vmatprep.subr.bf16.mxu0 0
    %174 = vmatpush1.bf16.msra.mxu0 0
    %175 = vmatprep.subr.bf16.mxu0 0
    %176 = vmatpush1.bf16.msra.mxu0 0
    %177 = vmatprep.mubr.bf16.mxu0 0
    %178 = vmatmul.mubr.bf16.gmra.mrb[0].mxu0 %v143
    %v179 = vpop.f32.mrb[0].mxu0
    %v180 = vadd.f32 %v66, %v179
    %v181 = vpop.f32.mrb[0].mxu0
    %v182 = vpop.f32.mrb[0].mxu0
    %v183 = vpop.f32.mrb[0].mxu0
    %184 = vdwg.mxu0
    %s185 = scalar_lea.vmem [#allocation3], 2
    %186 = vst [vmem:[%s185] sm:$0x3] %v180
    %v187 = vld [vmem:[%s0] sm:$0x2]
    %v188 = vld [vmem:[%s0 + $0x4] sm:$0x2]
    %v191 = vunpack.c.l.b16 %v187
    %v192 = vunpack.c.l.b16 %v188
    %v193 = vpack.c.b16 %v191, %v191
    %v194 = vpack.c.b16 %v192, %v192
    %v195 = vunpack.c.l.b16 %v193
    %v196 = vunpack.c.l.b16 %v194
    %v197 = vrot.slane %v195, 2
    %v198 = vrot.slane %v196, 1
    %v199 = vsel %vm77, %v198, %v197
    %v200 = vpack.c.b16 %v199, %v199
    %v202 = vsel %vm80, %v200, 0
    %204 = vmatprep.subr.bf16.mxu0 0
    %205 = vmatpush1.bf16.msra.mxu0 %v86
    %206 = vmatprep.subr.bf16.mxu0 0
    %207 = vmatpush1.bf16.msra.mxu0 0
    %208 = vmatprep.subr.bf16.mxu0 0
    %209 = vmatpush1.bf16.msra.mxu0 0
    %210 = vmatprep.subr.bf16.mxu0 0
    %211 = vmatpush1.bf16.msra.mxu0 0
    %212 = vmatprep.subr.bf16.mxu0 0
    %213 = vmatpush1.bf16.msra.mxu0 0
    %214 = vmatprep.subr.bf16.mxu0 0
    %215 = vmatpush1.bf16.msra.mxu0 0
    %216 = vmatprep.subr.bf16.mxu0 0
    %217 = vmatpush1.bf16.msra.mxu0 0
    %218 = vmatprep.subr.bf16.mxu0 0
    %219 = vmatpush1.bf16.msra.mxu0 0
    %220 = vmatprep.subr.bf16.mxu0 0
    %221 = vmatpush1.bf16.msra.mxu0 0
    %222 = vmatprep.subr.bf16.mxu0 0
    %223 = vmatpush1.bf16.msra.mxu0 0
    %224 = vmatprep.subr.bf16.mxu0 0
    %225 = vmatpush1.bf16.msra.mxu0 0
    %226 = vmatprep.subr.bf16.mxu0 0
    %227 = vmatpush1.bf16.msra.mxu0 0
    %228 = vmatprep.subr.bf16.mxu0 0
    %229 = vmatpush1.bf16.msra.mxu0 0
    %230 = vmatprep.subr.bf16.mxu0 0
    %231 = vmatpush1.bf16.msra.mxu0 0
    %232 = vmatprep.subr.bf16.mxu0 0
    %233 = vmatpush1.bf16.msra.mxu0 0
    %234 = vmatprep.subr.bf16.mxu0 0
    %235 = vmatpush1.bf16.msra.mxu0 0
    %236 = vmatprep.mubr.bf16.mxu0 0
    %237 = vmatmul.mubr.bf16.gmra.mrb[0].mxu0 %v202
    %v238 = vpop.f32.mrb[0].mxu0
    %v239 = vadd.f32 %v66, %v238
    %v240 = vpop.f32.mrb[0].mxu0
    %v241 = vpop.f32.mrb[0].mxu0
    %v242 = vpop.f32.mrb[0].mxu0
    %243 = vdwg.mxu0
    %s244 = scalar_lea.vmem [#allocation3], 4
    %245 = vst [vmem:[%s244] sm:$0x3] %v239
    %v246 = vld [vmem:[%s0] sm:$0x2]
    %v247 = vld [vmem:[%s0 + $0x4] sm:$0x2]
    %v250 = vunpack.c.l.b16 %v246
    %v251 = vunpack.c.l.b16 %v247
    %v252 = vpack.c.b16 %v250, %v250
    %v253 = vpack.c.b16 %v251, %v251
    %v254 = vunpack.c.l.b16 %v252
    %v255 = vunpack.c.l.b16 %v253
    %v256 = vrot.slane %v254, 3
    %v257 = vrot.slane %v255, 2
    %v258 = vsel %vm77, %v257, %v256
    %v259 = vpack.c.b16 %v258, %v258
    %v261 = vsel %vm80, %v259, 0
    %263 = vmatprep.subr.bf16.mxu0 0
    %264 = vmatpush1.bf16.msra.mxu0 %v86
    %265 = vmatprep.subr.bf16.mxu0 0
    %266 = vmatpush1.bf16.msra.mxu0 0
    %267 = vmatprep.subr.bf16.mxu0 0
    %268 = vmatpush1.bf16.msra.mxu0 0
    %269 = vmatprep.subr.bf16.mxu0 0
    %270 = vmatpush1.bf16.msra.mxu0 0
    %271 = vmatprep.subr.bf16.mxu0 0
    %272 = vmatpush1.bf16.msra.mxu0 0
    %273 = vmatprep.subr.bf16.mxu0 0
    %274 = vmatpush1.bf16.msra.mxu0 0
    %275 = vmatprep.subr.bf16.mxu0 0
    %276 = vmatpush1.bf16.msra.mxu0 0
    %277 = vmatprep.subr.bf16.mxu0 0
    %278 = vmatpush1.bf16.msra.mxu0 0
    %279 = vmatprep.subr.bf16.mxu0 0
    %280 = vmatpush1.bf16.msra.mxu0 0
    %281 = vmatprep.subr.bf16.mxu0 0
    %282 = vmatpush1.bf16.msra.mxu0 0
    %283 = vmatprep.subr.bf16.mxu0 0
    %284 = vmatpush1.bf16.msra.mxu0 0
    %285 = vmatprep.subr.bf16.mxu0 0
    %286 = vmatpush1.bf16.msra.mxu0 0
    %287 = vmatprep.subr.bf16.mxu0 0
    %288 = vmatpush1.bf16.msra.mxu0 0
    %289 = vmatprep.subr.bf16.mxu0 0
    %290 = vmatpush1.bf16.msra.mxu0 0
    %291 = vmatprep.subr.bf16.mxu0 0
    %292 = vmatpush1.bf16.msra.mxu0 0
    %293 = vmatprep.subr.bf16.mxu0 0
    %294 = vmatpush1.bf16.msra.mxu0 0
    %295 = vmatprep.mubr.bf16.mxu0 0
    %296 = vmatmul.mubr.bf16.gmra.mrb[0].mxu0 %v261
    %v297 = vpop.f32.mrb[0].mxu0
    %v298 = vadd.f32 %v66, %v297
    %v299 = vpop.f32.mrb[0].mxu0
    %v300 = vpop.f32.mrb[0].mxu0
    %v301 = vpop.f32.mrb[0].mxu0
    %302 = vdwg.mxu0
    %s303 = scalar_lea.vmem [#allocation3], 6
    %304 = vst [vmem:[%s303] sm:$0x3] %v298
    %v305 = vld [vmem:[%s0] sm:$0x4]
    %v306 = vld [vmem:[%s0 + $0x4] sm:$0x4]
    %v309 = vunpack.c.l.b16 %v305
    %v310 = vunpack.c.l.b16 %v306
    %v311 = vpack.c.b16 %v309, %v309
    %v312 = vpack.c.b16 %v310, %v310
    %v313 = vunpack.c.l.b16 %v311
    %v314 = vunpack.c.l.b16 %v312
    %v315 = vrot.slane %v313, 4
    %v316 = vrot.slane %v314, 3
    %v317 = vsel %vm77, %v316, %v315
    %v318 = vpack.c.b16 %v317, %v317
    %v320 = vsel %vm80, %v318, 0
    %322 = vmatprep.subr.bf16.mxu0 0
    %323 = vmatpush1.bf16.msra.mxu0 %v86
    %324 = vmatprep.subr.bf16.mxu0 0
    %325 = vmatpush1.bf16.msra.mxu0 0
    %326 = vmatprep.subr.bf16.mxu0 0
    %327 = vmatpush1.bf16.msra.mxu0 0
    %328 = vmatprep.subr.bf16.mxu0 0
    %329 = vmatpush1.bf16.msra.mxu0 0
    %330 = vmatprep.subr.bf16.mxu0 0
    %331 = vmatpush1.bf16.msra.mxu0 0
    %332 = vmatprep.subr.bf16.mxu0 0
    %333 = vmatpush1.bf16.msra.mxu0 0
    %334 = vmatprep.subr.bf16.mxu0 0
    %335 = vmatpush1.bf16.msra.mxu0 0
    %336 = vmatprep.subr.bf16.mxu0 0
    %337 = vmatpush1.bf16.msra.mxu0 0
    %338 = vmatprep.subr.bf16.mxu0 0
    %339 = vmatpush1.bf16.msra.mxu0 0
    %340 = vmatprep.subr.bf16.mxu0 0
    %341 = vmatpush1.bf16.msra.mxu0 0
    %342 = vmatprep.subr.bf16.mxu0 0
    %343 = vmatpush1.bf16.msra.mxu0 0
    %344 = vmatprep.subr.bf16.mxu0 0
    %345 = vmatpush1.bf16.msra.mxu0 0
    %346 = vmatprep.subr.bf16.mxu0 0
    %347 = vmatpush1.bf16.msra.mxu0 0
    %348 = vmatprep.subr.bf16.mxu0 0
    %349 = vmatpush1.bf16.msra.mxu0 0
    %350 = vmatprep.subr.bf16.mxu0 0
    %351 = vmatpush1.bf16.msra.mxu0 0
    %352 = vmatprep.subr.bf16.mxu0 0
    %353 = vmatpush1.bf16.msra.mxu0 0
    %354 = vmatprep.mubr.bf16.mxu0 0
    %355 = vmatmul.mubr.bf16.gmra.mrb[0].mxu0 %v320
    %v356 = vpop.f32.mrb[0].mxu0
    %v357 = vadd.f32 %v66, %v356
    %v358 = vpop.f32.mrb[0].mxu0
    %v359 = vpop.f32.mrb[0].mxu0
    %v360 = vpop.f32.mrb[0].mxu0
    %361 = vdwg.mxu0
    %s362 = scalar_lea.vmem [#allocation3], 8
    %363 = vst [vmem:[%s362] sm:$0x3] %v357
    %v364 = vld [vmem:[%s0] sm:$0x4]
    %v365 = vld [vmem:[%s0 + $0x4] sm:$0x4]
    %v368 = vunpack.c.l.b16 %v364
    %v369 = vunpack.c.l.b16 %v365
    %v370 = vpack.c.b16 %v368, %v368
    %v371 = vpack.c.b16 %v369, %v369
    %v372 = vunpack.c.l.b16 %v370
    %v373 = vunpack.c.l.b16 %v371
    %v374 = vrot.slane %v372, 5
    %v375 = vrot.slane %v373, 4
    %v376 = vsel %vm77, %v375, %v374
    %v377 = vpack.c.b16 %v376, %v376
    %v379 = vsel %vm80, %v377, 0
    %381 = vmatprep.subr.bf16.mxu0 0
    %382 = vmatpush1.bf16.msra.mxu0 %v86
    %383 = vmatprep.subr.bf16.mxu0 0
    %384 = vmatpush1.bf16.msra.mxu0 0
    %385 = vmatprep.subr.bf16.mxu0 0
    %386 = vmatpush1.bf16.msra.mxu0 0
    %387 = vmatprep.subr.bf16.mxu0 0
    %388 = vmatpush1.bf16.msra.mxu0 0
    %389 = vmatprep.subr.bf16.mxu0 0
    %390 = vmatpush1.bf16.msra.mxu0 0
    %391 = vmatprep.subr.bf16.mxu0 0
    %392 = vmatpush1.bf16.msra.mxu0 0
    %393 = vmatprep.subr.bf16.mxu0 0
    %394 = vmatpush1.bf16.msra.mxu0 0
    %395 = vmatprep.subr.bf16.mxu0 0
    %396 = vmatpush1.bf16.msra.mxu0 0
    %397 = vmatprep.subr.bf16.mxu0 0
    %398 = vmatpush1.bf16.msra.mxu0 0
    %399 = vmatprep.subr.bf16.mxu0 0
    %400 = vmatpush1.bf16.msra.mxu0 0
    %401 = vmatprep.subr.bf16.mxu0 0
    %402 = vmatpush1.bf16.msra.mxu0 0
    %403 = vmatprep.subr.bf16.mxu0 0
    %404 = vmatpush1.bf16.msra.mxu0 0
    %405 = vmatprep.subr.bf16.mxu0 0
    %406 = vmatpush1.bf16.msra.mxu0 0
    %407 = vmatprep.subr.bf16.mxu0 0
    %408 = vmatpush1.bf16.msra.mxu0 0
    %409 = vmatprep.subr.bf16.mxu0 0
    %410 = vmatpush1.bf16.msra.mxu0 0
    %411 = vmatprep.subr.bf16.mxu0 0
    %412 = vmatpush1.bf16.msra.mxu0 0
    %413 = vmatprep.mubr.bf16.mxu0 0
    %414 = vmatmul.mubr.bf16.gmra.mrb[0].mxu0 %v379
    %v415 = vpop.f32.mrb[0].mxu0
    %v416 = vadd.f32 %v66, %v415
    %v417 = vpop.f32.mrb[0].mxu0
    %v418 = vpop.f32.mrb[0].mxu0
    %v419 = vpop.f32.mrb[0].mxu0
    %420 = vdwg.mxu0
    %s421 = scalar_lea.vmem [#allocation3], 10
    %422 = vst [vmem:[%s421] sm:$0x3] %v416
    %v423 = vld [vmem:[%s0] sm:$0x8]
    %v424 = vld [vmem:[%s0 + $0x4] sm:$0x8]
    %v427 = vunpack.c.l.b16 %v423
    %v428 = vunpack.c.l.b16 %v424
    %v429 = vpack.c.b16 %v427, %v427
    %v430 = vpack.c.b16 %v428, %v428
    %v431 = vunpack.c.l.b16 %v429
    %v432 = vunpack.c.l.b16 %v430
    %v433 = vrot.slane %v431, 6
    %v434 = vrot.slane %v432, 5
    %v435 = vsel %vm77, %v434, %v433
    %v436 = vpack.c.b16 %v435, %v435
    %v438 = vsel %vm80, %v436, 0
    %440 = vmatprep.subr.bf16.mxu0 0
    %441 = vmatpush1.bf16.msra.mxu0 %v86
    %442 = vmatprep.subr.bf16.mxu0 0
    %443 = vmatpush1.bf16.msra.mxu0 0
    %444 = vmatprep.subr.bf16.mxu0 0
    %445 = vmatpush1.bf16.msra.mxu0 0
    %446 = vmatprep.subr.bf16.mxu0 0
    %447 = vmatpush1.bf16.msra.mxu0 0
    %448 = vmatprep.subr.bf16.mxu0 0
    %449 = vmatpush1.bf16.msra.mxu0 0
    %450 = vmatprep.subr.bf16.mxu0 0
    %451 = vmatpush1.bf16.msra.mxu0 0
    %452 = vmatprep.subr.bf16.mxu0 0
    %453 = vmatpush1.bf16.msra.mxu0 0
    %454 = vmatprep.subr.bf16.mxu0 0
    %455 = vmatpush1.bf16.msra.mxu0 0
    %456 = vmatprep.subr.bf16.mxu0 0
    %457 = vmatpush1.bf16.msra.mxu0 0
    %458 = vmatprep.subr.bf16.mxu0 0
    %459 = vmatpush1.bf16.msra.mxu0 0
    %460 = vmatprep.subr.bf16.mxu0 0
    %461 = vmatpush1.bf16.msra.mxu0 0
    %462 = vmatprep.subr.bf16.mxu0 0
    %463 = vmatpush1.bf16.msra.mxu0 0
    %464 = vmatprep.subr.bf16.mxu0 0
    %465 = vmatpush1.bf16.msra.mxu0 0
    %466 = vmatprep.subr.bf16.mxu0 0
    %467 = vmatpush1.bf16.msra.mxu0 0
    %468 = vmatprep.subr.bf16.mxu0 0
    %469 = vmatpush1.bf16.msra.mxu0 0
    %470 = vmatprep.subr.bf16.mxu0 0
    %471 = vmatpush1.bf16.msra.mxu0 0
    %472 = vmatprep.mubr.bf16.mxu0 0
    %473 = vmatmul.mubr.bf16.gmra.mrb[0].mxu0 %v438
    %v474 = vpop.f32.mrb[0].mxu0
    %v475 = vadd.f32 %v66, %v474
    %v476 = vpop.f32.mrb[0].mxu0
    %v477 = vpop.f32.mrb[0].mxu0
    %v478 = vpop.f32.mrb[0].mxu0
    %479 = vdwg.mxu0
    %s480 = scalar_lea.vmem [#allocation3], 12
    %481 = vst [vmem:[%s480] sm:$0x3] %v475
    %v482 = vld [vmem:[%s0] sm:$0x8]
    %v483 = vld [vmem:[%s0 + $0x4] sm:$0x8]
    %v486 = vunpack.c.l.b16 %v482
    %v487 = vunpack.c.l.b16 %v483
    %v488 = vpack.c.b16 %v486, %v486
    %v489 = vpack.c.b16 %v487, %v487
    %v490 = vunpack.c.l.b16 %v488
    %v491 = vunpack.c.l.b16 %v489
    %v492 = vrot.slane %v490, 7
    %v493 = vrot.slane %v491, 6
    %v494 = vsel %vm77, %v493, %v492
    %v495 = vpack.c.b16 %v494, %v494
    %v497 = vsel %vm80, %v495, 0
    %499 = vmatprep.subr.bf16.mxu0 0
    %500 = vmatpush1.bf16.msra.mxu0 %v86
    %501 = vmatprep.subr.bf16.mxu0 0
    %502 = vmatpush1.bf16.msra.mxu0 0
    %503 = vmatprep.subr.bf16.mxu0 0
    %504 = vmatpush1.bf16.msra.mxu0 0
    %505 = vmatprep.subr.bf16.mxu0 0
    %506 = vmatpush1.bf16.msra.mxu0 0
    %507 = vmatprep.subr.bf16.mxu0 0
    %508 = vmatpush1.bf16.msra.mxu0 0
    %509 = vmatprep.subr.bf16.mxu0 0
    %510 = vmatpush1.bf16.msra.mxu0 0
    %511 = vmatprep.subr.bf16.mxu0 0
    %512 = vmatpush1.bf16.msra.mxu0 0
    %513 = vmatprep.subr.bf16.mxu0 0
    %514 = vmatpush1.bf16.msra.mxu0 0
    %515 = vmatprep.subr.bf16.mxu0 0
    %516 = vmatpush1.bf16.msra.mxu0 0
    %517 = vmatprep.subr.bf16.mxu0 0
    %518 = vmatpush1.bf16.msra.mxu0 0
    %519 = vmatprep.subr.bf16.mxu0 0
    %520 = vmatpush1.bf16.msra.mxu0 0
    %521 = vmatprep.subr.bf16.mxu0 0
    %522 = vmatpush1.bf16.msra.mxu0 0
    %523 = vmatprep.subr.bf16.mxu0 0
    %524 = vmatpush1.bf16.msra.mxu0 0
    %525 = vmatprep.subr.bf16.mxu0 0
    %526 = vmatpush1.bf16.msra.mxu0 0
    %527 = vmatprep.subr.bf16.mxu0 0
    %528 = vmatpush1.bf16.msra.mxu0 0
    %529 = vmatprep.subr.bf16.mxu0 0
    %530 = vmatpush1.bf16.msra.mxu0 0
    %531 = vmatprep.mubr.bf16.mxu0 0
    %532 = vmatmul.mubr.bf16.gmra.mrb[0].mxu0 %v497
    %v533 = vpop.f32.mrb[0].mxu0
    %v534 = vadd.f32 %v66, %v533
    %v535 = vpop.f32.mrb[0].mxu0
    %v536 = vpop.f32.mrb[0].mxu0
    %v537 = vpop.f32.mrb[0].mxu0
    %538 = vdwg.mxu0
    %s539 = scalar_lea.vmem [#allocation3], 14
    %540 = vst [vmem:[%s539] sm:$0x3] %v534
    %v541 = vld [vmem:[#allocation4] sm:$0xf]
    %v542 = vld [vmem:[#allocation4 + $0x4] sm:$0xf]
    %v543 = vld [vmem:[#allocation4 + $0x8] sm:$0xf]
    %v544 = vld [vmem:[#allocation4 + $0xc] sm:$0xf]
    %v545 = vld [vmem:[#allocation4 + $0x10] sm:$0xf]
    %v546 = vld [vmem:[#allocation4 + $0x14] sm:$0xf]
    %v547 = vld [vmem:[#allocation4 + $0x18] sm:$0xf]
    %v548 = vld [vmem:[#allocation4 + $0x1c] sm:$0xf]
    %v549 = vld [vmem:[#allocation4 + $0x20] sm:$0xf]
    %v550 = vld [vmem:[#allocation4 + $0x24] sm:$0xf]
    %v551 = vld [vmem:[#allocation4 + $0x28] sm:$0xf]
    %v552 = vld [vmem:[#allocation4 + $0x2c] sm:$0xf]
    %v553 = vld [vmem:[#allocation4 + $0x30] sm:$0xf]
    %v554 = vld [vmem:[#allocation4 + $0x34] sm:$0xf]
    %v555 = vld [vmem:[#allocation4 + $0x38] sm:$0xf]
    %v556 = vld [vmem:[#allocation4 + $0x3c] sm:$0xf]
    %v557 = vld [vmem:[#allocation2] sm:$0x3]
    %v558 = vld [vmem:[#allocation3] sm:$0x3]
    %v559 = vpack.c.bf16 %v557, %v557
    %v576 = vunpack.c.l.b16 %v541
    %v577 = vunpack.c.l.b16 %v542
    %v578 = vunpack.c.l.b16 %v543
    %v579 = vunpack.c.l.b16 %v544
    %v580 = vunpack.c.l.b16 %v545
    %v581 = vunpack.c.l.b16 %v546
    %v582 = vunpack.c.l.b16 %v547
    %v583 = vunpack.c.l.b16 %v548
    %v584 = vunpack.c.l.b16 %v549
    %v585 = vunpack.c.l.b16 %v550
    %v586 = vunpack.c.l.b16 %v551
    %v587 = vunpack.c.l.b16 %v552
    %v588 = vunpack.c.l.b16 %v553
    %v589 = vunpack.c.l.b16 %v554
    %v590 = vunpack.c.l.b16 %v555
    %v591 = vunpack.c.l.b16 %v556
    %v592 = vpack.c.b16 %v577, %v576
    %v593 = vpack.c.b16 %v579, %v578
    %v594 = vpack.c.b16 %v581, %v580
    %v595 = vpack.c.b16 %v583, %v582
    %v596 = vpack.c.b16 %v585, %v584
    %v597 = vpack.c.b16 %v587, %v586
    %v598 = vpack.c.b16 %v589, %v588
    %v599 = vpack.c.b16 %v591, %v590
    %608 = vmatprep.subr.bf16.mxu0 0
    %609 = vmatpush1.bf16.msra.mxu0 %v592
    %610 = vmatprep.subr.bf16.mxu0 0
    %611 = vmatpush1.bf16.msra.mxu0 %v593
    %612 = vmatprep.subr.bf16.mxu0 0
    %613 = vmatpush1.bf16.msra.mxu0 %v594
    %614 = vmatprep.subr.bf16.mxu0 0
    %615 = vmatpush1.bf16.msra.mxu0 %v595
    %616 = vmatprep.subr.bf16.mxu0 0
    %617 = vmatpush1.bf16.msra.mxu0 %v596
    %618 = vmatprep.subr.bf16.mxu0 0
    %619 = vmatpush1.bf16.msra.mxu0 %v597
    %620 = vmatprep.subr.bf16.mxu0 0
    %621 = vmatpush1.bf16.msra.mxu0 %v598
    %622 = vmatprep.subr.bf16.mxu0 0
    %623 = vmatpush1.bf16.msra.mxu0 %v599
    %624 = vmatprep.subr.bf16.mxu0 0
    %625 = vmatpush1.bf16.msra.mxu0 0
    %626 = vmatprep.subr.bf16.mxu0 0
    %627 = vmatpush1.bf16.msra.mxu0 0
    %628 = vmatprep.subr.bf16.mxu0 0
    %629 = vmatpush1.bf16.msra.mxu0 0
    %630 = vmatprep.subr.bf16.mxu0 0
    %631 = vmatpush1.bf16.msra.mxu0 0
    %632 = vmatprep.subr.bf16.mxu0 0
    %633 = vmatpush1.bf16.msra.mxu0 0
    %634 = vmatprep.subr.bf16.mxu0 0
    %635 = vmatpush1.bf16.msra.mxu0 0
    %636 = vmatprep.subr.bf16.mxu0 0
    %637 = vmatpush1.bf16.msra.mxu0 0
    %638 = vmatprep.subr.bf16.mxu0 0
    %639 = vmatpush1.bf16.msra.mxu0 0
    %640 = vmatprep.mubr.bf16.mxu0 0
    %641 = vmatmul.mubr.bf16.gmra.mrb[0].mxu0 %v559
    %v642 = vpop.f32.mrb[0].mxu0
    %v643 = vadd.f32 0.0, %v642
    %v644 = vpop.f32.mrb[0].mxu0
    %v645 = vpop.f32.mrb[0].mxu0
    %v646 = vpop.f32.mrb[0].mxu0
    %647 = vdwg.mxu0
    %v648 = vadd.f32 %v558, %v643
    %v649 = vtanh.pop %v648
    %v650 = vld [vmem:[%s185] sm:$0x3]
    %v651 = vpack.c.bf16 %v649, %v649
    %652 = vmatprep.subr.bf16.mxu0 0
    %653 = vmatpush1.bf16.msra.mxu0 %v592
    %654 = vmatprep.subr.bf16.mxu0 0
    %655 = vmatpush1.bf16.msra.mxu0 %v593
    %656 = vmatprep.subr.bf16.mxu0 0
    %657 = vmatpush1.bf16.msra.mxu0 %v594
    %658 = vmatprep.subr.bf16.mxu0 0
    %659 = vmatpush1.bf16.msra.mxu0 %v595
    %660 = vmatprep.subr.bf16.mxu0 0
    %661 = vmatpush1.bf16.msra.mxu0 %v596
    %662 = vmatprep.subr.bf16.mxu0 0
    %663 = vmatpush1.bf16.msra.mxu0 %v597
    %664 = vmatprep.subr.bf16.mxu0 0
    %665 = vmatpush1.bf16.msra.mxu0 %v598
    %666 = vmatprep.subr.bf16.mxu0 0
    %667 = vmatpush1.bf16.msra.mxu0 %v599
    %668 = vmatprep.subr.bf16.mxu0 0
    %669 = vmatpush1.bf16.msra.mxu0 0
    %670 = vmatprep.subr.bf16.mxu0 0
    %671 = vmatpush1.bf16.msra.mxu0 0
    %672 = vmatprep.subr.bf16.mxu0 0
    %673 = vmatpush1.bf16.msra.mxu0 0
    %674 = vmatprep.subr.bf16.mxu0 0
    %675 = vmatpush1.bf16.msra.mxu0 0
    %676 = vmatprep.subr.bf16.mxu0 0
    %677 = vmatpush1.bf16.msra.mxu0 0
    %678 = vmatprep.subr.bf16.mxu0 0
    %679 = vmatpush1.bf16.msra.mxu0 0
    %680 = vmatprep.subr.bf16.mxu0 0
    %681 = vmatpush1.bf16.msra.mxu0 0
    %682 = vmatprep.subr.bf16.mxu0 0
    %683 = vmatpush1.bf16.msra.mxu0 0
    %684 = vmatprep.mubr.bf16.mxu0 0
    %685 = vmatmul.mubr.bf16.gmra.mrb[0].mxu0 %v651
    %v686 = vpop.f32.mrb[0].mxu0
    %v687 = vadd.f32 0.0, %v686
    %v688 = vpop.f32.mrb[0].mxu0
    %v689 = vpop.f32.mrb[0].mxu0
    %v690 = vpop.f32.mrb[0].mxu0
    %691 = vdwg.mxu0
    %v692 = vadd.f32 %v650, %v687
    %v693 = vtanh.pop %v692
    %v694 = vld [vmem:[%s244] sm:$0x3]
    %v695 = vpack.c.bf16 %v693, %v693
    %696 = vmatprep.subr.bf16.mxu0 0
    %697 = vmatpush1.bf16.msra.mxu0 %v592
    %698 = vmatprep.subr.bf16.mxu0 0
    %699 = vmatpush1.bf16.msra.mxu0 %v593
    %700 = vmatprep.subr.bf16.mxu0 0
    %701 = vmatpush1.bf16.msra.mxu0 %v594
    %702 = vmatprep.subr.bf16.mxu0 0
    %703 = vmatpush1.bf16.msra.mxu0 %v595
    %704 = vmatprep.subr.bf16.mxu0 0
    %705 = vmatpush1.bf16.msra.mxu0 %v596
    %706 = vmatprep.subr.bf16.mxu0 0
    %707 = vmatpush1.bf16.msra.mxu0 %v597
    %708 = vmatprep.subr.bf16.mxu0 0
    %709 = vmatpush1.bf16.msra.mxu0 %v598
    %710 = vmatprep.subr.bf16.mxu0 0
    %711 = vmatpush1.bf16.msra.mxu0 %v599
    %712 = vmatprep.subr.bf16.mxu0 0
    %713 = vmatpush1.bf16.msra.mxu0 0
    %714 = vmatprep.subr.bf16.mxu0 0
    %715 = vmatpush1.bf16.msra.mxu0 0
    %716 = vmatprep.subr.bf16.mxu0 0
    %717 = vmatpush1.bf16.msra.mxu0 0
    %718 = vmatprep.subr.bf16.mxu0 0
    %719 = vmatpush1.bf16.msra.mxu0 0
    %720 = vmatprep.subr.bf16.mxu0 0
    %721 = vmatpush1.bf16.msra.mxu0 0
    %722 = vmatprep.subr.bf16.mxu0 0
    %723 = vmatpush1.bf16.msra.mxu0 0
    %724 = vmatprep.subr.bf16.mxu0 0
    %725 = vmatpush1.bf16.msra.mxu0 0
    %726 = vmatprep.subr.bf16.mxu0 0
    %727 = vmatpush1.bf16.msra.mxu0 0
    %728 = vmatprep.mubr.bf16.mxu0 0
    %729 = vmatmul.mubr.bf16.gmra.mrb[0].mxu0 %v695
    %v730 = vpop.f32.mrb[0].mxu0
    %v731 = vadd.f32 0.0, %v730
    %v732 = vpop.f32.mrb[0].mxu0
    %v733 = vpop.f32.mrb[0].mxu0
    %v734 = vpop.f32.mrb[0].mxu0
    %735 = vdwg.mxu0
    %v736 = vadd.f32 %v694, %v731
    %v737 = vtanh.pop %v736
    %v738 = vld [vmem:[%s303] sm:$0x3]
    %v739 = vpack.c.bf16 %v737, %v737
    %740 = vmatprep.subr.bf16.mxu0 0
    %741 = vmatpush1.bf16.msra.mxu0 %v592
    %742 = vmatprep.subr.bf16.mxu0 0
    %743 = vmatpush1.bf16.msra.mxu0 %v593
    %744 = vmatprep.subr.bf16.mxu0 0
    %745 = vmatpush1.bf16.msra.mxu0 %v594
    %746 = vmatprep.subr.bf16.mxu0 0
    %747 = vmatpush1.bf16.msra.mxu0 %v595
    %748 = vmatprep.subr.bf16.mxu0 0
    %749 = vmatpush1.bf16.msra.mxu0 %v596
    %750 = vmatprep.subr.bf16.mxu0 0
    %751 = vmatpush1.bf16.msra.mxu0 %v597
    %752 = vmatprep.subr.bf16.mxu0 0
    %753 = vmatpush1.bf16.msra.mxu0 %v598
    %754 = vmatprep.subr.bf16.mxu0 0
    %755 = vmatpush1.bf16.msra.mxu0 %v599
    %756 = vmatprep.subr.bf16.mxu0 0
    %757 = vmatpush1.bf16.msra.mxu0 0
    %758 = vmatprep.subr.bf16.mxu0 0
    %759 = vmatpush1.bf16.msra.mxu0 0
    %760 = vmatprep.subr.bf16.mxu0 0
    %761 = vmatpush1.bf16.msra.mxu0 0
    %762 = vmatprep.subr.bf16.mxu0 0
    %763 = vmatpush1.bf16.msra.mxu0 0
    %764 = vmatprep.subr.bf16.mxu0 0
    %765 = vmatpush1.bf16.msra.mxu0 0
    %766 = vmatprep.subr.bf16.mxu0 0
    %767 = vmatpush1.bf16.msra.mxu0 0
    %768 = vmatprep.subr.bf16.mxu0 0
    %769 = vmatpush1.bf16.msra.mxu0 0
    %770 = vmatprep.subr.bf16.mxu0 0
    %771 = vmatpush1.bf16.msra.mxu0 0
    %772 = vmatprep.mubr.bf16.mxu0 0
    %773 = vmatmul.mubr.bf16.gmra.mrb[0].mxu0 %v739
    %v774 = vpop.f32.mrb[0].mxu0
    %v775 = vadd.f32 0.0, %v774
    %v776 = vpop.f32.mrb[0].mxu0
    %v777 = vpop.f32.mrb[0].mxu0
    %v778 = vpop.f32.mrb[0].mxu0
    %779 = vdwg.mxu0
    %v780 = vadd.f32 %v738, %v775
    %v781 = vtanh.pop %v780
    %v782 = vld [vmem:[%s362] sm:$0x3]
    %v783 = vpack.c.bf16 %v781, %v781
    %784 = vmatprep.subr.bf16.mxu0 0
    %785 = vmatpush1.bf16.msra.mxu0 %v592
    %786 = vmatprep.subr.bf16.mxu0 0
    %787 = vmatpush1.bf16.msra.mxu0 %v593
    %788 = vmatprep.subr.bf16.mxu0 0
    %789 = vmatpush1.bf16.msra.mxu0 %v594
    %790 = vmatprep.subr.bf16.mxu0 0
    %791 = vmatpush1.bf16.msra.mxu0 %v595
    %792 = vmatprep.subr.bf16.mxu0 0
    %793 = vmatpush1.bf16.msra.mxu0 %v596
    %794 = vmatprep.subr.bf16.mxu0 0
    %795 = vmatpush1.bf16.msra.mxu0 %v597
    %796 = vmatprep.subr.bf16.mxu0 0
    %797 = vmatpush1.bf16.msra.mxu0 %v598
    %798 = vmatprep.subr.bf16.mxu0 0
    %799 = vmatpush1.bf16.msra.mxu0 %v599
    %800 = vmatprep.subr.bf16.mxu0 0
    %801 = vmatpush1.bf16.msra.mxu0 0
    %802 = vmatprep.subr.bf16.mxu0 0
    %803 = vmatpush1.bf16.msra.mxu0 0
    %804 = vmatprep.subr.bf16.mxu0 0
    %805 = vmatpush1.bf16.msra.mxu0 0
    %806 = vmatprep.subr.bf16.mxu0 0
    %807 = vmatpush1.bf16.msra.mxu0 0
    %808 = vmatprep.subr.bf16.mxu0 0
    %809 = vmatpush1.bf16.msra.mxu0 0
    %810 = vmatprep.subr.bf16.mxu0 0
    %811 = vmatpush1.bf16.msra.mxu0 0
    %812 = vmatprep.subr.bf16.mxu0 0
    %813 = vmatpush1.bf16.msra.mxu0 0
    %814 = vmatprep.subr.bf16.mxu0 0
    %815 = vmatpush1.bf16.msra.mxu0 0
    %816 = vmatprep.mubr.bf16.mxu0 0
    %817 = vmatmul.mubr.bf16.gmra.mrb[0].mxu0 %v783
    %v818 = vpop.f32.mrb[0].mxu0
    %v819 = vadd.f32 0.0, %v818
    %v820 = vpop.f32.mrb[0].mxu0
    %v821 = vpop.f32.mrb[0].mxu0
    %v822 = vpop.f32.mrb[0].mxu0
    %823 = vdwg.mxu0
    %v824 = vadd.f32 %v782, %v819
    %v825 = vtanh.pop %v824
    %v826 = vld [vmem:[%s421] sm:$0x3]
    %v827 = vpack.c.bf16 %v825, %v825
    %828 = vmatprep.subr.bf16.mxu0 0
    %829 = vmatpush1.bf16.msra.mxu0 %v592
    %830 = vmatprep.subr.bf16.mxu0 0
    %831 = vmatpush1.bf16.msra.mxu0 %v593
    %832 = vmatprep.subr.bf16.mxu0 0
    %833 = vmatpush1.bf16.msra.mxu0 %v594
    %834 = vmatprep.subr.bf16.mxu0 0
    %835 = vmatpush1.bf16.msra.mxu0 %v595
    %836 = vmatprep.subr.bf16.mxu0 0
    %837 = vmatpush1.bf16.msra.mxu0 %v596
    %838 = vmatprep.subr.bf16.mxu0 0
    %839 = vmatpush1.bf16.msra.mxu0 %v597
    %840 = vmatprep.subr.bf16.mxu0 0
    %841 = vmatpush1.bf16.msra.mxu0 %v598
    %842 = vmatprep.subr.bf16.mxu0 0
    %843 = vmatpush1.bf16.msra.mxu0 %v599
    %844 = vmatprep.subr.bf16.mxu0 0
    %845 = vmatpush1.bf16.msra.mxu0 0
    %846 = vmatprep.subr.bf16.mxu0 0
    %847 = vmatpush1.bf16.msra.mxu0 0
    %848 = vmatprep.subr.bf16.mxu0 0
    %849 = vmatpush1.bf16.msra.mxu0 0
    %850 = vmatprep.subr.bf16.mxu0 0
    %851 = vmatpush1.bf16.msra.mxu0 0
    %852 = vmatprep.subr.bf16.mxu0 0
    %853 = vmatpush1.bf16.msra.mxu0 0
    %854 = vmatprep.subr.bf16.mxu0 0
    %855 = vmatpush1.bf16.msra.mxu0 0
    %856 = vmatprep.subr.bf16.mxu0 0
    %857 = vmatpush1.bf16.msra.mxu0 0
    %858 = vmatprep.subr.bf16.mxu0 0
    %859 = vmatpush1.bf16.msra.mxu0 0
    %860 = vmatprep.mubr.bf16.mxu0 0
    %861 = vmatmul.mubr.bf16.gmra.mrb[0].mxu0 %v827
    %v862 = vpop.f32.mrb[0].mxu0
    %v863 = vadd.f32 0.0, %v862
    %v864 = vpop.f32.mrb[0].mxu0
    %v865 = vpop.f32.mrb[0].mxu0
    %v866 = vpop.f32.mrb[0].mxu0
    %867 = vdwg.mxu0
    %v868 = vadd.f32 %v826, %v863
    %v869 = vtanh.pop %v868
    %v870 = vld [vmem:[%s480] sm:$0x3]
    %v871 = vpack.c.bf16 %v869, %v869
    %872 = vmatprep.subr.bf16.mxu0 0
    %873 = vmatpush1.bf16.msra.mxu0 %v592
    %874 = vmatprep.subr.bf16.mxu0 0
    %875 = vmatpush1.bf16.msra.mxu0 %v593
    %876 = vmatprep.subr.bf16.mxu0 0
    %877 = vmatpush1.bf16.msra.mxu0 %v594
    %878 = vmatprep.subr.bf16.mxu0 0
    %879 = vmatpush1.bf16.msra.mxu0 %v595
    %880 = vmatprep.subr.bf16.mxu0 0
    %881 = vmatpush1.bf16.msra.mxu0 %v596
    %882 = vmatprep.subr.bf16.mxu0 0
    %883 = vmatpush1.bf16.msra.mxu0 %v597
    %884 = vmatprep.subr.bf16.mxu0 0
    %885 = vmatpush1.bf16.msra.mxu0 %v598
    %886 = vmatprep.subr.bf16.mxu0 0
    %887 = vmatpush1.bf16.msra.mxu0 %v599
    %888 = vmatprep.subr.bf16.mxu0 0
    %889 = vmatpush1.bf16.msra.mxu0 0
    %890 = vmatprep.subr.bf16.mxu0 0
    %891 = vmatpush1.bf16.msra.mxu0 0
    %892 = vmatprep.subr.bf16.mxu0 0
    %893 = vmatpush1.bf16.msra.mxu0 0
    %894 = vmatprep.subr.bf16.mxu0 0
    %895 = vmatpush1.bf16.msra.mxu0 0
    %896 = vmatprep.subr.bf16.mxu0 0
    %897 = vmatpush1.bf16.msra.mxu0 0
    %898 = vmatprep.subr.bf16.mxu0 0
    %899 = vmatpush1.bf16.msra.mxu0 0
    %900 = vmatprep.subr.bf16.mxu0 0
    %901 = vmatpush1.bf16.msra.mxu0 0
    %902 = vmatprep.subr.bf16.mxu0 0
    %903 = vmatpush1.bf16.msra.mxu0 0
    %904 = vmatprep.mubr.bf16.mxu0 0
    %905 = vmatmul.mubr.bf16.gmra.mrb[0].mxu0 %v871
    %v906 = vpop.f32.mrb[0].mxu0
    %v907 = vadd.f32 0.0, %v906
    %v908 = vpop.f32.mrb[0].mxu0
    %v909 = vpop.f32.mrb[0].mxu0
    %v910 = vpop.f32.mrb[0].mxu0
    %911 = vdwg.mxu0
    %v912 = vadd.f32 %v870, %v907
    %v913 = vtanh.pop %v912
    %v914 = vld [vmem:[%s539] sm:$0x3]
    %v915 = vpack.c.bf16 %v913, %v913
    %916 = vmatprep.subr.bf16.mxu0 0
    %917 = vmatpush1.bf16.msra.mxu0 %v592
    %918 = vmatprep.subr.bf16.mxu0 0
    %919 = vmatpush1.bf16.msra.mxu0 %v593
    %920 = vmatprep.subr.bf16.mxu0 0
    %921 = vmatpush1.bf16.msra.mxu0 %v594
    %922 = vmatprep.subr.bf16.mxu0 0
    %923 = vmatpush1.bf16.msra.mxu0 %v595
    %924 = vmatprep.subr.bf16.mxu0 0
    %925 = vmatpush1.bf16.msra.mxu0 %v596
    %926 = vmatprep.subr.bf16.mxu0 0
    %927 = vmatpush1.bf16.msra.mxu0 %v597
    %928 = vmatprep.subr.bf16.mxu0 0
    %929 = vmatpush1.bf16.msra.mxu0 %v598
    %930 = vmatprep.subr.bf16.mxu0 0
    %931 = vmatpush1.bf16.msra.mxu0 %v599
    %932 = vmatprep.subr.bf16.mxu0 0
    %933 = vmatpush1.bf16.msra.mxu0 0
    %934 = vmatprep.subr.bf16.mxu0 0
    %935 = vmatpush1.bf16.msra.mxu0 0
    %936 = vmatprep.subr.bf16.mxu0 0
    %937 = vmatpush1.bf16.msra.mxu0 0
    %938 = vmatprep.subr.bf16.mxu0 0
    %939 = vmatpush1.bf16.msra.mxu0 0
    %940 = vmatprep.subr.bf16.mxu0 0
    %941 = vmatpush1.bf16.msra.mxu0 0
    %942 = vmatprep.subr.bf16.mxu0 0
    %943 = vmatpush1.bf16.msra.mxu0 0
    %944 = vmatprep.subr.bf16.mxu0 0
    %945 = vmatpush1.bf16.msra.mxu0 0
    %946 = vmatprep.subr.bf16.mxu0 0
    %947 = vmatpush1.bf16.msra.mxu0 0
    %948 = vmatprep.mubr.bf16.mxu0 0
    %949 = vmatmul.mubr.bf16.gmra.mrb[0].mxu0 %v915
    %v950 = vpop.f32.mrb[0].mxu0
    %v951 = vadd.f32 0.0, %v950
    %v952 = vpop.f32.mrb[0].mxu0
    %v953 = vpop.f32.mrb[0].mxu0
    %v954 = vpop.f32.mrb[0].mxu0
    %955 = vdwg.mxu0
    %v956 = vadd.f32 %v914, %v951
    %v957 = vtanh.pop %v956
    %958 = vst [vmem:[#allocation2] sm:$0x3] %v957
    // Predicated region
    $region38: #{tpu_custom_call.1} parent=1 // pred_check
      %p959 = pneg %p53
    $region39: #{tpu_custom_call.1} parent=1 // pred_check_branch
      %961 = sbr.rel (%p959) target = $region41
    $region40: #{tpu_custom_call.1} parent=1 // pred_region
      %v962 = vpack.c.bf16 %v957, %v957
      %v963 = vld [vmem:[#allocation7] sm:$0xf]
      %v964 = vld [vmem:[#allocation7 + $0x4] sm:$0xf]
      %v965 = vld [vmem:[#allocation7 + $0x8] sm:$0xf]
      %v966 = vld [vmem:[#allocation7 + $0xc] sm:$0xf]
      %v967 = vld [vmem:[#allocation7 + $0x10] sm:$0xf]
      %v968 = vld [vmem:[#allocation7 + $0x14] sm:$0xf]
      %v969 = vld [vmem:[#allocation7 + $0x18] sm:$0xf]
      %v970 = vld [vmem:[#allocation7 + $0x1c] sm:$0xf]
      %v971 = vld [vmem:[#allocation7 + $0x20] sm:$0xf]
      %v972 = vld [vmem:[#allocation7 + $0x24] sm:$0xf]
      %v973 = vld [vmem:[#allocation7 + $0x28] sm:$0xf]
      %v974 = vld [vmem:[#allocation7 + $0x2c] sm:$0xf]
      %v975 = vld [vmem:[#allocation7 + $0x30] sm:$0xf]
      %v976 = vld [vmem:[#allocation7 + $0x34] sm:$0xf]
      %v977 = vld [vmem:[#allocation7 + $0x38] sm:$0xf]
      %v978 = vld [vmem:[#allocation7 + $0x3c] sm:$0xf]
      %v979 = vld [vmem:[%s5] sm:$0x1]
      %v981 = vlaneseq
      %v982 = vshrl.u32 %v981, 7
      %v983 = vsub.s32 0, %v982
      %v984 = vrot.slane %v979, %v983
      %v1002 = vunpack.c.l.b16 %v963
      %v1003 = vunpack.c.l.b16 %v964
      %v1004 = vunpack.c.l.b16 %v965
      %v1005 = vunpack.c.l.b16 %v966
      %v1006 = vunpack.c.l.b16 %v967
      %v1007 = vunpack.c.l.b16 %v968
      %v1008 = vunpack.c.l.b16 %v969
      %v1009 = vunpack.c.l.b16 %v970
      %v1010 = vunpack.c.l.b16 %v971
      %v1011 = vunpack.c.l.b16 %v972
      %v1012 = vunpack.c.l.b16 %v973
      %v1013 = vunpack.c.l.b16 %v974
      %v1014 = vunpack.c.l.b16 %v975
      %v1015 = vunpack.c.l.b16 %v976
      %v1016 = vunpack.c.l.b16 %v977
      %v1017 = vunpack.c.l.b16 %v978
      %v1018 = vpack.c.b16 %v1003, %v1002
      %v1019 = vpack.c.b16 %v1005, %v1004
      %v1020 = vpack.c.b16 %v1007, %v1006
      %v1021 = vpack.c.b16 %v1009, %v1008
      %v1022 = vpack.c.b16 %v1011, %v1010
      %v1023 = vpack.c.b16 %v1013, %v1012
      %v1024 = vpack.c.b16 %v1015, %v1014
      %v1025 = vpack.c.b16 %v1017, %v1016
      %1034 = vmatprep.subr.bf16.mxu0 0
      %1035 = vmatpush1.bf16.msra.mxu0 %v1018
      %1036 = vmatprep.subr.bf16.mxu0 0
      %1037 = vmatpush1.bf16.msra.mxu0 %v1019
      %1038 = vmatprep.subr.bf16.mxu0 0
      %1039 = vmatpush1.bf16.msra.mxu0 %v1020
      %1040 = vmatprep.subr.bf16.mxu0 0
      %1041 = vmatpush1.bf16.msra.mxu0 %v1021
      %1042 = vmatprep.subr.bf16.mxu0 0
      %1043 = vmatpush1.bf16.msra.mxu0 %v1022
      %1044 = vmatprep.subr.bf16.mxu0 0
      %1045 = vmatpush1.bf16.msra.mxu0 %v1023
      %1046 = vmatprep.subr.bf16.mxu0 0
      %1047 = vmatpush1.bf16.msra.mxu0 %v1024
      %1048 = vmatprep.subr.bf16.mxu0 0
      %1049 = vmatpush1.bf16.msra.mxu0 %v1025
      %1050 = vmatprep.subr.bf16.mxu0 0
      %1051 = vmatpush1.bf16.msra.mxu0 0
      %1052 = vmatprep.subr.bf16.mxu0 0
      %1053 = vmatpush1.bf16.msra.mxu0 0
      %1054 = vmatprep.subr.bf16.mxu0 0
      %1055 = vmatpush1.bf16.msra.mxu0 0
      %1056 = vmatprep.subr.bf16.mxu0 0
      %1057 = vmatpush1.bf16.msra.mxu0 0
      %1058 = vmatprep.subr.bf16.mxu0 0
      %1059 = vmatpush1.bf16.msra.mxu0 0
      %1060 = vmatprep.subr.bf16.mxu0 0
      %1061 = vmatpush1.bf16.msra.mxu0 0
      %1062 = vmatprep.subr.bf16.mxu0 0
      %1063 = vmatpush1.bf16.msra.mxu0 0
      %1064 = vmatprep.subr.bf16.mxu0 0
      %1065 = vmatpush1.bf16.msra.mxu0 0
      %1066 = vmatprep.mubr.bf16.mxu0 0
      %1067 = vmatmul.mubr.bf16.gmra.mrb[0].mxu0 %v962
      %v1068 = vpop.f32.mrb[0].mxu0
      %v1069 = vadd.f32 %v984, %v1068
      %v1070 = vpop.f32.mrb[0].mxu0
      %v1071 = vpop.f32.mrb[0].mxu0
      %v1072 = vpop.f32.mrb[0].mxu0
      %1073 = vdwg.mxu0
      %1074 = vst [vmem:[#allocation9] sm:$0x3] %v1069
    $region41: #{tpu_custom_call.1} parent=1 // pred_fallthru
      _
    // Predicated region
    $region42: #{tpu_custom_call.1} parent=1 // pred_check
      _
    $region43: #{tpu_custom_call.1} parent=1 // pred_check_branch
      %1076 = sbr.rel (0) target = $region45
    $region44: #{tpu_custom_call.1} parent=1 // pred_region
      %s1078 = ssub.s32 32, 32
      %1079 = vsyncadd [#allocation6], %s1078
      %s1081 = sshll.u32 [#allocation9], 4
      %s1082 = int_to_ptr.vmem [resolvable:$true] %s1081
      %1084 = dma.vmem_to_hbm [thread:$0]  %s1082, 32, %s6, [#allocation6]
    $region45: #{tpu_custom_call.1} parent=1 // pred_fallthru
      _
    // Predicated region
    $region46: #{tpu_custom_call.1} parent=1 // pred_check
      _
    $region47: #{tpu_custom_call.1} parent=1 // pred_check_branch
      %1086 = sbr.rel (0) target = $region49
    $region48: #{tpu_custom_call.1} parent=1 // pred_region
      %1087 = dma.done [#allocation6], 32
    $region49: #{tpu_custom_call.1} parent=1 // pred_fallthru
      _
    %1088 = vsyncpa [#allocation5], 1
    %1089 = vsyncpa [#allocation8], 1
    %1090 = vsyncpa [#allocation6], 1

</llo_original>
